<compile_context>
chip_gen: v6e
topology: v6e:2x2x1
jax: 0.10.0
libtpu: 0.0.40
codegen_flags: <defaults>
</compile_context>

<pallas_src>
import functools

import jax
import jax.numpy as jnp
from jax.experimental import pallas as pl
from jax.experimental.pallas import tpu as pltpu

EPS = 1e-5


def _round_up(x, m):
    return (x + m - 1) // m * m


def _layernorm(x, gamma, beta):
    mu = jnp.mean(x, axis=-1, keepdims=True)
    var = jnp.mean(jnp.square(x - mu), axis=-1, keepdims=True)
    return (x - mu) * jax.lax.rsqrt(var + EPS) * gamma + beta


def sst_kernel(
    x_ref, wqkv_ref, wo_ref, w1_ref, w2_ref, vec_ref, wf_ref, bf_ref,
    out_ref,
    h_ref,                       # VMEM scratch: carried hidden state (Nb, D) f32
    *, seq, heads, layers_per_block, num_layer_blocks,
):
    lb = pl.program_id(1)        # layer-block index (axis 0 is the batch block)

    # Initialize the carried hidden state from the input at the first layer block.
    @pl.when(lb == 0)
    def _():
        h_ref[...] = x_ref[...].astype(jnp.float32)

    nrows, d = h_ref.shape
    bblk = nrows // seq          # batch elements per grid step (1 by default)
    dh = d // heads
    hdim = w1_ref.shape[-1]
    wdt = wqkv_ref.dtype         # bf16 weight path, f32 accumulation

    h = h_ref[...]               # (Nb, D) f32

    for kk in range(layers_per_block):          # static unroll over the layer block
        vecs = vec_ref[kk]                      # (8, C) packed per-layer vectors
        bqkv = vecs[0:1, :3 * d]
        bo   = vecs[1:2, :d]
        g1   = vecs[2:3, :d]
        be1  = vecs[3:4, :d]
        b1   = vecs[4:5, :hdim]
        b2   = vecs[5:6, :d]
        g2   = vecs[6:7, :d]
        be2  = vecs[7:8, :d]

        # ---- multi-head self-attention (fused QKV, head-batched einsums) ----
        qkv = jnp.dot(h.astype(wdt), wqkv_ref[kk],
                      preferred_element_type=jnp.float32) + bqkv    # (Nb, 3D)
        wo3 = wo_ref[kk]                        # (heads, dh, D) bf16

        attn_parts = []
        for bi in range(bblk):                  # bblk == 1 in the default config
            qkv_b = qkv if bblk == 1 else qkv[bi * seq:(bi + 1) * seq, :]
            # per-head groups of 3*dh lanes: [q_h | k_h | v_h]
            qkvh = jnp.stack(
                [qkv_b[:, hh * 3 * dh:(hh + 1) * 3 * dh] for hh in range(heads)],
                axis=0)                         # (heads, S, 3*dh)
            qh = qkvh[:, :, :dh]                # 1/sqrt(dh) folded into Wq already
            kh = qkvh[:, :, dh:2 * dh]
            vh = qkvh[:, :, 2 * dh:]

            s = jnp.einsum('hqd,hkd->hqk', qh, kh,
                           preferred_element_type=jnp.float32)      # (heads, S, S)
            s = s - jnp.max(s, axis=-1, keepdims=True)
            p = jnp.exp(s)
            p = p * pl.reciprocal(jnp.sum(p, axis=-1, keepdims=True), approx=True)
            c = jnp.einsum('hqk,hkd->hqd', p, vh,
                           preferred_element_type=jnp.float32)      # (heads, S, dh)
            # Fold heads back through the per-head rows of W_o (no lane concat):
            proj = jnp.einsum('hqd,hdo->hqo', c.astype(wdt), wo3,
                              preferred_element_type=jnp.float32)   # (heads, S, D)
            attn_parts.append(jnp.sum(proj, axis=0))                # (S, D)
        attn = attn_parts[0] if bblk == 1 else jnp.concatenate(attn_parts, axis=0)

        h = _layernorm(h + attn + bo, g1, be1)

        # ---- feed-forward ------------------------------------------------
        f = jnp.dot(h.astype(wdt), w1_ref[kk],
                    preferred_element_type=jnp.float32) + b1
        f = jnp.maximum(f, 0.0)
        f = jnp.dot(f.astype(wdt), w2_ref[kk],
                    preferred_element_type=jnp.float32) + b2
        h = _layernorm(h + f, g2, be2)

    h_ref[...] = h

    # ---- final per-token projection (padded to 128 lanes) after last layers ----
    @pl.when(lb == num_layer_blocks - 1)
    def _():
        y = jnp.dot(h.astype(wdt), wf_ref[...],
                    preferred_element_type=jnp.float32) + bf_ref[...]
        out_ref[...] = y.astype(out_ref.dtype)


def sst_forward(x, packed, *, heads, num_layers, out_features,
                layers_per_block=None, batch_blocks=None):
    B, S, D = x.shape
    N = B * S
    dh = D // heads
    H = packed["w1"].shape[-1]
    Fp = packed["wf"].shape[-1]
    C = packed["vec"].shape[-1]

    if layers_per_block is None:   # largest divisor of num_layers that is <= 4
        layers_per_block = max(k for k in range(1, min(num_layers, 4) + 1)
                               if num_layers % k == 0)
    assert num_layers % layers_per_block == 0
    K = layers_per_block
    nlb = num_layers // K

    if batch_blocks is None:       # one sequence per step -> both v7x TCs busy
        batch_blocks = B if S % 8 == 0 else 1
    assert B % batch_blocks == 0
    Nb = (B // batch_blocks) * S
    assert Nb % 8 == 0 or Nb == N

    x_flat = x.reshape(N, D)

    def wspec(shape):
        # per-layer stacked parameter, blocked K layers at a time along axis 0
        return pl.BlockSpec((K,) + shape, lambda b, l: (l,) + (0,) * len(shape))

    in_specs = [
        # x: index depends only on the batch block -> fetched once per block
        pl.BlockSpec((Nb, D), lambda b, l: (b, 0)),
        wspec((D, 3 * D)),            # fused, head-grouped QKV weight (bf16)
        wspec((heads, dh, D)),        # W_o pre-split per head (bf16)
        wspec((D, H)),                # FFN W1 (bf16)
        wspec((H, D)),                # FFN W2 (bf16)
        wspec((8, C)),                # packed per-layer vectors (single DMA)
        pl.BlockSpec((D, Fp), lambda b, l: (0, 0)),   # final projection (constant)
        pl.BlockSpec((1, Fp), lambda b, l: (0, 0)),
    ]
    out_spec = pl.BlockSpec((Nb, Fp), lambda b, l: (b, 0))

    flops = N * num_layers * (8 * D * D + 4 * D * H + 4 * S * D) + 2 * N * D * Fp
    transcendentals = num_layers * B * heads * S * S + 2 * num_layers * N
    bytes_accessed = (num_layers * (2 * (4 * D * D + 2 * D * H) + 4 * 8 * C)
                      + 2 * D * Fp + 4 * Fp + 4 * N * D + 4 * N * Fp)

    kernel = functools.partial(sst_kernel, seq=S, heads=heads,
                               layers_per_block=K, num_layer_blocks=nlb)
    y_pad = pl.pallas_call(
        kernel,
        out_shape=jax.ShapeDtypeStruct((N, Fp), jnp.float32),
        grid_spec=pltpu.PrefetchScalarGridSpec(
            num_scalar_prefetch=0,
            grid=(batch_blocks, nlb),
            in_specs=in_specs,
            out_specs=out_spec,
            scratch_shapes=[pltpu.VMEM((Nb, D), jnp.float32)],
        ),
        compiler_params=pltpu.CompilerParams(
            # batch blocks are independent -> "parallel" (megacore on v7x);
            # hidden state is carried across the layer axis -> "arbitrary".
            dimension_semantics=("parallel", "arbitrary"),
            vmem_limit_bytes=32 * 1024 * 1024,
        ),
        cost_estimate=pl.CostEstimate(flops=flops,
                                      transcendentals=transcendentals,
                                      bytes_accessed=bytes_accessed),
    )(x_flat, packed["wqkv"], packed["wo"], packed["w1"], packed["w2"],
      packed["vec"], packed["wf"], packed["bf"])
    return y_pad[:, :out_features].reshape(B, S, out_features)


# ---------------------------------------------------------------------------
# Parameter construction / packing (host-side, one-time plumbing)
# ---------------------------------------------------------------------------
def _group_heads(wq_, wk_, wv_, heads, dh):
    # interleave last-axis columns so the fused QKV output is [q_h|k_h|v_h] per head
    cols = []
    for h in range(heads):
        sl = slice(h * dh, (h + 1) * dh)
        cols += [wq_[..., sl], wk_[..., sl], wv_[..., sl]]
    return jnp.concatenate(cols, axis=-1)


def init_params(key, n, num_layers, out_features, ffn_mult=4):
    H = ffn_mult * n
    L = num_layers
    ks = jax.random.split(key, 14)

    def w(k, fan_in, shape):
        return jax.random.normal(k, shape, jnp.float32) / jnp.sqrt(fan_in)

    def b(k, shape):
        return 0.02 * jax.random.normal(k, shape, jnp.float32)

    return dict(
        wq=w(ks[0], n, (L, n, n)), bq=b(ks[1], (L, n)),
        wk=w(ks[2], n, (L, n, n)), bk=b(ks[3], (L, n)),
        wv=w(ks[4], n, (L, n, n)), bv=b(ks[5], (L, n)),
        wo=w(ks[6], n, (L, n, n)), bo=b(ks[7], (L, n)),
        g1=jnp.ones((L, n), jnp.float32), be1=jnp.zeros((L, n), jnp.float32),
        w1=w(ks[8], n, (L, n, H)), b1=b(ks[9], (L, H)),
        w2=w(ks[10], H, (L, H, n)), b2=b(ks[11], (L, n)),
        g2=jnp.ones((L, n), jnp.float32), be2=jnp.zeros((L, n), jnp.float32),
        wf=w(ks[12], n, (n, out_features)), bf=b(ks[13], (out_features,)),
    )


def pack_params(p, *, heads):
    L, D, _ = p["wq"].shape
    H = p["w1"].shape[-1]
    F = p["wf"].shape[-1]
    dh = D // heads
    scale = 1.0 / float(dh) ** 0.5
    wdt = jnp.bfloat16   # weights stored bf16 in HBM; accumulation stays f32

    # Fold the 1/sqrt(dh) attention scale into Wq / bq once, at pack time.
    wqkv = _group_heads(p["wq"] * scale, p["wk"], p["wv"], heads, dh).astype(wdt)
    bqkv = _group_heads(p["bq"] * scale, p["bk"], p["bv"], heads, dh)

    # Single per-layer slab holding all small vectors (one DMA per layer block).
    C = max(128, _round_up(3 * D, 128), _round_up(H, 128))
    vec = jnp.zeros((L, 8, C), jnp.float32)
    vec = vec.at[:, 0, :3 * D].set(bqkv)
    vec = vec.at[:, 1, :D].set(p["bo"])
    vec = vec.at[:, 2, :D].set(p["g1"])
    vec = vec.at[:, 3, :D].set(p["be1"])
    vec = vec.at[:, 4, :H].set(p["b1"])
    vec = vec.at[:, 5, :D].set(p["b2"])
    vec = vec.at[:, 6, :D].set(p["g2"])
    vec = vec.at[:, 7, :D].set(p["be2"])

    # Final projection padded to 128 lanes -> lane-dense stores in the kernel.
    Fp = _round_up(F, 128)
    wf = jnp.zeros((D, Fp), jnp.float32).at[:, :F].set(p["wf"]).astype(wdt)
    bf = jnp.zeros((1, Fp), jnp.float32).at[0, :F].set(p["bf"])

    return dict(
        wqkv=wqkv,
        wo=p["wo"].reshape(L, heads, dh, D).astype(wdt),   # pre-split per head
        w1=p["w1"].astype(wdt),
        w2=p["w2"].astype(wdt),
        vec=vec, wf=wf, bf=bf,
    )


if __name__ == "__main__":
    B, S = 2, 8
    n, heads, num_layers, out_features = 32, 4, 2, 16

    key = jax.random.PRNGKey(0)
    k_x, k_p = jax.random.split(key)
    x = jax.random.normal(k_x, (B, S, n), jnp.float32)
    params = init_params(k_p, n, num_layers, out_features)
    packed = pack_params(params, heads=heads)

    y = sst_forward(x, packed, heads=heads, num_layers=num_layers,
                    out_features=out_features)
    y = jax.block_until_ready(y)

    assert y.shape == (B, S, out_features)
    assert bool(jnp.all(jnp.isfinite(y)))
    print("KERNEL_OK")
</pallas_src>

<mosaic_0001>
module attributes {stable_mosaic.version = 11 : i64} {
  func.func @sst_kernel(%arg0: i32, %arg1: i32, %arg2: memref<8x32xf32, #tpu.memory_space<vmem>>, %arg3: memref<2x32x96xbf16, #tpu.memory_space<vmem>>, %arg4: memref<2x4x8x32xbf16, #tpu.memory_space<vmem>>, %arg5: memref<2x32x128xbf16, #tpu.memory_space<vmem>>, %arg6: memref<2x128x32xbf16, #tpu.memory_space<vmem>>, %arg7: memref<2x8x128xf32, #tpu.memory_space<vmem>>, %arg8: memref<32x128xbf16, #tpu.memory_space<vmem>>, %arg9: memref<1x128xf32, #tpu.memory_space<vmem>>, %arg10: memref<8x128xf32, #tpu.memory_space<vmem>>, %arg11: memref<8x32xf32, #tpu.memory_space<vmem>>) attributes {dimension_semantics = [#tpu.dimension_semantics<parallel>, #tpu.dimension_semantics<arbitrary>], iteration_bounds = array<i64: 2, 1>, scalar_prefetch = 0 : i64, scratch_operands = 1 : i64, tpu.core_type = #tpu.core_type<tc>, window_params = [{transform_indices = @transform_0, window_bounds = array<i64: 8, 32>}, {transform_indices = @transform_1, window_bounds = array<i64: 2, 32, 96>}, {transform_indices = @transform_2, window_bounds = array<i64: 2, 4, 8, 32>}, {transform_indices = @transform_3, window_bounds = array<i64: 2, 32, 128>}, {transform_indices = @transform_4, window_bounds = array<i64: 2, 128, 32>}, {transform_indices = @transform_5, window_bounds = array<i64: 2, 8, 128>}, {pipeline_mode = #tpu.pipeline_mode<synchronous>, transform_indices = @transform_6, window_bounds = array<i64: 32, 128>}, {pipeline_mode = #tpu.pipeline_mode<synchronous>, transform_indices = @transform_7, window_bounds = array<i64: 1, 128>}, {transform_indices = @transform_8, window_bounds = array<i64: 8, 128>}]} {
    %c0_i32 = arith.constant 0 : i32
    %0 = arith.cmpi eq, %arg1, %c0_i32 : i32
    %1 = arith.extui %0 : i1 to i32
    %c0_i32_0 = arith.constant 0 : i32
    %2 = arith.cmpi ne, %1, %c0_i32_0 : i32
    scf.if %2 {
      %c0_76 = arith.constant 0 : index
      %c0_77 = arith.constant 0 : index
      %222 = vector.load %arg2[%c0_76, %c0_77] : memref<8x32xf32, #tpu.memory_space<vmem>>, vector<8x32xf32>
      %c0_78 = arith.constant 0 : index
      %c0_79 = arith.constant 0 : index
      %223 = vector.load %arg11[%c0_78, %c0_79] : memref<8x32xf32, #tpu.memory_space<vmem>>, vector<8x32xf32>
      tpu.vector_store %arg11[%c0_78, %c0_79], %222 {strides = array<i32>} : memref<8x32xf32, #tpu.memory_space<vmem>>, vector<8x32xf32>,
    } else {
    }
    %c0 = arith.constant 0 : index
    %c0_1 = arith.constant 0 : index
    %3 = vector.load %arg11[%c0, %c0_1] : memref<8x32xf32, #tpu.memory_space<vmem>>, vector<8x32xf32>
    %c0_2 = arith.constant 0 : index
    %c0_3 = arith.constant 0 : index
    %c0_4 = arith.constant 0 : index
    %4 = vector.load %arg7[%c0_2, %c0_3, %c0_4] : memref<2x8x128xf32, #tpu.memory_space<vmem>>, vector<1x8x128xf32>
    %5 = vector.shape_cast %4 : vector<1x8x128xf32> to vector<8x128xf32>
    %6 = vector.extract_strided_slice %5 {offsets = [0, 0], sizes = [1, 96], strides = [1, 1]} : vector<8x128xf32> to vector<1x96xf32>
    %7 = vector.extract_strided_slice %5 {offsets = [1, 0], sizes = [1, 32], strides = [1, 1]} : vector<8x128xf32> to vector<1x32xf32>
    %8 = vector.extract_strided_slice %5 {offsets = [2, 0], sizes = [1, 32], strides = [1, 1]} : vector<8x128xf32> to vector<1x32xf32>
    %9 = vector.extract_strided_slice %5 {offsets = [3, 0], sizes = [1, 32], strides = [1, 1]} : vector<8x128xf32> to vector<1x32xf32>
    %10 = vector.extract_strided_slice %5 {offsets = [4, 0], sizes = [1, 128], strides = [1, 1]} : vector<8x128xf32> to vector<1x128xf32>
    %11 = vector.extract_strided_slice %5 {offsets = [5, 0], sizes = [1, 32], strides = [1, 1]} : vector<8x128xf32> to vector<1x32xf32>
    %12 = vector.extract_strided_slice %5 {offsets = [6, 0], sizes = [1, 32], strides = [1, 1]} : vector<8x128xf32> to vector<1x32xf32>
    %13 = vector.extract_strided_slice %5 {offsets = [7, 0], sizes = [1, 32], strides = [1, 1]} : vector<8x128xf32> to vector<1x32xf32>
    %14 = arith.truncf %3 : vector<8x32xf32> to vector<8x32xbf16>
    %c0_5 = arith.constant 0 : index
    %c0_6 = arith.constant 0 : index
    %c0_7 = arith.constant 0 : index
    %15 = vector.load %arg3[%c0_5, %c0_6, %c0_7] : memref<2x32x96xbf16, #tpu.memory_space<vmem>>, vector<1x32x96xbf16>
    %16 = vector.shape_cast %15 : vector<1x32x96xbf16> to vector<32x96xbf16>
    %cst = arith.constant dense<0.000000e+00> : vector<8x96xf32>
    %17 = tpu.matmul %14, %16, %cst {dimension_numbers = #tpu.dot_dimension_numbers<[1], [0], [0], [1], [0, 0, 1, 1], [], []>} : vector<8x32xbf16>, vector<32x96xbf16>, vector<8x96xf32> -> vector<8x96xf32>
    %18 = vector.broadcast %6 : vector<1x96xf32> to vector<8x96xf32>
    %19 = arith.addf %17, %18 : vector<8x96xf32>
    %c0_8 = arith.constant 0 : index
    %c0_9 = arith.constant 0 : index
    %c0_10 = arith.constant 0 : index
    %c0_11 = arith.constant 0 : index
    %20 = vector.load %arg4[%c0_8, %c0_9, %c0_10, %c0_11] : memref<2x4x8x32xbf16, #tpu.memory_space<vmem>>, vector<1x4x8x32xbf16>
    %21 = vector.shape_cast %20 : vector<1x4x8x32xbf16> to vector<4x8x32xbf16>
    %22 = vector.extract_strided_slice %19 {offsets = [0, 0], sizes = [8, 24], strides = [1, 1]} : vector<8x96xf32> to vector<8x24xf32>
    %23 = vector.extract_strided_slice %19 {offsets = [0, 24], sizes = [8, 24], strides = [1, 1]} : vector<8x96xf32> to vector<8x24xf32>
    %24 = vector.extract_strided_slice %19 {offsets = [0, 48], sizes = [8, 24], strides = [1, 1]} : vector<8x96xf32> to vector<8x24xf32>
    %25 = vector.extract_strided_slice %19 {offsets = [0, 72], sizes = [8, 24], strides = [1, 1]} : vector<8x96xf32> to vector<8x24xf32>
    %26 = vector.shape_cast %22 : vector<8x24xf32> to vector<1x8x24xf32>
    %27 = vector.shape_cast %23 : vector<8x24xf32> to vector<1x8x24xf32>
    %28 = vector.shape_cast %24 : vector<8x24xf32> to vector<1x8x24xf32>
    %29 = vector.shape_cast %25 : vector<8x24xf32> to vector<1x8x24xf32>
    %30 = tpu.concatenate %26, %27, %28, %29 in 0 : vector<1x8x24xf32>, vector<1x8x24xf32>, vector<1x8x24xf32>, vector<1x8x24xf32> -> vector<4x8x24xf32>
    %31 = vector.extract_strided_slice %30 {offsets = [0, 0, 0], sizes = [4, 8, 8], strides = [1, 1, 1]} : vector<4x8x24xf32> to vector<4x8x8xf32>
    %32 = vector.extract_strided_slice %30 {offsets = [0, 0, 8], sizes = [4, 8, 8], strides = [1, 1, 1]} : vector<4x8x24xf32> to vector<4x8x8xf32>
    %33 = vector.extract_strided_slice %30 {offsets = [0, 0, 16], sizes = [4, 8, 8], strides = [1, 1, 1]} : vector<4x8x24xf32> to vector<4x8x8xf32>
    "tpu.trace_start"() <{level = 10 : i32, message = "hqd,hkd->hqk"}> : () -> ()
    %cst_12 = arith.constant dense<0.000000e+00> : vector<4x8x8xf32>
    %34 = tpu.matmul %31, %32, %cst_12 {dimension_numbers = #tpu.dot_dimension_numbers<[2], [2], [1], [1], [0, 0, 0, 1, 1, 1], [0], [0]>} : vector<4x8x8xf32>, vector<4x8x8xf32>, vector<4x8x8xf32> -> vector<4x8x8xf32>
    "tpu.trace_stop"() : () -> ()
    %cst_13 = arith.constant dense<0xFF800000> : vector<4x8xf32>
    %35 = vector.multi_reduction <maximumf>, %34, %cst_13 [2] : vector<4x8x8xf32> to vector<4x8xf32>
    %36 = vector.shape_cast %35 : vector<4x8xf32> to vector<4x8x1xf32>
    %37 = vector.broadcast %36 : vector<4x8x1xf32> to vector<4x8x8xf32>
    %38 = arith.subf %34, %37 : vector<4x8x8xf32>
    %39 = math.exp %38 : vector<4x8x8xf32>
    %cst_14 = arith.constant dense<0.000000e+00> : vector<4x8xf32>
    %40 = vector.multi_reduction <add>, %39, %cst_14 [2] : vector<4x8x8xf32> to vector<4x8xf32>
    %41 = vector.shape_cast %40 : vector<4x8xf32> to vector<4x8x1xf32>
    %42 = tpu.reciprocal %41 {approx = true} : vector<4x8x1xf32> -> vector<4x8x1xf32>
    %43 = vector.broadcast %42 : vector<4x8x1xf32> to vector<4x8x8xf32>
    %44 = arith.mulf %39, %43 : vector<4x8x8xf32>
    "tpu.trace_start"() <{level = 10 : i32, message = "hqk,hkd->hqd"}> : () -> ()
    %cst_15 = arith.constant dense<0.000000e+00> : vector<4x8x8xf32>
    %45 = tpu.matmul %44, %33, %cst_15 {dimension_numbers = #tpu.dot_dimension_numbers<[2], [1], [1], [2], [0, 0, 0, 1, 1, 2], [0], [0]>} : vector<4x8x8xf32>, vector<4x8x8xf32>, vector<4x8x8xf32> -> vector<4x8x8xf32>
    "tpu.trace_stop"() : () -> ()
    %46 = arith.truncf %45 : vector<4x8x8xf32> to vector<4x8x8xbf16>
    "tpu.trace_start"() <{level = 10 : i32, message = "hqd,hdo->hqo"}> : () -> ()
    %cst_16 = arith.constant dense<0.000000e+00> : vector<4x8x32xf32>
    %47 = tpu.matmul %46, %21, %cst_16 {dimension_numbers = #tpu.dot_dimension_numbers<[2], [1], [1], [2], [0, 0, 0, 1, 1, 2], [0], [0]>} : vector<4x8x8xbf16>, vector<4x8x32xbf16>, vector<4x8x32xf32> -> vector<4x8x32xf32>
    "tpu.trace_stop"() : () -> ()
    %cst_17 = arith.constant dense<0.000000e+00> : vector<8x32xf32>
    %48 = vector.multi_reduction <add>, %47, %cst_17 [0] : vector<4x8x32xf32> to vector<8x32xf32>
    %49 = arith.addf %3, %48 : vector<8x32xf32>
    %50 = vector.broadcast %7 : vector<1x32xf32> to vector<8x32xf32>
    %51 = arith.addf %49, %50 : vector<8x32xf32>
    %cst_18 = arith.constant dense<0.000000e+00> : vector<8xf32>
    %52 = vector.multi_reduction <add>, %51, %cst_18 [1] : vector<8x32xf32> to vector<8xf32>
    %53 = vector.shape_cast %52 : vector<8xf32> to vector<8x1xf32>
    %cst_19 = arith.constant 3.200000e+01 : f32
    %54 = vector.broadcast %cst_19 : f32 to vector<8x1xf32>
    %55 = arith.divf %53, %54 : vector<8x1xf32>
    %56 = vector.broadcast %55 : vector<8x1xf32> to vector<8x32xf32>
    %57 = arith.subf %51, %56 : vector<8x32xf32>
    %58 = arith.mulf %57, %57 : vector<8x32xf32>
    %cst_20 = arith.constant dense<0.000000e+00> : vector<8xf32>
    %59 = vector.multi_reduction <add>, %58, %cst_20 [1] : vector<8x32xf32> to vector<8xf32>
    %60 = vector.shape_cast %59 : vector<8xf32> to vector<8x1xf32>
    %cst_21 = arith.constant 3.200000e+01 : f32
    %61 = vector.broadcast %cst_21 : f32 to vector<8x1xf32>
    %62 = arith.divf %60, %61 : vector<8x1xf32>
    %63 = vector.broadcast %55 : vector<8x1xf32> to vector<8x32xf32>
    %64 = arith.subf %51, %63 : vector<8x32xf32>
    %cst_22 = arith.constant 9.99999974E-6 : f32
    %65 = vector.broadcast %cst_22 : f32 to vector<8x1xf32>
    %66 = arith.addf %62, %65 : vector<8x1xf32>
    %67 = math.rsqrt %66 : vector<8x1xf32>
    %68 = vector.broadcast %67 : vector<8x1xf32> to vector<8x32xf32>
    %69 = arith.mulf %64, %68 : vector<8x32xf32>
    %70 = vector.broadcast %8 : vector<1x32xf32> to vector<8x32xf32>
    %71 = arith.mulf %69, %70 : vector<8x32xf32>
    %72 = vector.broadcast %9 : vector<1x32xf32> to vector<8x32xf32>
    %73 = arith.addf %71, %72 : vector<8x32xf32>
    %74 = arith.truncf %73 : vector<8x32xf32> to vector<8x32xbf16>
    %c0_23 = arith.constant 0 : index
    %c0_24 = arith.constant 0 : index
    %c0_25 = arith.constant 0 : index
    %75 = vector.load %arg5[%c0_23, %c0_24, %c0_25] : memref<2x32x128xbf16, #tpu.memory_space<vmem>>, vector<1x32x128xbf16>
    %76 = vector.shape_cast %75 : vector<1x32x128xbf16> to vector<32x128xbf16>
    %cst_26 = arith.constant dense<0.000000e+00> : vector<8x128xf32>
    %77 = tpu.matmul %74, %76, %cst_26 {dimension_numbers = #tpu.dot_dimension_numbers<[1], [0], [0], [1], [0, 0, 1, 1], [], []>} : vector<8x32xbf16>, vector<32x128xbf16>, vector<8x128xf32> -> vector<8x128xf32>
    %78 = vector.broadcast %10 : vector<1x128xf32> to vector<8x128xf32>
    %79 = arith.addf %77, %78 : vector<8x128xf32>
    %cst_27 = arith.constant 0.000000e+00 : f32
    %80 = vector.broadcast %cst_27 : f32 to vector<8x128xf32>
    %81 = arith.maximumf %79, %80 : vector<8x128xf32>
    %82 = arith.truncf %81 : vector<8x128xf32> to vector<8x128xbf16>
    %c0_28 = arith.constant 0 : index
    %c0_29 = arith.constant 0 : index
    %c0_30 = arith.constant 0 : index
    %83 = vector.load %arg6[%c0_28, %c0_29, %c0_30] : memref<2x128x32xbf16, #tpu.memory_space<vmem>>, vector<1x128x32xbf16>
    %84 = vector.shape_cast %83 : vector<1x128x32xbf16> to vector<128x32xbf16>
    %cst_31 = arith.constant dense<0.000000e+00> : vector<8x32xf32>
    %85 = tpu.matmul %82, %84, %cst_31 {dimension_numbers = #tpu.dot_dimension_numbers<[1], [0], [0], [1], [0, 0, 1, 1], [], []>} : vector<8x128xbf16>, vector<128x32xbf16>, vector<8x32xf32> -> vector<8x32xf32>
    %86 = vector.broadcast %11 : vector<1x32xf32> to vector<8x32xf32>
    %87 = arith.addf %85, %86 : vector<8x32xf32>
    %88 = arith.addf %73, %87 : vector<8x32xf32>
    %cst_32 = arith.constant dense<0.000000e+00> : vector<8xf32>
    %89 = vector.multi_reduction <add>, %88, %cst_32 [1] : vector<8x32xf32> to vector<8xf32>
    %90 = vector.shape_cast %89 : vector<8xf32> to vector<8x1xf32>
    %cst_33 = arith.constant 3.200000e+01 : f32
    %91 = vector.broadcast %cst_33 : f32 to vector<8x1xf32>
    %92 = arith.divf %90, %91 : vector<8x1xf32>
    %93 = vector.broadcast %92 : vector<8x1xf32> to vector<8x32xf32>
    %94 = arith.subf %88, %93 : vector<8x32xf32>
    %95 = arith.mulf %94, %94 : vector<8x32xf32>
    %cst_34 = arith.constant dense<0.000000e+00> : vector<8xf32>
    %96 = vector.multi_reduction <add>, %95, %cst_34 [1] : vector<8x32xf32> to vector<8xf32>
    %97 = vector.shape_cast %96 : vector<8xf32> to vector<8x1xf32>
    %cst_35 = arith.constant 3.200000e+01 : f32
    %98 = vector.broadcast %cst_35 : f32 to vector<8x1xf32>
    %99 = arith.divf %97, %98 : vector<8x1xf32>
    %100 = vector.broadcast %92 : vector<8x1xf32> to vector<8x32xf32>
    %101 = arith.subf %88, %100 : vector<8x32xf32>
    %cst_36 = arith.constant 9.99999974E-6 : f32
    %102 = vector.broadcast %cst_36 : f32 to vector<8x1xf32>
    %103 = arith.addf %99, %102 : vector<8x1xf32>
    %104 = math.rsqrt %103 : vector<8x1xf32>
    %105 = vector.broadcast %104 : vector<8x1xf32> to vector<8x32xf32>
    %106 = arith.mulf %101, %105 : vector<8x32xf32>
    %107 = vector.broadcast %12 : vector<1x32xf32> to vector<8x32xf32>
    %108 = arith.mulf %106, %107 : vector<8x32xf32>
    %109 = vector.broadcast %13 : vector<1x32xf32> to vector<8x32xf32>
    %110 = arith.addf %108, %109 : vector<8x32xf32>
    %c1 = arith.constant 1 : index
    %c0_37 = arith.constant 0 : index
    %c0_38 = arith.constant 0 : index
    %111 = vector.load %arg7[%c1, %c0_37, %c0_38] : memref<2x8x128xf32, #tpu.memory_space<vmem>>, vector<1x8x128xf32>
    %112 = vector.shape_cast %111 : vector<1x8x128xf32> to vector<8x128xf32>
    %113 = vector.extract_strided_slice %112 {offsets = [0, 0], sizes = [1, 96], strides = [1, 1]} : vector<8x128xf32> to vector<1x96xf32>
    %114 = vector.extract_strided_slice %112 {offsets = [1, 0], sizes = [1, 32], strides = [1, 1]} : vector<8x128xf32> to vector<1x32xf32>
    %115 = vector.extract_strided_slice %112 {offsets = [2, 0], sizes = [1, 32], strides = [1, 1]} : vector<8x128xf32> to vector<1x32xf32>
    %116 = vector.extract_strided_slice %112 {offsets = [3, 0], sizes = [1, 32], strides = [1, 1]} : vector<8x128xf32> to vector<1x32xf32>
    %117 = vector.extract_strided_slice %112 {offsets = [4, 0], sizes = [1, 128], strides = [1, 1]} : vector<8x128xf32> to vector<1x128xf32>
    %118 = vector.extract_strided_slice %112 {offsets = [5, 0], sizes = [1, 32], strides = [1, 1]} : vector<8x128xf32> to vector<1x32xf32>
    %119 = vector.extract_strided_slice %112 {offsets = [6, 0], sizes = [1, 32], strides = [1, 1]} : vector<8x128xf32> to vector<1x32xf32>
    %120 = vector.extract_strided_slice %112 {offsets = [7, 0], sizes = [1, 32], strides = [1, 1]} : vector<8x128xf32> to vector<1x32xf32>
    %121 = arith.truncf %110 : vector<8x32xf32> to vector<8x32xbf16>
    %c1_39 = arith.constant 1 : index
    %c0_40 = arith.constant 0 : index
    %c0_41 = arith.constant 0 : index
    %122 = vector.load %arg3[%c1_39, %c0_40, %c0_41] : memref<2x32x96xbf16, #tpu.memory_space<vmem>>, vector<1x32x96xbf16>
    %123 = vector.shape_cast %122 : vector<1x32x96xbf16> to vector<32x96xbf16>
    %cst_42 = arith.constant dense<0.000000e+00> : vector<8x96xf32>
    %124 = tpu.matmul %121, %123, %cst_42 {dimension_numbers = #tpu.dot_dimension_numbers<[1], [0], [0], [1], [0, 0, 1, 1], [], []>} : vector<8x32xbf16>, vector<32x96xbf16>, vector<8x96xf32> -> vector<8x96xf32>
    %125 = vector.broadcast %113 : vector<1x96xf32> to vector<8x96xf32>
    %126 = arith.addf %124, %125 : vector<8x96xf32>
    %c1_43 = arith.constant 1 : index
    %c0_44 = arith.constant 0 : index
    %c0_45 = arith.constant 0 : index
    %c0_46 = arith.constant 0 : index
    %127 = vector.load %arg4[%c1_43, %c0_44, %c0_45, %c0_46] : memref<2x4x8x32xbf16, #tpu.memory_space<vmem>>, vector<1x4x8x32xbf16>
    %128 = vector.shape_cast %127 : vector<1x4x8x32xbf16> to vector<4x8x32xbf16>
    %129 = vector.extract_strided_slice %126 {offsets = [0, 0], sizes = [8, 24], strides = [1, 1]} : vector<8x96xf32> to vector<8x24xf32>
    %130 = vector.extract_strided_slice %126 {offsets = [0, 24], sizes = [8, 24], strides = [1, 1]} : vector<8x96xf32> to vector<8x24xf32>
    %131 = vector.extract_strided_slice %126 {offsets = [0, 48], sizes = [8, 24], strides = [1, 1]} : vector<8x96xf32> to vector<8x24xf32>
    %132 = vector.extract_strided_slice %126 {offsets = [0, 72], sizes = [8, 24], strides = [1, 1]} : vector<8x96xf32> to vector<8x24xf32>
    %133 = vector.shape_cast %129 : vector<8x24xf32> to vector<1x8x24xf32>
    %134 = vector.shape_cast %130 : vector<8x24xf32> to vector<1x8x24xf32>
    %135 = vector.shape_cast %131 : vector<8x24xf32> to vector<1x8x24xf32>
    %136 = vector.shape_cast %132 : vector<8x24xf32> to vector<1x8x24xf32>
    %137 = tpu.concatenate %133, %134, %135, %136 in 0 : vector<1x8x24xf32>, vector<1x8x24xf32>, vector<1x8x24xf32>, vector<1x8x24xf32> -> vector<4x8x24xf32>
    %138 = vector.extract_strided_slice %137 {offsets = [0, 0, 0], sizes = [4, 8, 8], strides = [1, 1, 1]} : vector<4x8x24xf32> to vector<4x8x8xf32>
    %139 = vector.extract_strided_slice %137 {offsets = [0, 0, 8], sizes = [4, 8, 8], strides = [1, 1, 1]} : vector<4x8x24xf32> to vector<4x8x8xf32>
    %140 = vector.extract_strided_slice %137 {offsets = [0, 0, 16], sizes = [4, 8, 8], strides = [1, 1, 1]} : vector<4x8x24xf32> to vector<4x8x8xf32>
    "tpu.trace_start"() <{level = 10 : i32, message = "hqd,hkd->hqk"}> : () -> ()
    %cst_47 = arith.constant dense<0.000000e+00> : vector<4x8x8xf32>
    %141 = tpu.matmul %138, %139, %cst_47 {dimension_numbers = #tpu.dot_dimension_numbers<[2], [2], [1], [1], [0, 0, 0, 1, 1, 1], [0], [0]>} : vector<4x8x8xf32>, vector<4x8x8xf32>, vector<4x8x8xf32> -> vector<4x8x8xf32>
    "tpu.trace_stop"() : () -> ()
    %cst_48 = arith.constant dense<0xFF800000> : vector<4x8xf32>
    %142 = vector.multi_reduction <maximumf>, %141, %cst_48 [2] : vector<4x8x8xf32> to vector<4x8xf32>
    %143 = vector.shape_cast %142 : vector<4x8xf32> to vector<4x8x1xf32>
    %144 = vector.broadcast %143 : vector<4x8x1xf32> to vector<4x8x8xf32>
    %145 = arith.subf %141, %144 : vector<4x8x8xf32>
    %146 = math.exp %145 : vector<4x8x8xf32>
    %cst_49 = arith.constant dense<0.000000e+00> : vector<4x8xf32>
    %147 = vector.multi_reduction <add>, %146, %cst_49 [2] : vector<4x8x8xf32> to vector<4x8xf32>
    %148 = vector.shape_cast %147 : vector<4x8xf32> to vector<4x8x1xf32>
    %149 = tpu.reciprocal %148 {approx = true} : vector<4x8x1xf32> -> vector<4x8x1xf32>
    %150 = vector.broadcast %149 : vector<4x8x1xf32> to vector<4x8x8xf32>
    %151 = arith.mulf %146, %150 : vector<4x8x8xf32>
    "tpu.trace_start"() <{level = 10 : i32, message = "hqk,hkd->hqd"}> : () -> ()
    %cst_50 = arith.constant dense<0.000000e+00> : vector<4x8x8xf32>
    %152 = tpu.matmul %151, %140, %cst_50 {dimension_numbers = #tpu.dot_dimension_numbers<[2], [1], [1], [2], [0, 0, 0, 1, 1, 2], [0], [0]>} : vector<4x8x8xf32>, vector<4x8x8xf32>, vector<4x8x8xf32> -> vector<4x8x8xf32>
    "tpu.trace_stop"() : () -> ()
    %153 = arith.truncf %152 : vector<4x8x8xf32> to vector<4x8x8xbf16>
    "tpu.trace_start"() <{level = 10 : i32, message = "hqd,hdo->hqo"}> : () -> ()
    %cst_51 = arith.constant dense<0.000000e+00> : vector<4x8x32xf32>
    %154 = tpu.matmul %153, %128, %cst_51 {dimension_numbers = #tpu.dot_dimension_numbers<[2], [1], [1], [2], [0, 0, 0, 1, 1, 2], [0], [0]>} : vector<4x8x8xbf16>, vector<4x8x32xbf16>, vector<4x8x32xf32> -> vector<4x8x32xf32>
    "tpu.trace_stop"() : () -> ()
    %cst_52 = arith.constant dense<0.000000e+00> : vector<8x32xf32>
    %155 = vector.multi_reduction <add>, %154, %cst_52 [0] : vector<4x8x32xf32> to vector<8x32xf32>
    %156 = arith.addf %110, %155 : vector<8x32xf32>
    %157 = vector.broadcast %114 : vector<1x32xf32> to vector<8x32xf32>
    %158 = arith.addf %156, %157 : vector<8x32xf32>
    %cst_53 = arith.constant dense<0.000000e+00> : vector<8xf32>
    %159 = vector.multi_reduction <add>, %158, %cst_53 [1] : vector<8x32xf32> to vector<8xf32>
    %160 = vector.shape_cast %159 : vector<8xf32> to vector<8x1xf32>
    %cst_54 = arith.constant 3.200000e+01 : f32
    %161 = vector.broadcast %cst_54 : f32 to vector<8x1xf32>
    %162 = arith.divf %160, %161 : vector<8x1xf32>
    %163 = vector.broadcast %162 : vector<8x1xf32> to vector<8x32xf32>
    %164 = arith.subf %158, %163 : vector<8x32xf32>
    %165 = arith.mulf %164, %164 : vector<8x32xf32>
    %cst_55 = arith.constant dense<0.000000e+00> : vector<8xf32>
    %166 = vector.multi_reduction <add>, %165, %cst_55 [1] : vector<8x32xf32> to vector<8xf32>
    %167 = vector.shape_cast %166 : vector<8xf32> to vector<8x1xf32>
    %cst_56 = arith.constant 3.200000e+01 : f32
    %168 = vector.broadcast %cst_56 : f32 to vector<8x1xf32>
    %169 = arith.divf %167, %168 : vector<8x1xf32>
    %170 = vector.broadcast %162 : vector<8x1xf32> to vector<8x32xf32>
    %171 = arith.subf %158, %170 : vector<8x32xf32>
    %cst_57 = arith.constant 9.99999974E-6 : f32
    %172 = vector.broadcast %cst_57 : f32 to vector<8x1xf32>
    %173 = arith.addf %169, %172 : vector<8x1xf32>
    %174 = math.rsqrt %173 : vector<8x1xf32>
    %175 = vector.broadcast %174 : vector<8x1xf32> to vector<8x32xf32>
    %176 = arith.mulf %171, %175 : vector<8x32xf32>
    %177 = vector.broadcast %115 : vector<1x32xf32> to vector<8x32xf32>
    %178 = arith.mulf %176, %177 : vector<8x32xf32>
    %179 = vector.broadcast %116 : vector<1x32xf32> to vector<8x32xf32>
    %180 = arith.addf %178, %179 : vector<8x32xf32>
    %181 = arith.truncf %180 : vector<8x32xf32> to vector<8x32xbf16>
    %c1_58 = arith.constant 1 : index
    %c0_59 = arith.constant 0 : index
    %c0_60 = arith.constant 0 : index
    %182 = vector.load %arg5[%c1_58, %c0_59, %c0_60] : memref<2x32x128xbf16, #tpu.memory_space<vmem>>, vector<1x32x128xbf16>
    %183 = vector.shape_cast %182 : vector<1x32x128xbf16> to vector<32x128xbf16>
    %cst_61 = arith.constant dense<0.000000e+00> : vector<8x128xf32>
    %184 = tpu.matmul %181, %183, %cst_61 {dimension_numbers = #tpu.dot_dimension_numbers<[1], [0], [0], [1], [0, 0, 1, 1], [], []>} : vector<8x32xbf16>, vector<32x128xbf16>, vector<8x128xf32> -> vector<8x128xf32>
    %185 = vector.broadcast %117 : vector<1x128xf32> to vector<8x128xf32>
    %186 = arith.addf %184, %185 : vector<8x128xf32>
    %cst_62 = arith.constant 0.000000e+00 : f32
    %187 = vector.broadcast %cst_62 : f32 to vector<8x128xf32>
    %188 = arith.maximumf %186, %187 : vector<8x128xf32>
    %189 = arith.truncf %188 : vector<8x128xf32> to vector<8x128xbf16>
    %c1_63 = arith.constant 1 : index
    %c0_64 = arith.constant 0 : index
    %c0_65 = arith.constant 0 : index
    %190 = vector.load %arg6[%c1_63, %c0_64, %c0_65] : memref<2x128x32xbf16, #tpu.memory_space<vmem>>, vector<1x128x32xbf16>
    %191 = vector.shape_cast %190 : vector<1x128x32xbf16> to vector<128x32xbf16>
    %cst_66 = arith.constant dense<0.000000e+00> : vector<8x32xf32>
    %192 = tpu.matmul %189, %191, %cst_66 {dimension_numbers = #tpu.dot_dimension_numbers<[1], [0], [0], [1], [0, 0, 1, 1], [], []>} : vector<8x128xbf16>, vector<128x32xbf16>, vector<8x32xf32> -> vector<8x32xf32>
    %193 = vector.broadcast %118 : vector<1x32xf32> to vector<8x32xf32>
    %194 = arith.addf %192, %193 : vector<8x32xf32>
    %195 = arith.addf %180, %194 : vector<8x32xf32>
    %cst_67 = arith.constant dense<0.000000e+00> : vector<8xf32>
    %196 = vector.multi_reduction <add>, %195, %cst_67 [1] : vector<8x32xf32> to vector<8xf32>
    %197 = vector.shape_cast %196 : vector<8xf32> to vector<8x1xf32>
    %cst_68 = arith.constant 3.200000e+01 : f32
    %198 = vector.broadcast %cst_68 : f32 to vector<8x1xf32>
    %199 = arith.divf %197, %198 : vector<8x1xf32>
    %200 = vector.broadcast %199 : vector<8x1xf32> to vector<8x32xf32>
    %201 = arith.subf %195, %200 : vector<8x32xf32>
    %202 = arith.mulf %201, %201 : vector<8x32xf32>
    %cst_69 = arith.constant dense<0.000000e+00> : vector<8xf32>
    %203 = vector.multi_reduction <add>, %202, %cst_69 [1] : vector<8x32xf32> to vector<8xf32>
    %204 = vector.shape_cast %203 : vector<8xf32> to vector<8x1xf32>
    %cst_70 = arith.constant 3.200000e+01 : f32
    %205 = vector.broadcast %cst_70 : f32 to vector<8x1xf32>
    %206 = arith.divf %204, %205 : vector<8x1xf32>
    %207 = vector.broadcast %199 : vector<8x1xf32> to vector<8x32xf32>
    %208 = arith.subf %195, %207 : vector<8x32xf32>
    %cst_71 = arith.constant 9.99999974E-6 : f32
    %209 = vector.broadcast %cst_71 : f32 to vector<8x1xf32>
    %210 = arith.addf %206, %209 : vector<8x1xf32>
    %211 = math.rsqrt %210 : vector<8x1xf32>
    %212 = vector.broadcast %211 : vector<8x1xf32> to vector<8x32xf32>
    %213 = arith.mulf %208, %212 : vector<8x32xf32>
    %214 = vector.broadcast %119 : vector<1x32xf32> to vector<8x32xf32>
    %215 = arith.mulf %213, %214 : vector<8x32xf32>
    %216 = vector.broadcast %120 : vector<1x32xf32> to vector<8x32xf32>
    %217 = arith.addf %215, %216 : vector<8x32xf32>
    %c0_72 = arith.constant 0 : index
    %c0_73 = arith.constant 0 : index
    %218 = vector.load %arg11[%c0_72, %c0_73] : memref<8x32xf32, #tpu.memory_space<vmem>>, vector<8x32xf32>
    tpu.vector_store %arg11[%c0_72, %c0_73], %217 {strides = array<i32>} : memref<8x32xf32, #tpu.memory_space<vmem>>, vector<8x32xf32>,
    %c0_i32_74 = arith.constant 0 : i32
    %219 = arith.cmpi eq, %arg1, %c0_i32_74 : i32
    %220 = arith.extui %219 : i1 to i32
    %c0_i32_75 = arith.constant 0 : i32
    %221 = arith.cmpi ne, %220, %c0_i32_75 : i32
    scf.if %221 {
      %222 = arith.truncf %217 : vector<8x32xf32> to vector<8x32xbf16>
      %c0_76 = arith.constant 0 : index
      %c0_77 = arith.constant 0 : index
      %223 = vector.load %arg8[%c0_76, %c0_77] : memref<32x128xbf16, #tpu.memory_space<vmem>>, vector<32x128xbf16>
      %cst_78 = arith.constant dense<0.000000e+00> : vector<8x128xf32>
      %224 = tpu.matmul %222, %223, %cst_78 {dimension_numbers = #tpu.dot_dimension_numbers<[1], [0], [0], [1], [0, 0, 1, 1], [], []>} : vector<8x32xbf16>, vector<32x128xbf16>, vector<8x128xf32> -> vector<8x128xf32>
      %c0_79 = arith.constant 0 : index
      %c0_80 = arith.constant 0 : index
      %225 = vector.load %arg9[%c0_79, %c0_80] : memref<1x128xf32, #tpu.memory_space<vmem>>, vector<1x128xf32>
      %226 = vector.broadcast %225 : vector<1x128xf32> to vector<8x128xf32>
      %227 = arith.addf %224, %226 : vector<8x128xf32>
      %c0_81 = arith.constant 0 : index
      %c0_82 = arith.constant 0 : index
      %228 = vector.load %arg10[%c0_81, %c0_82] : memref<8x128xf32, #tpu.memory_space<vmem>>, vector<8x128xf32>
      tpu.vector_store %arg10[%c0_81, %c0_82], %227 {strides = array<i32>} : memref<8x128xf32, #tpu.memory_space<vmem>>, vector<8x128xf32>,
    } else {
    }
    return
  }
  func.func @transform_0(%arg0: i32, %arg1: i32) -> (i32, i32) {
    %c0_i32 = arith.constant 0 : i32
    %c0_i32_0 = arith.constant 0 : i32
    return %arg0, %c0_i32 : i32, i32
  }
  func.func @transform_1(%arg0: i32, %arg1: i32) -> (i32, i32, i32) {
    %c0_i32 = arith.constant 0 : i32
    %c0_i32_0 = arith.constant 0 : i32
    %c0_i32_1 = arith.constant 0 : i32
    return %arg1, %c0_i32, %c0_i32_0 : i32, i32, i32
  }
  func.func @transform_2(%arg0: i32, %arg1: i32) -> (i32, i32, i32, i32) {
    %c0_i32 = arith.constant 0 : i32
    %c0_i32_0 = arith.constant 0 : i32
    %c0_i32_1 = arith.constant 0 : i32
    %c0_i32_2 = arith.constant 0 : i32
    return %arg1, %c0_i32, %c0_i32_0, %c0_i32_1 : i32, i32, i32, i32
  }
  func.func @transform_3(%arg0: i32, %arg1: i32) -> (i32, i32, i32) {
    %c0_i32 = arith.constant 0 : i32
    %c0_i32_0 = arith.constant 0 : i32
    %c0_i32_1 = arith.constant 0 : i32
    return %arg1, %c0_i32, %c0_i32_0 : i32, i32, i32
  }
  func.func @transform_4(%arg0: i32, %arg1: i32) -> (i32, i32, i32) {
    %c0_i32 = arith.constant 0 : i32
    %c0_i32_0 = arith.constant 0 : i32
    %c0_i32_1 = arith.constant 0 : i32
    return %arg1, %c0_i32, %c0_i32_0 : i32, i32, i32
  }
  func.func @transform_5(%arg0: i32, %arg1: i32) -> (i32, i32, i32) {
    %c0_i32 = arith.constant 0 : i32
    %c0_i32_0 = arith.constant 0 : i32
    %c0_i32_1 = arith.constant 0 : i32
    return %arg1, %c0_i32, %c0_i32_0 : i32, i32, i32
  }
  func.func @transform_6(%arg0: i32, %arg1: i32) -> (i32, i32) {
    %c0_i32 = arith.constant 0 : i32
    %c0_i32_0 = arith.constant 0 : i32
    %c0_i32_1 = arith.constant 0 : i32
    return %c0_i32, %c0_i32_0 : i32, i32
  }
  func.func @transform_7(%arg0: i32, %arg1: i32) -> (i32, i32) {
    %c0_i32 = arith.constant 0 : i32
    %c0_i32_0 = arith.constant 0 : i32
    %c0_i32_1 = arith.constant 0 : i32
    return %c0_i32, %c0_i32_0 : i32, i32
  }
  func.func @transform_8(%arg0: i32, %arg1: i32) -> (i32, i32) {
    %c0_i32 = arith.constant 0 : i32
    %c0_i32_0 = arith.constant 0 : i32
    return %arg0, %c0_i32 : i32, i32
  }
}

</mosaic_0001>

<llo_original>
// kernel: tpu_custom_call.1
$region0: #{tpu_custom_call.1}
  #allocation0 [shape = 'u32[]', space=smem, size = 0x4, offset = 0x4, fixed_abs, tag = 'smem constant byte address 0x4 - core index']
  #allocation1 [shape = 'u32[144,128]{1,0:T(1,128)}', space=vmem, size = 0x12000, scoped, tag = 'internal scratch']
  #allocation2 [shape = 'f32[8,32]{1,0:T(8,128)}', space=vmem, size = 0x1000, scoped, tag = 'scratch operand']
  %s0 = inlined_call_operand.vmem [shape: f32[16,32], index: 0, kind: input, shape index: {}]
  %s1 = inlined_call_operand.vmem [shape: bf16[2,32,96], index: 1, kind: input, shape index: {}]
  %s2 = inlined_call_operand.vmem [shape: bf16[2,4,8,32], index: 2, kind: input, shape index: {}]
  %s3 = inlined_call_operand.vmem [shape: bf16[2,32,128], index: 3, kind: input, shape index: {}]
  %s4 = inlined_call_operand.vmem [shape: bf16[2,128,32], index: 4, kind: input, shape index: {}]
  %s5 = inlined_call_operand.vmem [shape: f32[2,8,128], index: 5, kind: input, shape index: {}]
  %s6 = inlined_call_operand.vmem [shape: bf16[32,128], index: 6, kind: input, shape index: {}]
  %s7 = inlined_call_operand.vmem [shape: f32[1,128], index: 7, kind: input, shape index: {}]
  %s8 = inlined_call_operand.hbm [shape: f32[16,128], index: 8, kind: output, shape index: {}]
  %s9 = sld [smem:[#allocation0]]
  $region73: #{tpu_custom_call.1} parent=0
    _
  %s11 = ssub.s32 1, %s9
  %s12 = scalar_select 0, %s11, %s9
  $region1: #{tpu_custom_call.1} parent=0
    #allocation3 [shape = 'u8[8192]{0}', space=vmem, size = 0x2000, scoped, tag = 'output window, operand 0']
    #allocation4 [shape = 's32[2]{0}', space=sflag, size = 0x8, scoped, tag = 'scoped memory for tpu_custom_call.1']
    %13 = vsyncpa [#allocation4], 0
    %s14 = scalar_lea.sflag [#allocation4], 1
    %15 = vsyncpa %s14, 0
    loop: start=0, step=1, limit=4
    $region2: #{tpu_custom_call.1} parent=1 // loop_pre_header
      _
    $region3: #{tpu_custom_call.1} parent=1 // loop_header
      %s17 = sphi 0, %s21
      %p18 = scmp.ge.s32.totalorder %s17, 4
      %s24 = sphi 0, %s36
      %s25 = sphi 0, %s32
      %s26 = sphi 0, %s24
      %s27 = sphi 0, %s25
      %s28 = sphi 0, %s26
      %s29 = sphi 0, %s27
      %s39 = sphi 0, %s41
      %s42 = sphi 0, %s39
      %s43 = sphi 0, %s42
      %s59 = sphi 0, %s43
      %s65 = sphi 0, %s67
      %s68 = sphi 0, %s65
      %s69 = sphi 0, %s68
      %s85 = sphi 0, %s69
      %s91 = sphi 0, %s93
      %s94 = sphi 0, %s91
      %s95 = sphi 0, %s94
      %s111 = sphi 0, %s95
      %s117 = sphi 0, %s119
      %s120 = sphi 0, %s117
      %s121 = sphi 0, %s120
      %s137 = sphi 0, %s121
      %s143 = sphi 0, %s145
      %s146 = sphi 0, %s143
      %s147 = sphi 0, %s146
      %s163 = sphi 0, %s147
      %s169 = sphi 0, %s171
      %s172 = sphi 0, %s169
      %s173 = sphi 0, %s172
      %s189 = sphi 0, %s173
      %s193 = sphi 0, %s193
      %s195 = sphi 0, %s193
      %s196 = sphi 0, %s195
      %s210 = sphi 0, %s196
      %s214 = sphi 0, %s214
      %s216 = sphi 0, %s214
      %s217 = sphi 0, %s216
      %s231 = sphi 0, %s217
      %s237 = sphi 0, %s239
      %s240 = sphi 0, %s237
      %s241 = sphi 0, %s240
      %s257 = sphi 0, %s241
    $region4: #{tpu_custom_call.1} parent=1 // loop_header_branch
      %20 = sbr.rel (%p18) target = $region8
    $region5: #{tpu_custom_call.1} parent=1 // loop_body
      %s22 = ssub.s32 %s17, 1
      %s23 = ssub.s32 %s17, 2
      %s30 = sadd.s32 1, %s25
      %p31 = scmp.ge.s32.totalorder %s30, 1
      %s32 = scalar_select %p31, 0, %s30
      %s33 = sadd.s32 1, %s24
      %s34 = scalar_select %p31, %s33, %s24
      %p35 = scmp.ge.s32.totalorder %s34, 2
      %s36 = scalar_select %p35, 0, %s34
      %s37 = ssub.s32 %s24, %s36
      %p38 = scmp.eq.s32.totalorder %s37, 0
      %s40 = sadd.s32 %s39, 1
      %s41 = scalar_select %p38, %s39, %s40
      %p44 = pneg %p38
      %p45 = scmp.eq.s32.totalorder %s17, 1
      %p46 = por %p44, %p45
      %p47 = scmp.ne.s32.totalorder %s39, %s42
      %p48 = scmp.eq.s32.totalorder %s17, 0
      %p49 = por %p47, %p48
      %p50 = scmp.ne.s32.totalorder %s39, %s42
      %p51 = scmp.eq.s32.totalorder %s22, 1
      %p52 = por %p50, %p51
      %p53 = scmp.ne.s32.totalorder %s42, %s43
      %p54 = scmp.eq.s32.totalorder %s22, 0
      %p55 = por %p53, %p54
      %p56 = scmp.ne.s32.totalorder %s42, %s43
      %p57 = scmp.eq.s32.totalorder %s23, 1
      %p58 = por %p56, %p57
      %p60 = scmp.ne.s32.totalorder %s43, %s59
      %p61 = scmp.eq.s32.totalorder %s23, 0
      %p62 = por %p60, %p61
      %s63 = ssub.s32 %s25, %s32
      %p64 = scmp.eq.s32.totalorder %s63, 0
      %s66 = sadd.s32 %s65, 1
      %s67 = scalar_select %p64, %s65, %s66
      %p70 = pneg %p64
      %p71 = scmp.eq.s32.totalorder %s17, 1
      %p72 = por %p70, %p71
      %p73 = scmp.ne.s32.totalorder %s65, %s68
      %p74 = scmp.eq.s32.totalorder %s17, 0
      %p75 = por %p73, %p74
      %p76 = scmp.ne.s32.totalorder %s65, %s68
      %p77 = scmp.eq.s32.totalorder %s22, 1
      %p78 = por %p76, %p77
      %p79 = scmp.ne.s32.totalorder %s68, %s69
      %p80 = scmp.eq.s32.totalorder %s22, 0
      %p81 = por %p79, %p80
      %p82 = scmp.ne.s32.totalorder %s68, %s69
      %p83 = scmp.eq.s32.totalorder %s23, 1
      %p84 = por %p82, %p83
      %p86 = scmp.ne.s32.totalorder %s69, %s85
      %p87 = scmp.eq.s32.totalorder %s23, 0
      %p88 = por %p86, %p87
      %s89 = ssub.s32 %s25, %s32
      %p90 = scmp.eq.s32.totalorder %s89, 0
      %s92 = sadd.s32 %s91, 1
      %s93 = scalar_select %p90, %s91, %s92
      %p96 = pneg %p90
      %p97 = scmp.eq.s32.totalorder %s17, 1
      %p98 = por %p96, %p97
      %p99 = scmp.ne.s32.totalorder %s91, %s94
      %p100 = scmp.eq.s32.totalorder %s17, 0
      %p101 = por %p99, %p100
      %p102 = scmp.ne.s32.totalorder %s91, %s94
      %p103 = scmp.eq.s32.totalorder %s22, 1
      %p104 = por %p102, %p103
      %p105 = scmp.ne.s32.totalorder %s94, %s95
      %p106 = scmp.eq.s32.totalorder %s22, 0
      %p107 = por %p105, %p106
      %p108 = scmp.ne.s32.totalorder %s94, %s95
      %p109 = scmp.eq.s32.totalorder %s23, 1
      %p110 = por %p108, %p109
      %p112 = scmp.ne.s32.totalorder %s95, %s111
      %p113 = scmp.eq.s32.totalorder %s23, 0
      %p114 = por %p112, %p113
      %s115 = ssub.s32 %s25, %s32
      %p116 = scmp.eq.s32.totalorder %s115, 0
      %s118 = sadd.s32 %s117, 1
      %s119 = scalar_select %p116, %s117, %s118
      %p122 = pneg %p116
      %p123 = scmp.eq.s32.totalorder %s17, 1
      %p124 = por %p122, %p123
      %p125 = scmp.ne.s32.totalorder %s117, %s120
      %p126 = scmp.eq.s32.totalorder %s17, 0
      %p127 = por %p125, %p126
      %p128 = scmp.ne.s32.totalorder %s117, %s120
      %p129 = scmp.eq.s32.totalorder %s22, 1
      %p130 = por %p128, %p129
      %p131 = scmp.ne.s32.totalorder %s120, %s121
      %p132 = scmp.eq.s32.totalorder %s22, 0
      %p133 = por %p131, %p132
      %p134 = scmp.ne.s32.totalorder %s120, %s121
      %p135 = scmp.eq.s32.totalorder %s23, 1
      %p136 = por %p134, %p135
      %p138 = scmp.ne.s32.totalorder %s121, %s137
      %p139 = scmp.eq.s32.totalorder %s23, 0
      %p140 = por %p138, %p139
      %s141 = ssub.s32 %s25, %s32
      %p142 = scmp.eq.s32.totalorder %s141, 0
      %s144 = sadd.s32 %s143, 1
      %s145 = scalar_select %p142, %s143, %s144
      %p148 = pneg %p142
      %p149 = scmp.eq.s32.totalorder %s17, 1
      %p150 = por %p148, %p149
      %p151 = scmp.ne.s32.totalorder %s143, %s146
      %p152 = scmp.eq.s32.totalorder %s17, 0
      %p153 = por %p151, %p152
      %p154 = scmp.ne.s32.totalorder %s143, %s146
      %p155 = scmp.eq.s32.totalorder %s22, 1
      %p156 = por %p154, %p155
      %p157 = scmp.ne.s32.totalorder %s146, %s147
      %p158 = scmp.eq.s32.totalorder %s22, 0
      %p159 = por %p157, %p158
      %p160 = scmp.ne.s32.totalorder %s146, %s147
      %p161 = scmp.eq.s32.totalorder %s23, 1
      %p162 = por %p160, %p161
      %p164 = scmp.ne.s32.totalorder %s147, %s163
      %p165 = scmp.eq.s32.totalorder %s23, 0
      %p166 = por %p164, %p165
      %s167 = ssub.s32 %s25, %s32
      %p168 = scmp.eq.s32.totalorder %s167, 0
      %s170 = sadd.s32 %s169, 1
      %s171 = scalar_select %p168, %s169, %s170
      %p174 = pneg %p168
      %p175 = scmp.eq.s32.totalorder %s17, 1
      %p176 = por %p174, %p175
      %p177 = scmp.ne.s32.totalorder %s169, %s172
      %p178 = scmp.eq.s32.totalorder %s17, 0
      %p179 = por %p177, %p178
      %p180 = scmp.ne.s32.totalorder %s169, %s172
      %p181 = scmp.eq.s32.totalorder %s22, 1
      %p182 = por %p180, %p181
      %p183 = scmp.ne.s32.totalorder %s172, %s173
      %p184 = scmp.eq.s32.totalorder %s22, 0
      %p185 = por %p183, %p184
      %p186 = scmp.ne.s32.totalorder %s172, %s173
      %p187 = scmp.eq.s32.totalorder %s23, 1
      %p188 = por %p186, %p187
      %p190 = scmp.ne.s32.totalorder %s173, %s189
      %p191 = scmp.eq.s32.totalorder %s23, 0
      %p192 = por %p190, %p191
      %s194 = sadd.s32 %s193, 1
      %p197 = scmp.eq.s32.totalorder %s17, 1
      %p198 = scmp.ne.s32.totalorder %s193, %s195
      %p199 = scmp.eq.s32.totalorder %s17, 0
      %p200 = por %p198, %p199
      %p201 = scmp.ne.s32.totalorder %s193, %s195
      %p202 = scmp.eq.s32.totalorder %s22, 1
      %p203 = por %p201, %p202
      %p204 = scmp.ne.s32.totalorder %s195, %s196
      %p205 = scmp.eq.s32.totalorder %s22, 0
      %p206 = por %p204, %p205
      %p207 = scmp.ne.s32.totalorder %s195, %s196
      %p208 = scmp.eq.s32.totalorder %s23, 1
      %p209 = por %p207, %p208
      %p211 = scmp.ne.s32.totalorder %s196, %s210
      %p212 = scmp.eq.s32.totalorder %s23, 0
      %p213 = por %p211, %p212
      %s215 = sadd.s32 %s214, 1
      %p218 = scmp.eq.s32.totalorder %s17, 1
      %p219 = scmp.ne.s32.totalorder %s214, %s216
      %p220 = scmp.eq.s32.totalorder %s17, 0
      %p221 = por %p219, %p220
      %p222 = scmp.ne.s32.totalorder %s214, %s216
      %p223 = scmp.eq.s32.totalorder %s22, 1
      %p224 = por %p222, %p223
      %p225 = scmp.ne.s32.totalorder %s216, %s217
      %p226 = scmp.eq.s32.totalorder %s22, 0
      %p227 = por %p225, %p226
      %p228 = scmp.ne.s32.totalorder %s216, %s217
      %p229 = scmp.eq.s32.totalorder %s23, 1
      %p230 = por %p228, %p229
      %p232 = scmp.ne.s32.totalorder %s217, %s231
      %p233 = scmp.eq.s32.totalorder %s23, 0
      %p234 = por %p232, %p233
      %s235 = ssub.s32 %s24, %s36
      %p236 = scmp.eq.s32.totalorder %s235, 0
      %s238 = sadd.s32 %s237, 1
      %s239 = scalar_select %p236, %s237, %s238
      %p242 = pneg %p236
      %p243 = scmp.eq.s32.totalorder %s17, 1
      %p244 = por %p242, %p243
      %p245 = scmp.ne.s32.totalorder %s237, %s240
      %p246 = scmp.eq.s32.totalorder %s17, 0
      %p247 = por %p245, %p246
      %p248 = scmp.ne.s32.totalorder %s237, %s240
      %p249 = scmp.eq.s32.totalorder %s22, 1
      %p250 = por %p248, %p249
      %p251 = scmp.ne.s32.totalorder %s240, %s241
      %p252 = scmp.eq.s32.totalorder %s22, 0
      %p253 = por %p251, %p252
      %p254 = scmp.ne.s32.totalorder %s240, %s241
      %p255 = scmp.eq.s32.totalorder %s23, 1
      %p256 = por %p254, %p255
      %p258 = scmp.ne.s32.totalorder %s241, %s257
      %p259 = scmp.eq.s32.totalorder %s23, 0
      %p260 = por %p258, %p259
      %p261 = scmp.le.s32.totalorder 1, %s17
      %p262 = scmp.lt.s32.totalorder %s17, 3
      %p263 = pnand %p261, %p262
      %p264 = pneg %p263
      // Predicated region
      $region9: #{tpu_custom_call.1} parent=5 // pred_check
        _
      $region10: #{tpu_custom_call.1} parent=5 // pred_check_branch
        %266 = sbr.rel (%p263) target = $region12
      $region11: #{tpu_custom_call.1} parent=5 // pred_region
        %s267 = ssub.s32 %s17, 1
        // Predicated region
        $region13: #{tpu_custom_call.1} parent=11 // pred_check
          %p268 = pneg %p81
        $region14: #{tpu_custom_call.1} parent=11 // pred_check_branch
          %270 = sbr.rel (%p268) target = $region16
        $region15: #{tpu_custom_call.1} parent=11 // pred_region
          %s271 = smul.u32 2, %s27
          %p272 = scmp.lt.s32.totalorder %s271, 1
          %s273 = scalar_select %p272, %s271, 1
          %s274 = smul.addr %s273, 4
          %s275 = smul.addr %s274, 4
          %s276 = scalar_lea.vmem %s1, %s275
          %s277 = smul.u32 2, %s27
        $region16: #{tpu_custom_call.1} parent=11 // pred_fallthru
          _
        // Predicated region
        $region17: #{tpu_custom_call.1} parent=11 // pred_check
          %p278 = pneg %p107
        $region18: #{tpu_custom_call.1} parent=11 // pred_check_branch
          %280 = sbr.rel (%p278) target = $region20
        $region19: #{tpu_custom_call.1} parent=11 // pred_region
          %s281 = smul.u32 2, %s27
          %p282 = scmp.lt.s32.totalorder %s281, 1
          %s283 = scalar_select %p282, %s281, 1
          %s284 = smul.addr %s283, 4
          %s285 = smul.addr %s284, 4
          %s286 = scalar_lea.vmem %s2, %s285
          %s287 = smul.u32 2, %s27
        $region20: #{tpu_custom_call.1} parent=11 // pred_fallthru
          _
        // Predicated region
        $region21: #{tpu_custom_call.1} parent=11 // pred_check
          %p288 = pneg %p133
        $region22: #{tpu_custom_call.1} parent=11 // pred_check_branch
          %290 = sbr.rel (%p288) target = $region24
        $region23: #{tpu_custom_call.1} parent=11 // pred_region
          %s291 = smul.u32 2, %s27
          %p292 = scmp.lt.s32.totalorder %s291, 1
          %s293 = scalar_select %p292, %s291, 1
          %s294 = smul.addr %s293, 4
          %s295 = smul.addr %s294, 4
          %s296 = scalar_lea.vmem %s3, %s295
          %s297 = smul.u32 2, %s27
        $region24: #{tpu_custom_call.1} parent=11 // pred_fallthru
          _
        // Predicated region
        $region25: #{tpu_custom_call.1} parent=11 // pred_check
          %p298 = pneg %p159
        $region26: #{tpu_custom_call.1} parent=11 // pred_check_branch
          %300 = sbr.rel (%p298) target = $region28
        $region27: #{tpu_custom_call.1} parent=11 // pred_region
          %s301 = smul.u32 2, %s27
          %p302 = scmp.lt.s32.totalorder %s301, 1
          %s303 = scalar_select %p302, %s301, 1
          %s304 = smul.addr %s303, 16
          %s305 = smul.addr %s304, 4
          %s306 = scalar_lea.vmem %s4, %s305
          %s307 = smul.u32 2, %s27
        $region28: #{tpu_custom_call.1} parent=11 // pred_fallthru
          _
        // Predicated region
        $region29: #{tpu_custom_call.1} parent=11 // pred_check
          %p308 = pneg %p185
        $region30: #{tpu_custom_call.1} parent=11 // pred_check_branch
          %310 = sbr.rel (%p308) target = $region32
        $region31: #{tpu_custom_call.1} parent=11 // pred_region
          %s311 = smul.u32 2, %s27
          %p312 = scmp.lt.s32.totalorder %s311, 1
          %s313 = scalar_select %p312, %s311, 1
          %s314 = smul.addr %s313, 8
          %s315 = scalar_lea.vmem %s5, %s314
          %s316 = smul.u32 2, %s27
        $region32: #{tpu_custom_call.1} parent=11 // pred_fallthru
          _
        // Predicated region
        $region33: #{tpu_custom_call.1} parent=11 // pred_check
          %p317 = pneg %p206
        $region34: #{tpu_custom_call.1} parent=11 // pred_check_branch
          %319 = sbr.rel (%p317) target = $region36
        $region35: #{tpu_custom_call.1} parent=11 // pred_region
          _
        $region36: #{tpu_custom_call.1} parent=11 // pred_fallthru
          _
        // Predicated region
        $region37: #{tpu_custom_call.1} parent=11 // pred_check
          %p320 = pneg %p227
        $region38: #{tpu_custom_call.1} parent=11 // pred_check_branch
          %322 = sbr.rel (%p320) target = $region40
        $region39: #{tpu_custom_call.1} parent=11 // pred_region
          _
        $region40: #{tpu_custom_call.1} parent=11 // pred_fallthru
          _
      $region12: #{tpu_custom_call.1} parent=5 // pred_fallthru
        _
      %p323 = scmp.lt.s32.totalorder %s17, 2
      // Predicated region
      $region41: #{tpu_custom_call.1} parent=5 // pred_check
        %p324 = pneg %p323
      $region42: #{tpu_custom_call.1} parent=5 // pred_check_branch
        %326 = sbr.rel (%p324) target = $region44
      $region43: #{tpu_custom_call.1} parent=5 // pred_region
        // Predicated region
        $region45: #{tpu_custom_call.1} parent=43 // pred_check
          %p327 = pneg %p49
        $region46: #{tpu_custom_call.1} parent=43 // pred_check_branch
          %329 = sbr.rel (%p327) target = $region48
        $region47: #{tpu_custom_call.1} parent=43 // pred_region
          %p330 = scmp.lt.s32.totalorder %s24, 1
          %s331 = scalar_select %p330, %s24, 1
          %s332 = smul.addr %s331, 8
          %s333 = scalar_lea.vmem %s0, %s332
        $region48: #{tpu_custom_call.1} parent=43 // pred_fallthru
          _
      $region44: #{tpu_custom_call.1} parent=5 // pred_fallthru
        _
      %p334 = scmp.le.s32.totalorder 1, %s17
      %p335 = scmp.lt.s32.totalorder %s17, 3
      %p336 = pnand %p334, %p335
      %p337 = pneg %p336
      // Predicated region
      $region49: #{tpu_custom_call.1} parent=5 // pred_check
        _
      $region50: #{tpu_custom_call.1} parent=5 // pred_check_branch
        %339 = sbr.rel (%p336) target = $region52
      $region51: #{tpu_custom_call.1} parent=5 // pred_region
        %s340 = ssub.s32 %s17, 1
        %p341 = scmp.lt.s32.totalorder %s26, 1
        %s342 = scalar_select %p341, %s26, 1
        %s343 = smul.addr %s342, 8
        %s344 = scalar_lea.vmem %s0, %s343
        %p345 = pneg %p55
        %p346 = pneg %p52
        %s347 = smul.u32 2, %s27
        %p348 = scmp.lt.s32.totalorder %s347, 1
        %s349 = scalar_select %p348, %s347, 1
        %s350 = smul.addr %s349, 4
        %s351 = smul.addr %s350, 4
        %s352 = scalar_lea.vmem %s1, %s351
        %p353 = pneg %p81
        %p354 = pneg %p78
        %s355 = smul.u32 2, %s27
        %p356 = scmp.lt.s32.totalorder %s355, 1
        %s357 = scalar_select %p356, %s355, 1
        %s358 = smul.addr %s357, 4
        %s359 = smul.addr %s358, 4
        %s360 = scalar_lea.vmem %s2, %s359
        %p361 = pneg %p107
        %p362 = pneg %p104
        %s363 = smul.u32 2, %s27
        %p364 = scmp.lt.s32.totalorder %s363, 1
        %s365 = scalar_select %p364, %s363, 1
        %s366 = smul.addr %s365, 4
        %s367 = smul.addr %s366, 4
        %s368 = scalar_lea.vmem %s3, %s367
        %p369 = pneg %p133
        %p370 = pneg %p130
        %s371 = smul.u32 2, %s27
        %p372 = scmp.lt.s32.totalorder %s371, 1
        %s373 = scalar_select %p372, %s371, 1
        %s374 = smul.addr %s373, 16
        %s375 = smul.addr %s374, 4
        %s376 = scalar_lea.vmem %s4, %s375
        %p377 = pneg %p159
        %p378 = pneg %p156
        %s379 = smul.u32 2, %s27
        %p380 = scmp.lt.s32.totalorder %s379, 1
        %s381 = scalar_select %p380, %s379, 1
        %s382 = smul.addr %s381, 8
        %s383 = scalar_lea.vmem %s5, %s382
        %p384 = pneg %p185
        %p385 = pneg %p182
        %p386 = pneg %p206
        %p387 = pneg %p203
        %p388 = pneg %p227
        %p389 = pneg %p224
        %p390 = pneg %p253
        %p391 = pneg %p250
        %s392 = sand.u32 %s240, 1
        %s393 = scalar_lea.sflag [#allocation4], %s392
        %s394 = sand.u32 %s240, 1
        %s395 = smul.addr %s394, 8
        %s396 = scalar_lea.vmem [#allocation3], %s395
        %p397 = scmp.lt.s32.totalorder %s26, 1
        %s398 = scalar_select %p397, %s26, 1
        %s399 = smul.addr %s398, 8
        %s400 = scalar_lea.vmem %s0, %s399
        %s401 = smul.u32 2, %s27
        %p402 = scmp.lt.s32.totalorder %s401, 1
        %s403 = scalar_select %p402, %s401, 1
        %s404 = smul.addr %s403, 4
        %s405 = smul.addr %s404, 4
        %s406 = scalar_lea.vmem %s1, %s405
        %s407 = smul.u32 2, %s27
        %s408 = smul.u32 2, %s27
        %p409 = scmp.lt.s32.totalorder %s408, 1
        %s410 = scalar_select %p409, %s408, 1
        %s411 = smul.addr %s410, 4
        %s412 = smul.addr %s411, 4
        %s413 = scalar_lea.vmem %s2, %s412
        %s414 = smul.u32 2, %s27
        %s415 = smul.u32 2, %s27
        %p416 = scmp.lt.s32.totalorder %s415, 1
        %s417 = scalar_select %p416, %s415, 1
        %s418 = smul.addr %s417, 4
        %s419 = smul.addr %s418, 4
        %s420 = scalar_lea.vmem %s3, %s419
        %s421 = smul.u32 2, %s27
        %s422 = smul.u32 2, %s27
        %p423 = scmp.lt.s32.totalorder %s422, 1
        %s424 = scalar_select %p423, %s422, 1
        %s425 = smul.addr %s424, 16
        %s426 = smul.addr %s425, 4
        %s427 = scalar_lea.vmem %s4, %s426
        %s428 = smul.u32 2, %s27
        %s429 = smul.u32 2, %s27
        %p430 = scmp.lt.s32.totalorder %s429, 1
        %s431 = scalar_select %p430, %s429, 1
        %s432 = smul.addr %s431, 8
        %s433 = scalar_lea.vmem %s5, %s432
        %s434 = smul.u32 2, %s27
        %p436 = scmp.eq.s32.totalorder %s27, 0
        // Predicated region
        $region53: #{tpu_custom_call.1} parent=51 // pred_check
          %p437 = pneg %p436
        $region54: #{tpu_custom_call.1} parent=51 // pred_check_branch
          %439 = sbr.rel (%p437) target = $region56
        $region55: #{tpu_custom_call.1} parent=51 // pred_region
          %v440 = vld [vmem:[%s400] sm:$0xff]
          %vm441 = vcmask 261120
          %442 = vst.msk [vmem:[#allocation2] sm:$0xff] %vm441, %v440
        $region56: #{tpu_custom_call.1} parent=51 // pred_fallthru
          _
        %v443 = vld [vmem:[#allocation2] sm:$0xff]
        %v444 = vld [vmem:[%s433] sm:$0xff]
        %v445 = vpack.c.bf16 %v443, %v443
        %v446 = vld [vmem:[%s406] sm:$0xf]
        %v447 = vld [vmem:[%s406 + $0x4] sm:$0xf]
        %v448 = vld [vmem:[%s406 + $0x8] sm:$0xf]
        %v449 = vld [vmem:[%s406 + $0xc] sm:$0xf]
        %v450 = vlaneseq
        %v451 = vshrl.u32 %v450, 7
        %v452 = vsub.s32 0, %v451
        %v453 = vrot.slane %v444, %v452
        %v458 = vunpack.c.l.b16 %v446
        %v459 = vunpack.c.l.b16 %v447
        %v460 = vunpack.c.l.b16 %v448
        %v461 = vunpack.c.l.b16 %v449
        %v462 = vpack.c.b16 %v459, %v458
        %v463 = vpack.c.b16 %v461, %v460
        %vm466 = vcmask 261120
        %v468 = vsel %vm466, %v445, 0
        %470 = vmatprep.subr.bf16.mxu0 0
        %471 = vmatpush1.bf16.msra.mxu0 0
        %472 = vmatprep.subr.bf16.mxu0 0
        %473 = vmatpush1.bf16.msra.mxu0 0
        %474 = vmatprep.subr.bf16.mxu0 0
        %475 = vmatpush1.bf16.msra.mxu0 0
        %476 = vmatprep.subr.bf16.mxu0 0
        %477 = vmatpush1.bf16.msra.mxu0 0
        %478 = vmatprep.subr.bf16.mxu0 0
        %479 = vmatpush1.bf16.msra.mxu0 0
        %480 = vmatprep.subr.bf16.mxu0 0
        %481 = vmatpush1.bf16.msra.mxu0 0
        %482 = vmatprep.subr.bf16.mxu0 0
        %483 = vmatpush1.bf16.msra.mxu0 %v463
        %484 = vmatprep.subr.bf16.mxu0 0
        %485 = vmatpush1.bf16.msra.mxu0 %v462
        %486 = vmatprep.subr.bf16.mxu0 0
        %487 = vmatpush2.bf16.msra.mxu0 0
        %488 = vmatprep.subr.bf16.mxu0 0
        %489 = vmatpush2.bf16.msra.mxu0 0
        %490 = vmatprep.subr.bf16.mxu0 0
        %491 = vmatpush2.bf16.msra.mxu0 0
        %492 = vmatprep.subr.bf16.mxu0 0
        %493 = vmatpush2.bf16.msra.mxu0 0
        %494 = vmatprep.subr.bf16.mxu0 0
        %495 = vmatpush2.bf16.msra.mxu0 0
        %496 = vmatprep.subr.bf16.mxu0 0
        %497 = vmatpush2.bf16.msra.mxu0 0
        %498 = vmatprep.subr.bf16.mxu0 0
        %499 = vmatpush2.bf16.msra.mxu0 0
        %500 = vmatprep.subr.bf16.mxu0 0
        %501 = vmatpush2.bf16.msra.mxu0 0
        %502 = vmatprep.mubr.bf16.mxu0 0
        %503 = vmatmul.mubr.bf16.gmra.mxu0 %v468
        %v504 = vpop.f32.mrf.mxu0
        %v505 = vadd.f32 %v453, %v504
        %v506 = vpop.f32.mrf.mxu0
        %v507 = vpop.f32.mrf.mxu0
        %v508 = vpop.f32.mrf.mxu0
        %509 = vdwg.mxu0
        %v510 = vld [vmem:[%s413] sm:$0xf]
        %v511 = vld [vmem:[%s413 + $0x4] sm:$0xf]
        %v512 = vld [vmem:[%s413 + $0x8] sm:$0xf]
        %v513 = vld [vmem:[%s413 + $0xc] sm:$0xf]
        %515 = vrot.lane.b32.xlu0 %v505, 104
        %v516 = vpop.permute.xlu0 %515
        %517 = vrot.lane.b32.xlu0 %v505, 80
        %v518 = vpop.permute.xlu0 %517
        %519 = vrot.lane.b32.xlu0 %v505, 56
        %v520 = vpop.permute.xlu0 %519
        %521 = vrot.lane.b32.xlu0 %v505, 120
        %v522 = vpop.permute.xlu0 %521
        %vm523 = vcmask 64512
        %v524 = vsel %vm523, %v505, 0
        %v526 = vsel %vm523, %v522, 0
        %528 = vmatprep.subr.mxu0 0.0
        %529 = vmatpush1.xpose.msra.mxu0 0.0
        %530 = vmatprep.subr.mxu0 0.0
        %531 = vmatpush1.xpose.msra.mxu0 0.0
        %532 = vmatprep.subr.mxu0 0.0
        %533 = vmatpush1.xpose.msra.mxu0 0.0
        %534 = vmatprep.subr.mxu0 0.0
        %535 = vmatpush1.xpose.msra.mxu0 0.0
        %536 = vmatprep.subr.mxu0 0.0
        %537 = vmatpush1.xpose.msra.mxu0 0.0
        %538 = vmatprep.subr.mxu0 0.0
        %539 = vmatpush1.xpose.msra.mxu0 0.0
        %540 = vmatprep.subr.mxu0 0.0
        %541 = vmatpush1.xpose.msra.mxu0 0.0
        %542 = vmatprep.subr.mxu0 0.0
        %543 = vmatpush1.xpose.msra.mxu0 0.0
        %544 = vmatprep.subr.mxu0 0.0
        %545 = vmatpush1.xpose.msra.mxu0 0.0
        %546 = vmatprep.subr.mxu0 0.0
        %547 = vmatpush1.xpose.msra.mxu0 0.0
        %548 = vmatprep.subr.mxu0 0.0
        %549 = vmatpush1.xpose.msra.mxu0 0.0
        %550 = vmatprep.subr.mxu0 0.0
        %551 = vmatpush1.xpose.msra.mxu0 0.0
        %552 = vmatprep.subr.mxu0 0.0
        %553 = vmatpush1.xpose.msra.mxu0 0.0
        %554 = vmatprep.subr.mxu0 0.0
        %555 = vmatpush1.xpose.msra.mxu0 0.0
        %556 = vmatprep.subr.mxu0 0.0
        %557 = vmatpush1.xpose.msra.mxu0 0.0
        %558 = vmatprep.subr.mxu0 0.0
        %559 = vmatpush1.xpose.msra.mxu0 %v526
        %560 = vmatprep.subr.mxu0 0.0
        %561 = vmatpush2.xpose.msra.mxu0 0.0
        %562 = vmatprep.subr.mxu0 0.0
        %563 = vmatpush2.xpose.msra.mxu0 0.0
        %564 = vmatprep.subr.mxu0 0.0
        %565 = vmatpush2.xpose.msra.mxu0 0.0
        %566 = vmatprep.subr.mxu0 0.0
        %567 = vmatpush2.xpose.msra.mxu0 0.0
        %568 = vmatprep.subr.mxu0 0.0
        %569 = vmatpush2.xpose.msra.mxu0 0.0
        %570 = vmatprep.subr.mxu0 0.0
        %571 = vmatpush2.xpose.msra.mxu0 0.0
        %572 = vmatprep.subr.mxu0 0.0
        %573 = vmatpush2.xpose.msra.mxu0 0.0
        %574 = vmatprep.subr.mxu0 0.0
        %575 = vmatpush2.xpose.msra.mxu0 0.0
        %576 = vmatprep.subr.mxu0 0.0
        %577 = vmatpush2.xpose.msra.mxu0 0.0
        %578 = vmatprep.subr.mxu0 0.0
        %579 = vmatpush2.xpose.msra.mxu0 0.0
        %580 = vmatprep.subr.mxu0 0.0
        %581 = vmatpush2.xpose.msra.mxu0 0.0
        %582 = vmatprep.subr.mxu0 0.0
        %583 = vmatpush2.xpose.msra.mxu0 0.0
        %584 = vmatprep.subr.mxu0 0.0
        %585 = vmatpush2.xpose.msra.mxu0 0.0
        %586 = vmatprep.subr.mxu0 0.0
        %587 = vmatpush2.xpose.msra.mxu0 0.0
        %588 = vmatprep.subr.mxu0 0.0
        %589 = vmatpush2.xpose.msra.mxu0 0.0
        %590 = vmatprep.subr.mxu0 0.0
        %591 = vmatpush2.xpose.msra.mxu0 0.0
        %592 = vmatprep.mubr.f32.mxu0 0.0
        %593 = vmatmul.mubr.f32.gmra.mxu0 %v524
        %v594 = vpop.f32.mrf.mxu0
        %v595 = vadd.f32 0.0, %v594
        %v596 = vpop.f32.mrf.mxu0
        %597 = vdwg.mxu0
        %598 = vrot.lane.b32.xlu0 %v516, 120
        %v599 = vpop.permute.xlu0 %598
        %v600 = vsel %vm523, %v516, 0
        %v602 = vsel %vm523, %v599, 0
        %604 = vmatprep.subr.mxu0 0.0
        %605 = vmatpush1.xpose.msra.mxu0 0.0
        %606 = vmatprep.subr.mxu0 0.0
        %607 = vmatpush1.xpose.msra.mxu0 0.0
        %608 = vmatprep.subr.mxu0 0.0
        %609 = vmatpush1.xpose.msra.mxu0 0.0
        %610 = vmatprep.subr.mxu0 0.0
        %611 = vmatpush1.xpose.msra.mxu0 0.0
        %612 = vmatprep.subr.mxu0 0.0
        %613 = vmatpush1.xpose.msra.mxu0 0.0
        %614 = vmatprep.subr.mxu0 0.0
        %615 = vmatpush1.xpose.msra.mxu0 0.0
        %616 = vmatprep.subr.mxu0 0.0
        %617 = vmatpush1.xpose.msra.mxu0 0.0
        %618 = vmatprep.subr.mxu0 0.0
        %619 = vmatpush1.xpose.msra.mxu0 0.0
        %620 = vmatprep.subr.mxu0 0.0
        %621 = vmatpush1.xpose.msra.mxu0 0.0
        %622 = vmatprep.subr.mxu0 0.0
        %623 = vmatpush1.xpose.msra.mxu0 0.0
        %624 = vmatprep.subr.mxu0 0.0
        %625 = vmatpush1.xpose.msra.mxu0 0.0
        %626 = vmatprep.subr.mxu0 0.0
        %627 = vmatpush1.xpose.msra.mxu0 0.0
        %628 = vmatprep.subr.mxu0 0.0
        %629 = vmatpush1.xpose.msra.mxu0 0.0
        %630 = vmatprep.subr.mxu0 0.0
        %631 = vmatpush1.xpose.msra.mxu0 0.0
        %632 = vmatprep.subr.mxu0 0.0
        %633 = vmatpush1.xpose.msra.mxu0 0.0
        %634 = vmatprep.subr.mxu0 0.0
        %635 = vmatpush1.xpose.msra.mxu0 %v602
        %636 = vmatprep.subr.mxu0 0.0
        %637 = vmatpush2.xpose.msra.mxu0 0.0
        %638 = vmatprep.subr.mxu0 0.0
        %639 = vmatpush2.xpose.msra.mxu0 0.0
        %640 = vmatprep.subr.mxu0 0.0
        %641 = vmatpush2.xpose.msra.mxu0 0.0
        %642 = vmatprep.subr.mxu0 0.0
        %643 = vmatpush2.xpose.msra.mxu0 0.0
        %644 = vmatprep.subr.mxu0 0.0
        %645 = vmatpush2.xpose.msra.mxu0 0.0
        %646 = vmatprep.subr.mxu0 0.0
        %647 = vmatpush2.xpose.msra.mxu0 0.0
        %648 = vmatprep.subr.mxu0 0.0
        %649 = vmatpush2.xpose.msra.mxu0 0.0
        %650 = vmatprep.subr.mxu0 0.0
        %651 = vmatpush2.xpose.msra.mxu0 0.0
        %652 = vmatprep.subr.mxu0 0.0
        %653 = vmatpush2.xpose.msra.mxu0 0.0
        %654 = vmatprep.subr.mxu0 0.0
        %655 = vmatpush2.xpose.msra.mxu0 0.0
        %656 = vmatprep.subr.mxu0 0.0
        %657 = vmatpush2.xpose.msra.mxu0 0.0
        %658 = vmatprep.subr.mxu0 0.0
        %659 = vmatpush2.xpose.msra.mxu0 0.0
        %660 = vmatprep.subr.mxu0 0.0
        %661 = vmatpush2.xpose.msra.mxu0 0.0
        %662 = vmatprep.subr.mxu0 0.0
        %663 = vmatpush2.xpose.msra.mxu0 0.0
        %664 = vmatprep.subr.mxu0 0.0
        %665 = vmatpush2.xpose.msra.mxu0 0.0
        %666 = vmatprep.subr.mxu0 0.0
        %667 = vmatpush2.xpose.msra.mxu0 0.0
        %668 = vmatprep.mubr.f32.mxu0 0.0
        %669 = vmatmul.mubr.f32.gmra.mxu0 %v600
        %v670 = vpop.f32.mrf.mxu0
        %v671 = vadd.f32 0.0, %v670
        %v672 = vpop.f32.mrf.mxu0
        %673 = vdwg.mxu0
        %674 = vrot.lane.b32.xlu0 %v518, 120
        %v675 = vpop.permute.xlu0 %674
        %v676 = vsel %vm523, %v518, 0
        %v678 = vsel %vm523, %v675, 0
        %680 = vmatprep.subr.mxu0 0.0
        %681 = vmatpush1.xpose.msra.mxu0 0.0
        %682 = vmatprep.subr.mxu0 0.0
        %683 = vmatpush1.xpose.msra.mxu0 0.0
        %684 = vmatprep.subr.mxu0 0.0
        %685 = vmatpush1.xpose.msra.mxu0 0.0
        %686 = vmatprep.subr.mxu0 0.0
        %687 = vmatpush1.xpose.msra.mxu0 0.0
        %688 = vmatprep.subr.mxu0 0.0
        %689 = vmatpush1.xpose.msra.mxu0 0.0
        %690 = vmatprep.subr.mxu0 0.0
        %691 = vmatpush1.xpose.msra.mxu0 0.0
        %692 = vmatprep.subr.mxu0 0.0
        %693 = vmatpush1.xpose.msra.mxu0 0.0
        %694 = vmatprep.subr.mxu0 0.0
        %695 = vmatpush1.xpose.msra.mxu0 0.0
        %696 = vmatprep.subr.mxu0 0.0
        %697 = vmatpush1.xpose.msra.mxu0 0.0
        %698 = vmatprep.subr.mxu0 0.0
        %699 = vmatpush1.xpose.msra.mxu0 0.0
        %700 = vmatprep.subr.mxu0 0.0
        %701 = vmatpush1.xpose.msra.mxu0 0.0
        %702 = vmatprep.subr.mxu0 0.0
        %703 = vmatpush1.xpose.msra.mxu0 0.0
        %704 = vmatprep.subr.mxu0 0.0
        %705 = vmatpush1.xpose.msra.mxu0 0.0
        %706 = vmatprep.subr.mxu0 0.0
        %707 = vmatpush1.xpose.msra.mxu0 0.0
        %708 = vmatprep.subr.mxu0 0.0
        %709 = vmatpush1.xpose.msra.mxu0 0.0
        %710 = vmatprep.subr.mxu0 0.0
        %711 = vmatpush1.xpose.msra.mxu0 %v678
        %712 = vmatprep.subr.mxu0 0.0
        %713 = vmatpush2.xpose.msra.mxu0 0.0
        %714 = vmatprep.subr.mxu0 0.0
        %715 = vmatpush2.xpose.msra.mxu0 0.0
        %716 = vmatprep.subr.mxu0 0.0
        %717 = vmatpush2.xpose.msra.mxu0 0.0
        %718 = vmatprep.subr.mxu0 0.0
        %719 = vmatpush2.xpose.msra.mxu0 0.0
        %720 = vmatprep.subr.mxu0 0.0
        %721 = vmatpush2.xpose.msra.mxu0 0.0
        %722 = vmatprep.subr.mxu0 0.0
        %723 = vmatpush2.xpose.msra.mxu0 0.0
        %724 = vmatprep.subr.mxu0 0.0
        %725 = vmatpush2.xpose.msra.mxu0 0.0
        %726 = vmatprep.subr.mxu0 0.0
        %727 = vmatpush2.xpose.msra.mxu0 0.0
        %728 = vmatprep.subr.mxu0 0.0
        %729 = vmatpush2.xpose.msra.mxu0 0.0
        %730 = vmatprep.subr.mxu0 0.0
        %731 = vmatpush2.xpose.msra.mxu0 0.0
        %732 = vmatprep.subr.mxu0 0.0
        %733 = vmatpush2.xpose.msra.mxu0 0.0
        %734 = vmatprep.subr.mxu0 0.0
        %735 = vmatpush2.xpose.msra.mxu0 0.0
        %736 = vmatprep.subr.mxu0 0.0
        %737 = vmatpush2.xpose.msra.mxu0 0.0
        %738 = vmatprep.subr.mxu0 0.0
        %739 = vmatpush2.xpose.msra.mxu0 0.0
        %740 = vmatprep.subr.mxu0 0.0
        %741 = vmatpush2.xpose.msra.mxu0 0.0
        %742 = vmatprep.subr.mxu0 0.0
        %743 = vmatpush2.xpose.msra.mxu0 0.0
        %744 = vmatprep.mubr.f32.mxu0 0.0
        %745 = vmatmul.mubr.f32.gmra.mxu0 %v676
        %v746 = vpop.f32.mrf.mxu0
        %v747 = vadd.f32 0.0, %v746
        %v748 = vpop.f32.mrf.mxu0
        %749 = vdwg.mxu0
        %750 = vrot.lane.b32.xlu0 %v520, 120
        %v751 = vpop.permute.xlu0 %750
        %v752 = vsel %vm523, %v520, 0
        %v754 = vsel %vm523, %v751, 0
        %756 = vmatprep.subr.mxu0 0.0
        %757 = vmatpush1.xpose.msra.mxu0 0.0
        %758 = vmatprep.subr.mxu0 0.0
        %759 = vmatpush1.xpose.msra.mxu0 0.0
        %760 = vmatprep.subr.mxu0 0.0
        %761 = vmatpush1.xpose.msra.mxu0 0.0
        %762 = vmatprep.subr.mxu0 0.0
        %763 = vmatpush1.xpose.msra.mxu0 0.0
        %764 = vmatprep.subr.mxu0 0.0
        %765 = vmatpush1.xpose.msra.mxu0 0.0
        %766 = vmatprep.subr.mxu0 0.0
        %767 = vmatpush1.xpose.msra.mxu0 0.0
        %768 = vmatprep.subr.mxu0 0.0
        %769 = vmatpush1.xpose.msra.mxu0 0.0
        %770 = vmatprep.subr.mxu0 0.0
        %771 = vmatpush1.xpose.msra.mxu0 0.0
        %772 = vmatprep.subr.mxu0 0.0
        %773 = vmatpush1.xpose.msra.mxu0 0.0
        %774 = vmatprep.subr.mxu0 0.0
        %775 = vmatpush1.xpose.msra.mxu0 0.0
        %776 = vmatprep.subr.mxu0 0.0
        %777 = vmatpush1.xpose.msra.mxu0 0.0
        %778 = vmatprep.subr.mxu0 0.0
        %779 = vmatpush1.xpose.msra.mxu0 0.0
        %780 = vmatprep.subr.mxu0 0.0
        %781 = vmatpush1.xpose.msra.mxu0 0.0
        %782 = vmatprep.subr.mxu0 0.0
        %783 = vmatpush1.xpose.msra.mxu0 0.0
        %784 = vmatprep.subr.mxu0 0.0
        %785 = vmatpush1.xpose.msra.mxu0 0.0
        %786 = vmatprep.subr.mxu0 0.0
        %787 = vmatpush1.xpose.msra.mxu0 %v754
        %788 = vmatprep.subr.mxu0 0.0
        %789 = vmatpush2.xpose.msra.mxu0 0.0
        %790 = vmatprep.subr.mxu0 0.0
        %791 = vmatpush2.xpose.msra.mxu0 0.0
        %792 = vmatprep.subr.mxu0 0.0
        %793 = vmatpush2.xpose.msra.mxu0 0.0
        %794 = vmatprep.subr.mxu0 0.0
        %795 = vmatpush2.xpose.msra.mxu0 0.0
        %796 = vmatprep.subr.mxu0 0.0
        %797 = vmatpush2.xpose.msra.mxu0 0.0
        %798 = vmatprep.subr.mxu0 0.0
        %799 = vmatpush2.xpose.msra.mxu0 0.0
        %800 = vmatprep.subr.mxu0 0.0
        %801 = vmatpush2.xpose.msra.mxu0 0.0
        %802 = vmatprep.subr.mxu0 0.0
        %803 = vmatpush2.xpose.msra.mxu0 0.0
        %804 = vmatprep.subr.mxu0 0.0
        %805 = vmatpush2.xpose.msra.mxu0 0.0
        %806 = vmatprep.subr.mxu0 0.0
        %807 = vmatpush2.xpose.msra.mxu0 0.0
        %808 = vmatprep.subr.mxu0 0.0
        %809 = vmatpush2.xpose.msra.mxu0 0.0
        %810 = vmatprep.subr.mxu0 0.0
        %811 = vmatpush2.xpose.msra.mxu0 0.0
        %812 = vmatprep.subr.mxu0 0.0
        %813 = vmatpush2.xpose.msra.mxu0 0.0
        %814 = vmatprep.subr.mxu0 0.0
        %815 = vmatpush2.xpose.msra.mxu0 0.0
        %816 = vmatprep.subr.mxu0 0.0
        %817 = vmatpush2.xpose.msra.mxu0 0.0
        %818 = vmatprep.subr.mxu0 0.0
        %819 = vmatpush2.xpose.msra.mxu0 0.0
        %820 = vmatprep.mubr.f32.mxu0 0.0
        %821 = vmatmul.mubr.f32.gmra.mxu0 %v752
        %v822 = vpop.f32.mrf.mxu0
        %v823 = vadd.f32 0.0, %v822
        %v824 = vpop.f32.mrf.mxu0
        %825 = vdwg.mxu0
        %v826 = vsel %vm523, %v595, -inf
        %827 = vmax.xlane.f32.xlu0 %v826
        %v828 = vpop.xlane.xlu0 %827
        %v829 = vsel %vm523, %v671, -inf
        %830 = vmax.xlane.f32.xlu0 %v829
        %v831 = vpop.xlane.xlu0 %830
        %v832 = vsel %vm523, %v747, -inf
        %833 = vmax.xlane.f32.xlu0 %v832
        %v834 = vpop.xlane.xlu0 %833
        %v835 = vsel %vm523, %v823, -inf
        %836 = vmax.xlane.f32.xlu0 %v835
        %v837 = vpop.xlane.xlu0 %836
        %v838 = vsub.f32 %v595, %v828
        %v839 = vsub.f32 %v671, %v831
        %v840 = vsub.f32 %v747, %v834
        %v841 = vsub.f32 %v823, %v837
        %v842 = vmul.f32 %v838, 1.442695
        %v843 = vpow.pop %v842
        %v844 = vmul.f32 %v839, 1.442695
        %v845 = vpow.pop %v844
        %v846 = vmul.f32 %v840, 1.442695
        %v847 = vpow.pop %v846
        %v848 = vmul.f32 %v841, 1.442695
        %v849 = vpow.pop %v848
        %v850 = vsel %vm523, %v843, 0.0
        %851 = vadd.xlane.f32.xlu0 %v850
        %v852 = vpop.xlane.xlu0 %851
        %v853 = vsel %vm523, %v845, 0.0
        %854 = vadd.xlane.f32.xlu0 %v853
        %v855 = vpop.xlane.xlu0 %854
        %v856 = vsel %vm523, %v847, 0.0
        %857 = vadd.xlane.f32.xlu0 %v856
        %v858 = vpop.xlane.xlu0 %857
        %v859 = vsel %vm523, %v849, 0.0
        %860 = vadd.xlane.f32.xlu0 %v859
        %v861 = vpop.xlane.xlu0 %860
        %v862 = vrcp.pop %v852
        %v863 = vrcp.pop %v855
        %v864 = vrcp.pop %v858
        %v865 = vrcp.pop %v861
        %v866 = vmul.f32 %v843, %v862
        %v867 = vmul.f32 %v845, %v863
        %v868 = vmul.f32 %v847, %v864
        %v869 = vmul.f32 %v849, %v865
        %870 = vrot.lane.b32.xlu0 %v505, 112
        %v871 = vpop.permute.xlu0 %870
        %v874 = vsel %vm523, %v866, 0
        %876 = vmatprep.subr.mxu0 0.0
        %877 = vmatpush1.msra.mxu0 0.0
        %878 = vmatprep.subr.mxu0 0.0
        %879 = vmatpush1.msra.mxu0 0.0
        %880 = vmatprep.subr.mxu0 0.0
        %881 = vmatpush1.msra.mxu0 0.0
        %882 = vmatprep.subr.mxu0 0.0
        %883 = vmatpush1.msra.mxu0 0.0
        %884 = vmatprep.subr.mxu0 0.0
        %885 = vmatpush1.msra.mxu0 0.0
        %886 = vmatprep.subr.mxu0 0.0
        %887 = vmatpush1.msra.mxu0 0.0
        %888 = vmatprep.subr.mxu0 0.0
        %889 = vmatpush1.msra.mxu0 0.0
        %890 = vmatprep.subr.mxu0 0.0
        %891 = vmatpush1.msra.mxu0 0.0
        %892 = vmatprep.subr.mxu0 0.0
        %893 = vmatpush1.msra.mxu0 0.0
        %894 = vmatprep.subr.mxu0 0.0
        %895 = vmatpush1.msra.mxu0 0.0
        %896 = vmatprep.subr.mxu0 0.0
        %897 = vmatpush1.msra.mxu0 0.0
        %898 = vmatprep.subr.mxu0 0.0
        %899 = vmatpush1.msra.mxu0 0.0
        %900 = vmatprep.subr.mxu0 0.0
        %901 = vmatpush1.msra.mxu0 0.0
        %902 = vmatprep.subr.mxu0 0.0
        %903 = vmatpush1.msra.mxu0 0.0
        %904 = vmatprep.subr.mxu0 0.0
        %905 = vmatpush1.msra.mxu0 0.0
        %906 = vmatprep.subr.mxu0 0.0
        %907 = vmatpush1.msra.mxu0 %v871
        %908 = vmatprep.subr.mxu0 0.0
        %909 = vmatpush2.msra.mxu0 0.0
        %910 = vmatprep.subr.mxu0 0.0
        %911 = vmatpush2.msra.mxu0 0.0
        %912 = vmatprep.subr.mxu0 0.0
        %913 = vmatpush2.msra.mxu0 0.0
        %914 = vmatprep.subr.mxu0 0.0
        %915 = vmatpush2.msra.mxu0 0.0
        %916 = vmatprep.subr.mxu0 0.0
        %917 = vmatpush2.msra.mxu0 0.0
        %918 = vmatprep.subr.mxu0 0.0
        %919 = vmatpush2.msra.mxu0 0.0
        %920 = vmatprep.subr.mxu0 0.0
        %921 = vmatpush2.msra.mxu0 0.0
        %922 = vmatprep.subr.mxu0 0.0
        %923 = vmatpush2.msra.mxu0 0.0
        %924 = vmatprep.subr.mxu0 0.0
        %925 = vmatpush2.msra.mxu0 0.0
        %926 = vmatprep.subr.mxu0 0.0
        %927 = vmatpush2.msra.mxu0 0.0
        %928 = vmatprep.subr.mxu0 0.0
        %929 = vmatpush2.msra.mxu0 0.0
        %930 = vmatprep.subr.mxu0 0.0
        %931 = vmatpush2.msra.mxu0 0.0
        %932 = vmatprep.subr.mxu0 0.0
        %933 = vmatpush2.msra.mxu0 0.0
        %934 = vmatprep.subr.mxu0 0.0
        %935 = vmatpush2.msra.mxu0 0.0
        %936 = vmatprep.subr.mxu0 0.0
        %937 = vmatpush2.msra.mxu0 0.0
        %938 = vmatprep.subr.mxu0 0.0
        %939 = vmatpush2.msra.mxu0 0.0
        %940 = vmatprep.mubr.f32.mxu0 0.0
        %941 = vmatmul.mubr.f32.gmra.mxu0 %v874
        %v942 = vpop.f32.mrf.mxu0
        %v943 = vadd.f32 0.0, %v942
        %v944 = vpop.f32.mrf.mxu0
        %945 = vdwg.mxu0
        %946 = vrot.lane.b32.xlu0 %v516, 112
        %v947 = vpop.permute.xlu0 %946
        %v950 = vsel %vm523, %v867, 0
        %952 = vmatprep.subr.mxu0 0.0
        %953 = vmatpush1.msra.mxu0 0.0
        %954 = vmatprep.subr.mxu0 0.0
        %955 = vmatpush1.msra.mxu0 0.0
        %956 = vmatprep.subr.mxu0 0.0
        %957 = vmatpush1.msra.mxu0 0.0
        %958 = vmatprep.subr.mxu0 0.0
        %959 = vmatpush1.msra.mxu0 0.0
        %960 = vmatprep.subr.mxu0 0.0
        %961 = vmatpush1.msra.mxu0 0.0
        %962 = vmatprep.subr.mxu0 0.0
        %963 = vmatpush1.msra.mxu0 0.0
        %964 = vmatprep.subr.mxu0 0.0
        %965 = vmatpush1.msra.mxu0 0.0
        %966 = vmatprep.subr.mxu0 0.0
        %967 = vmatpush1.msra.mxu0 0.0
        %968 = vmatprep.subr.mxu0 0.0
        %969 = vmatpush1.msra.mxu0 0.0
        %970 = vmatprep.subr.mxu0 0.0
        %971 = vmatpush1.msra.mxu0 0.0
        %972 = vmatprep.subr.mxu0 0.0
        %973 = vmatpush1.msra.mxu0 0.0
        %974 = vmatprep.subr.mxu0 0.0
        %975 = vmatpush1.msra.mxu0 0.0
        %976 = vmatprep.subr.mxu0 0.0
        %977 = vmatpush1.msra.mxu0 0.0
        %978 = vmatprep.subr.mxu0 0.0
        %979 = vmatpush1.msra.mxu0 0.0
        %980 = vmatprep.subr.mxu0 0.0
        %981 = vmatpush1.msra.mxu0 0.0
        %982 = vmatprep.subr.mxu0 0.0
        %983 = vmatpush1.msra.mxu0 %v947
        %984 = vmatprep.subr.mxu0 0.0
        %985 = vmatpush2.msra.mxu0 0.0
        %986 = vmatprep.subr.mxu0 0.0
        %987 = vmatpush2.msra.mxu0 0.0
        %988 = vmatprep.subr.mxu0 0.0
        %989 = vmatpush2.msra.mxu0 0.0
        %990 = vmatprep.subr.mxu0 0.0
        %991 = vmatpush2.msra.mxu0 0.0
        %992 = vmatprep.subr.mxu0 0.0
        %993 = vmatpush2.msra.mxu0 0.0
        %994 = vmatprep.subr.mxu0 0.0
        %995 = vmatpush2.msra.mxu0 0.0
        %996 = vmatprep.subr.mxu0 0.0
        %997 = vmatpush2.msra.mxu0 0.0
        %998 = vmatprep.subr.mxu0 0.0
        %999 = vmatpush2.msra.mxu0 0.0
        %1000 = vmatprep.subr.mxu0 0.0
        %1001 = vmatpush2.msra.mxu0 0.0
        %1002 = vmatprep.subr.mxu0 0.0
        %1003 = vmatpush2.msra.mxu0 0.0
        %1004 = vmatprep.subr.mxu0 0.0
        %1005 = vmatpush2.msra.mxu0 0.0
        %1006 = vmatprep.subr.mxu0 0.0
        %1007 = vmatpush2.msra.mxu0 0.0
        %1008 = vmatprep.subr.mxu0 0.0
        %1009 = vmatpush2.msra.mxu0 0.0
        %1010 = vmatprep.subr.mxu0 0.0
        %1011 = vmatpush2.msra.mxu0 0.0
        %1012 = vmatprep.subr.mxu0 0.0
        %1013 = vmatpush2.msra.mxu0 0.0
        %1014 = vmatprep.subr.mxu0 0.0
        %1015 = vmatpush2.msra.mxu0 0.0
        %1016 = vmatprep.mubr.f32.mxu0 0.0
        %1017 = vmatmul.mubr.f32.gmra.mxu0 %v950
        %v1018 = vpop.f32.mrf.mxu0
        %v1019 = vadd.f32 0.0, %v1018
        %v1020 = vpop.f32.mrf.mxu0
        %1021 = vdwg.mxu0
        %1022 = vrot.lane.b32.xlu0 %v518, 112
        %v1023 = vpop.permute.xlu0 %1022
        %v1026 = vsel %vm523, %v868, 0
        %1028 = vmatprep.subr.mxu0 0.0
        %1029 = vmatpush1.msra.mxu0 0.0
        %1030 = vmatprep.subr.mxu0 0.0
        %1031 = vmatpush1.msra.mxu0 0.0
        %1032 = vmatprep.subr.mxu0 0.0
        %1033 = vmatpush1.msra.mxu0 0.0
        %1034 = vmatprep.subr.mxu0 0.0
        %1035 = vmatpush1.msra.mxu0 0.0
        %1036 = vmatprep.subr.mxu0 0.0
        %1037 = vmatpush1.msra.mxu0 0.0
        %1038 = vmatprep.subr.mxu0 0.0
        %1039 = vmatpush1.msra.mxu0 0.0
        %1040 = vmatprep.subr.mxu0 0.0
        %1041 = vmatpush1.msra.mxu0 0.0
        %1042 = vmatprep.subr.mxu0 0.0
        %1043 = vmatpush1.msra.mxu0 0.0
        %1044 = vmatprep.subr.mxu0 0.0
        %1045 = vmatpush1.msra.mxu0 0.0
        %1046 = vmatprep.subr.mxu0 0.0
        %1047 = vmatpush1.msra.mxu0 0.0
        %1048 = vmatprep.subr.mxu0 0.0
        %1049 = vmatpush1.msra.mxu0 0.0
        %1050 = vmatprep.subr.mxu0 0.0
        %1051 = vmatpush1.msra.mxu0 0.0
        %1052 = vmatprep.subr.mxu0 0.0
        %1053 = vmatpush1.msra.mxu0 0.0
        %1054 = vmatprep.subr.mxu0 0.0
        %1055 = vmatpush1.msra.mxu0 0.0
        %1056 = vmatprep.subr.mxu0 0.0
        %1057 = vmatpush1.msra.mxu0 0.0
        %1058 = vmatprep.subr.mxu0 0.0
        %1059 = vmatpush1.msra.mxu0 %v1023
        %1060 = vmatprep.subr.mxu0 0.0
        %1061 = vmatpush2.msra.mxu0 0.0
        %1062 = vmatprep.subr.mxu0 0.0
        %1063 = vmatpush2.msra.mxu0 0.0
        %1064 = vmatprep.subr.mxu0 0.0
        %1065 = vmatpush2.msra.mxu0 0.0
        %1066 = vmatprep.subr.mxu0 0.0
        %1067 = vmatpush2.msra.mxu0 0.0
        %1068 = vmatprep.subr.mxu0 0.0
        %1069 = vmatpush2.msra.mxu0 0.0
        %1070 = vmatprep.subr.mxu0 0.0
        %1071 = vmatpush2.msra.mxu0 0.0
        %1072 = vmatprep.subr.mxu0 0.0
        %1073 = vmatpush2.msra.mxu0 0.0
        %1074 = vmatprep.subr.mxu0 0.0
        %1075 = vmatpush2.msra.mxu0 0.0
        %1076 = vmatprep.subr.mxu0 0.0
        %1077 = vmatpush2.msra.mxu0 0.0
        %1078 = vmatprep.subr.mxu0 0.0
        %1079 = vmatpush2.msra.mxu0 0.0
        %1080 = vmatprep.subr.mxu0 0.0
        %1081 = vmatpush2.msra.mxu0 0.0
        %1082 = vmatprep.subr.mxu0 0.0
        %1083 = vmatpush2.msra.mxu0 0.0
        %1084 = vmatprep.subr.mxu0 0.0
        %1085 = vmatpush2.msra.mxu0 0.0
        %1086 = vmatprep.subr.mxu0 0.0
        %1087 = vmatpush2.msra.mxu0 0.0
        %1088 = vmatprep.subr.mxu0 0.0
        %1089 = vmatpush2.msra.mxu0 0.0
        %1090 = vmatprep.subr.mxu0 0.0
        %1091 = vmatpush2.msra.mxu0 0.0
        %1092 = vmatprep.mubr.f32.mxu0 0.0
        %1093 = vmatmul.mubr.f32.gmra.mxu0 %v1026
        %v1094 = vpop.f32.mrf.mxu0
        %v1095 = vadd.f32 0.0, %v1094
        %v1096 = vpop.f32.mrf.mxu0
        %1097 = vdwg.mxu0
        %1098 = vrot.lane.b32.xlu0 %v520, 112
        %v1099 = vpop.permute.xlu0 %1098
        %v1102 = vsel %vm523, %v869, 0
        %1104 = vmatprep.subr.mxu0 0.0
        %1105 = vmatpush1.msra.mxu0 0.0
        %1106 = vmatprep.subr.mxu0 0.0
        %1107 = vmatpush1.msra.mxu0 0.0
        %1108 = vmatprep.subr.mxu0 0.0
        %1109 = vmatpush1.msra.mxu0 0.0
        %1110 = vmatprep.subr.mxu0 0.0
        %1111 = vmatpush1.msra.mxu0 0.0
        %1112 = vmatprep.subr.mxu0 0.0
        %1113 = vmatpush1.msra.mxu0 0.0
        %1114 = vmatprep.subr.mxu0 0.0
        %1115 = vmatpush1.msra.mxu0 0.0
        %1116 = vmatprep.subr.mxu0 0.0
        %1117 = vmatpush1.msra.mxu0 0.0
        %1118 = vmatprep.subr.mxu0 0.0
        %1119 = vmatpush1.msra.mxu0 0.0
        %1120 = vmatprep.subr.mxu0 0.0
        %1121 = vmatpush1.msra.mxu0 0.0
        %1122 = vmatprep.subr.mxu0 0.0
        %1123 = vmatpush1.msra.mxu0 0.0
        %1124 = vmatprep.subr.mxu0 0.0
        %1125 = vmatpush1.msra.mxu0 0.0
        %1126 = vmatprep.subr.mxu0 0.0
        %1127 = vmatpush1.msra.mxu0 0.0
        %1128 = vmatprep.subr.mxu0 0.0
        %1129 = vmatpush1.msra.mxu0 0.0
        %1130 = vmatprep.subr.mxu0 0.0
        %1131 = vmatpush1.msra.mxu0 0.0
        %1132 = vmatprep.subr.mxu0 0.0
        %1133 = vmatpush1.msra.mxu0 0.0
        %1134 = vmatprep.subr.mxu0 0.0
        %1135 = vmatpush1.msra.mxu0 %v1099
        %1136 = vmatprep.subr.mxu0 0.0
        %1137 = vmatpush2.msra.mxu0 0.0
        %1138 = vmatprep.subr.mxu0 0.0
        %1139 = vmatpush2.msra.mxu0 0.0
        %1140 = vmatprep.subr.mxu0 0.0
        %1141 = vmatpush2.msra.mxu0 0.0
        %1142 = vmatprep.subr.mxu0 0.0
        %1143 = vmatpush2.msra.mxu0 0.0
        %1144 = vmatprep.subr.mxu0 0.0
        %1145 = vmatpush2.msra.mxu0 0.0
        %1146 = vmatprep.subr.mxu0 0.0
        %1147 = vmatpush2.msra.mxu0 0.0
        %1148 = vmatprep.subr.mxu0 0.0
        %1149 = vmatpush2.msra.mxu0 0.0
        %1150 = vmatprep.subr.mxu0 0.0
        %1151 = vmatpush2.msra.mxu0 0.0
        %1152 = vmatprep.subr.mxu0 0.0
        %1153 = vmatpush2.msra.mxu0 0.0
        %1154 = vmatprep.subr.mxu0 0.0
        %1155 = vmatpush2.msra.mxu0 0.0
        %1156 = vmatprep.subr.mxu0 0.0
        %1157 = vmatpush2.msra.mxu0 0.0
        %1158 = vmatprep.subr.mxu0 0.0
        %1159 = vmatpush2.msra.mxu0 0.0
        %1160 = vmatprep.subr.mxu0 0.0
        %1161 = vmatpush2.msra.mxu0 0.0
        %1162 = vmatprep.subr.mxu0 0.0
        %1163 = vmatpush2.msra.mxu0 0.0
        %1164 = vmatprep.subr.mxu0 0.0
        %1165 = vmatpush2.msra.mxu0 0.0
        %1166 = vmatprep.subr.mxu0 0.0
        %1167 = vmatpush2.msra.mxu0 0.0
        %1168 = vmatprep.mubr.f32.mxu0 0.0
        %1169 = vmatmul.mubr.f32.gmra.mxu0 %v1102
        %v1170 = vpop.f32.mrf.mxu0
        %v1171 = vadd.f32 0.0, %v1170
        %v1172 = vpop.f32.mrf.mxu0
        %1173 = vdwg.mxu0
        %v1174 = vpack.c.bf16 %v943, %v943
        %v1175 = vpack.c.bf16 %v1019, %v1019
        %v1176 = vpack.c.bf16 %v1095, %v1095
        %v1177 = vpack.c.bf16 %v1171, %v1171
        %v1179 = vsel %vm523, %v1174, 0
        %vm1181 = vcmask 1043456
        %v1183 = vsel %vm1181, %v510, 0
        %1185 = vmatprep.subr.bf16.mxu0 0
        %1186 = vmatpush1.bf16.msra.mxu0 0
        %1187 = vmatprep.subr.bf16.mxu0 0
        %1188 = vmatpush1.bf16.msra.mxu0 0
        %1189 = vmatprep.subr.bf16.mxu0 0
        %1190 = vmatpush1.bf16.msra.mxu0 0
        %1191 = vmatprep.subr.bf16.mxu0 0
        %1192 = vmatpush1.bf16.msra.mxu0 0
        %1193 = vmatprep.subr.bf16.mxu0 0
        %1194 = vmatpush1.bf16.msra.mxu0 0
        %1195 = vmatprep.subr.bf16.mxu0 0
        %1196 = vmatpush1.bf16.msra.mxu0 0
        %1197 = vmatprep.subr.bf16.mxu0 0
        %1198 = vmatpush1.bf16.msra.mxu0 0
        %1199 = vmatprep.subr.bf16.mxu0 0
        %1200 = vmatpush1.bf16.msra.mxu0 %v1183
        %1201 = vmatprep.subr.bf16.mxu0 0
        %1202 = vmatpush2.bf16.msra.mxu0 0
        %1203 = vmatprep.subr.bf16.mxu0 0
        %1204 = vmatpush2.bf16.msra.mxu0 0
        %1205 = vmatprep.subr.bf16.mxu0 0
        %1206 = vmatpush2.bf16.msra.mxu0 0
        %1207 = vmatprep.subr.bf16.mxu0 0
        %1208 = vmatpush2.bf16.msra.mxu0 0
        %1209 = vmatprep.subr.bf16.mxu0 0
        %1210 = vmatpush2.bf16.msra.mxu0 0
        %1211 = vmatprep.subr.bf16.mxu0 0
        %1212 = vmatpush2.bf16.msra.mxu0 0
        %1213 = vmatprep.subr.bf16.mxu0 0
        %1214 = vmatpush2.bf16.msra.mxu0 0
        %1215 = vmatprep.subr.bf16.mxu0 0
        %1216 = vmatpush2.bf16.msra.mxu0 0
        %1217 = vmatprep.mubr.bf16.mxu0 0
        %1218 = vmatmul.mubr.bf16.gmra.mxu0 %v1179
        %v1219 = vpop.f32.mrf.mxu0
        %v1220 = vadd.f32 0.0, %v1219
        %v1221 = vpop.f32.mrf.mxu0
        %v1222 = vpop.f32.mrf.mxu0
        %v1223 = vpop.f32.mrf.mxu0
        %1224 = vdwg.mxu0
        %v1226 = vsel %vm523, %v1175, 0
        %v1229 = vsel %vm1181, %v511, 0
        %1231 = vmatprep.subr.bf16.mxu0 0
        %1232 = vmatpush1.bf16.msra.mxu0 0
        %1233 = vmatprep.subr.bf16.mxu0 0
        %1234 = vmatpush1.bf16.msra.mxu0 0
        %1235 = vmatprep.subr.bf16.mxu0 0
        %1236 = vmatpush1.bf16.msra.mxu0 0
        %1237 = vmatprep.subr.bf16.mxu0 0
        %1238 = vmatpush1.bf16.msra.mxu0 0
        %1239 = vmatprep.subr.bf16.mxu0 0
        %1240 = vmatpush1.bf16.msra.mxu0 0
        %1241 = vmatprep.subr.bf16.mxu0 0
        %1242 = vmatpush1.bf16.msra.mxu0 0
        %1243 = vmatprep.subr.bf16.mxu0 0
        %1244 = vmatpush1.bf16.msra.mxu0 0
        %1245 = vmatprep.subr.bf16.mxu0 0
        %1246 = vmatpush1.bf16.msra.mxu0 %v1229
        %1247 = vmatprep.subr.bf16.mxu0 0
        %1248 = vmatpush2.bf16.msra.mxu0 0
        %1249 = vmatprep.subr.bf16.mxu0 0
        %1250 = vmatpush2.bf16.msra.mxu0 0
        %1251 = vmatprep.subr.bf16.mxu0 0
        %1252 = vmatpush2.bf16.msra.mxu0 0
        %1253 = vmatprep.subr.bf16.mxu0 0
        %1254 = vmatpush2.bf16.msra.mxu0 0
        %1255 = vmatprep.subr.bf16.mxu0 0
        %1256 = vmatpush2.bf16.msra.mxu0 0
        %1257 = vmatprep.subr.bf16.mxu0 0
        %1258 = vmatpush2.bf16.msra.mxu0 0
        %1259 = vmatprep.subr.bf16.mxu0 0
        %1260 = vmatpush2.bf16.msra.mxu0 0
        %1261 = vmatprep.subr.bf16.mxu0 0
        %1262 = vmatpush2.bf16.msra.mxu0 0
        %1263 = vmatprep.mubr.bf16.mxu0 0
        %1264 = vmatmul.mubr.bf16.gmra.mxu0 %v1226
        %v1265 = vpop.f32.mrf.mxu0
        %v1266 = vadd.f32 0.0, %v1265
        %v1267 = vpop.f32.mrf.mxu0
        %v1268 = vpop.f32.mrf.mxu0
        %v1269 = vpop.f32.mrf.mxu0
        %1270 = vdwg.mxu0
        %v1272 = vsel %vm523, %v1176, 0
        %v1275 = vsel %vm1181, %v512, 0
        %1277 = vmatprep.subr.bf16.mxu0 0
        %1278 = vmatpush1.bf16.msra.mxu0 0
        %1279 = vmatprep.subr.bf16.mxu0 0
        %1280 = vmatpush1.bf16.msra.mxu0 0
        %1281 = vmatprep.subr.bf16.mxu0 0
        %1282 = vmatpush1.bf16.msra.mxu0 0
        %1283 = vmatprep.subr.bf16.mxu0 0
        %1284 = vmatpush1.bf16.msra.mxu0 0
        %1285 = vmatprep.subr.bf16.mxu0 0
        %1286 = vmatpush1.bf16.msra.mxu0 0
        %1287 = vmatprep.subr.bf16.mxu0 0
        %1288 = vmatpush1.bf16.msra.mxu0 0
        %1289 = vmatprep.subr.bf16.mxu0 0
        %1290 = vmatpush1.bf16.msra.mxu0 0
        %1291 = vmatprep.subr.bf16.mxu0 0
        %1292 = vmatpush1.bf16.msra.mxu0 %v1275
        %1293 = vmatprep.subr.bf16.mxu0 0
        %1294 = vmatpush2.bf16.msra.mxu0 0
        %1295 = vmatprep.subr.bf16.mxu0 0
        %1296 = vmatpush2.bf16.msra.mxu0 0
        %1297 = vmatprep.subr.bf16.mxu0 0
        %1298 = vmatpush2.bf16.msra.mxu0 0
        %1299 = vmatprep.subr.bf16.mxu0 0
        %1300 = vmatpush2.bf16.msra.mxu0 0
        %1301 = vmatprep.subr.bf16.mxu0 0
        %1302 = vmatpush2.bf16.msra.mxu0 0
        %1303 = vmatprep.subr.bf16.mxu0 0
        %1304 = vmatpush2.bf16.msra.mxu0 0
        %1305 = vmatprep.subr.bf16.mxu0 0
        %1306 = vmatpush2.bf16.msra.mxu0 0
        %1307 = vmatprep.subr.bf16.mxu0 0
        %1308 = vmatpush2.bf16.msra.mxu0 0
        %1309 = vmatprep.mubr.bf16.mxu0 0
        %1310 = vmatmul.mubr.bf16.gmra.mxu0 %v1272
        %v1311 = vpop.f32.mrf.mxu0
        %v1312 = vadd.f32 0.0, %v1311
        %v1313 = vpop.f32.mrf.mxu0
        %v1314 = vpop.f32.mrf.mxu0
        %v1315 = vpop.f32.mrf.mxu0
        %1316 = vdwg.mxu0
        %v1318 = vsel %vm523, %v1177, 0
        %v1321 = vsel %vm1181, %v513, 0
        %1323 = vmatprep.subr.bf16.mxu0 0
        %1324 = vmatpush1.bf16.msra.mxu0 0
        %1325 = vmatprep.subr.bf16.mxu0 0
        %1326 = vmatpush1.bf16.msra.mxu0 0
        %1327 = vmatprep.subr.bf16.mxu0 0
        %1328 = vmatpush1.bf16.msra.mxu0 0
        %1329 = vmatprep.subr.bf16.mxu0 0
        %1330 = vmatpush1.bf16.msra.mxu0 0
        %1331 = vmatprep.subr.bf16.mxu0 0
        %1332 = vmatpush1.bf16.msra.mxu0 0
        %1333 = vmatprep.subr.bf16.mxu0 0
        %1334 = vmatpush1.bf16.msra.mxu0 0
        %1335 = vmatprep.subr.bf16.mxu0 0
        %1336 = vmatpush1.bf16.msra.mxu0 0
        %1337 = vmatprep.subr.bf16.mxu0 0
        %1338 = vmatpush1.bf16.msra.mxu0 %v1321
        %1339 = vmatprep.subr.bf16.mxu0 0
        %1340 = vmatpush2.bf16.msra.mxu0 0
        %1341 = vmatprep.subr.bf16.mxu0 0
        %1342 = vmatpush2.bf16.msra.mxu0 0
        %1343 = vmatprep.subr.bf16.mxu0 0
        %1344 = vmatpush2.bf16.msra.mxu0 0
        %1345 = vmatprep.subr.bf16.mxu0 0
        %1346 = vmatpush2.bf16.msra.mxu0 0
        %1347 = vmatprep.subr.bf16.mxu0 0
        %1348 = vmatpush2.bf16.msra.mxu0 0
        %1349 = vmatprep.subr.bf16.mxu0 0
        %1350 = vmatpush2.bf16.msra.mxu0 0
        %1351 = vmatprep.subr.bf16.mxu0 0
        %1352 = vmatpush2.bf16.msra.mxu0 0
        %1353 = vmatprep.subr.bf16.mxu0 0
        %1354 = vmatpush2.bf16.msra.mxu0 0
        %1355 = vmatprep.mubr.bf16.mxu0 0
        %1356 = vmatmul.mubr.bf16.gmra.mxu0 %v1318
        %v1357 = vpop.f32.mrf.mxu0
        %v1358 = vadd.f32 0.0, %v1357
        %v1359 = vpop.f32.mrf.mxu0
        %v1360 = vpop.f32.mrf.mxu0
        %v1361 = vpop.f32.mrf.mxu0
        %1362 = vdwg.mxu0
        %v1363 = vsel %vm466, %v1220, 0.0
        %v1364 = vsel %vm466, %v1266, 0.0
        %v1365 = vadd.f32 %v1363, %v1364
        %v1366 = vsel %vm466, %v1312, 0.0
        %v1367 = vadd.f32 %v1365, %v1366
        %v1368 = vsel %vm466, %v1358, 0.0
        %v1369 = vadd.f32 %v1367, %v1368
        %v1370 = vadd.f32 %v443, %v1369
        %v1371 = vlaneseq
        %v1372 = vshrl.u32 %v1371, 7
        %v1373 = vsub.s32 1, %v1372
        %v1374 = vrot.slane %v444, %v1373
        %v1375 = vadd.f32 %v1370, %v1374
        %v1376 = vsel %vm466, %v1375, 0.0
        %1377 = vadd.xlane.f32.xlu0 %v1376
        %v1378 = vpop.xlane.xlu0 %1377
        %v1379 = vrcp.pop 32.0
        %v1380 = vmul.f32 %v1378, %v1379
        %v1381 = vsub.f32 %v1375, %v1380
        %v1382 = vmul.f32 %v1381, %v1381
        %v1383 = vsel %vm466, %v1382, 0.0
        %1384 = vadd.xlane.f32.xlu0 %v1383
        %v1385 = vpop.xlane.xlu0 %1384
        %v1386 = vmul.f32 %v1385, %v1379
        %v1387 = vadd.f32 %v1386, 1e-05
        %v1388 = vrsqrt.pop %v1387
        %v1389 = vmul.f32 %v1381, %v1388
        %v1390 = vlaneseq
        %v1391 = vshrl.u32 %v1390, 7
        %v1392 = vsub.s32 2, %v1391
        %v1393 = vrot.slane %v444, %v1392
        %v1394 = vmul.f32 %v1389, %v1393
        %v1395 = vlaneseq
        %v1396 = vshrl.u32 %v1395, 7
        %v1397 = vsub.s32 3, %v1396
        %v1398 = vrot.slane %v444, %v1397
        %v1399 = vadd.f32 %v1394, %v1398
        %v1400 = vpack.c.bf16 %v1399, %v1399
        %v1401 = vld [vmem:[%s420] sm:$0xf]
        %v1402 = vld [vmem:[%s420 + $0x4] sm:$0xf]
        %v1403 = vld [vmem:[%s420 + $0x8] sm:$0xf]
        %v1404 = vld [vmem:[%s420 + $0xc] sm:$0xf]
        %v1405 = vlaneseq
        %v1406 = vshrl.u32 %v1405, 7
        %v1407 = vsub.s32 4, %v1406
        %v1408 = vrot.slane %v444, %v1407
        %v1413 = vunpack.c.l.b16 %v1401
        %v1414 = vunpack.c.l.b16 %v1402
        %v1415 = vunpack.c.l.b16 %v1403
        %v1416 = vunpack.c.l.b16 %v1404
        %v1417 = vpack.c.b16 %v1414, %v1413
        %v1418 = vpack.c.b16 %v1416, %v1415
        %v1422 = vsel %vm466, %v1400, 0
        %1424 = vmatprep.subr.bf16.mxu0 0
        %1425 = vmatpush1.bf16.msra.mxu0 0
        %1426 = vmatprep.subr.bf16.mxu0 0
        %1427 = vmatpush1.bf16.msra.mxu0 0
        %1428 = vmatprep.subr.bf16.mxu0 0
        %1429 = vmatpush1.bf16.msra.mxu0 0
        %1430 = vmatprep.subr.bf16.mxu0 0
        %1431 = vmatpush1.bf16.msra.mxu0 0
        %1432 = vmatprep.subr.bf16.mxu0 0
        %1433 = vmatpush1.bf16.msra.mxu0 0
        %1434 = vmatprep.subr.bf16.mxu0 0
        %1435 = vmatpush1.bf16.msra.mxu0 0
        %1436 = vmatprep.subr.bf16.mxu0 0
        %1437 = vmatpush1.bf16.msra.mxu0 %v1418
        %1438 = vmatprep.subr.bf16.mxu0 0
        %1439 = vmatpush1.bf16.msra.mxu0 %v1417
        %1440 = vmatprep.subr.bf16.mxu0 0
        %1441 = vmatpush2.bf16.msra.mxu0 0
        %1442 = vmatprep.subr.bf16.mxu0 0
        %1443 = vmatpush2.bf16.msra.mxu0 0
        %1444 = vmatprep.subr.bf16.mxu0 0
        %1445 = vmatpush2.bf16.msra.mxu0 0
        %1446 = vmatprep.subr.bf16.mxu0 0
        %1447 = vmatpush2.bf16.msra.mxu0 0
        %1448 = vmatprep.subr.bf16.mxu0 0
        %1449 = vmatpush2.bf16.msra.mxu0 0
        %1450 = vmatprep.subr.bf16.mxu0 0
        %1451 = vmatpush2.bf16.msra.mxu0 0
        %1452 = vmatprep.subr.bf16.mxu0 0
        %1453 = vmatpush2.bf16.msra.mxu0 0
        %1454 = vmatprep.subr.bf16.mxu0 0
        %1455 = vmatpush2.bf16.msra.mxu0 0
        %1456 = vmatprep.mubr.bf16.mxu0 0
        %1457 = vmatmul.mubr.bf16.gmra.mxu0 %v1422
        %v1458 = vpop.f32.mrf.mxu0
        %v1459 = vadd.f32 %v1408, %v1458
        %v1460 = vpop.f32.mrf.mxu0
        %v1461 = vpop.f32.mrf.mxu0
        %v1462 = vpop.f32.mrf.mxu0
        %1463 = vdwg.mxu0
        %v1464 = vmax.f32 %v1459, 0.0
        %v1465 = vpack.c.bf16 %v1464, %v1464
        %v1466 = vld [vmem:[%s427] sm:$0xf]
        %v1467 = vld [vmem:[%s427 + $0x4] sm:$0xf]
        %v1468 = vld [vmem:[%s427 + $0x8] sm:$0xf]
        %v1469 = vld [vmem:[%s427 + $0xc] sm:$0xf]
        %v1470 = vld [vmem:[%s427 + $0x10] sm:$0xf]
        %v1471 = vld [vmem:[%s427 + $0x14] sm:$0xf]
        %v1472 = vld [vmem:[%s427 + $0x18] sm:$0xf]
        %v1473 = vld [vmem:[%s427 + $0x1c] sm:$0xf]
        %v1474 = vld [vmem:[%s427 + $0x20] sm:$0xf]
        %v1475 = vld [vmem:[%s427 + $0x24] sm:$0xf]
        %v1476 = vld [vmem:[%s427 + $0x28] sm:$0xf]
        %v1477 = vld [vmem:[%s427 + $0x2c] sm:$0xf]
        %v1478 = vld [vmem:[%s427 + $0x30] sm:$0xf]
        %v1479 = vld [vmem:[%s427 + $0x34] sm:$0xf]
        %v1480 = vld [vmem:[%s427 + $0x38] sm:$0xf]
        %v1481 = vld [vmem:[%s427 + $0x3c] sm:$0xf]
        %v1482 = vlaneseq
        %v1483 = vshrl.u32 %v1482, 7
        %v1484 = vsub.s32 5, %v1483
        %v1485 = vrot.slane %v444, %v1484
        %v1502 = vunpack.c.l.b16 %v1466
        %v1503 = vunpack.c.l.b16 %v1467
        %v1504 = vunpack.c.l.b16 %v1468
        %v1505 = vunpack.c.l.b16 %v1469
        %v1506 = vunpack.c.l.b16 %v1470
        %v1507 = vunpack.c.l.b16 %v1471
        %v1508 = vunpack.c.l.b16 %v1472
        %v1509 = vunpack.c.l.b16 %v1473
        %v1510 = vunpack.c.l.b16 %v1474
        %v1511 = vunpack.c.l.b16 %v1475
        %v1512 = vunpack.c.l.b16 %v1476
        %v1513 = vunpack.c.l.b16 %v1477
        %v1514 = vunpack.c.l.b16 %v1478
        %v1515 = vunpack.c.l.b16 %v1479
        %v1516 = vunpack.c.l.b16 %v1480
        %v1517 = vunpack.c.l.b16 %v1481
        %v1518 = vpack.c.b16 %v1503, %v1502
        %v1519 = vpack.c.b16 %v1505, %v1504
        %v1520 = vpack.c.b16 %v1507, %v1506
        %v1521 = vpack.c.b16 %v1509, %v1508
        %v1522 = vpack.c.b16 %v1511, %v1510
        %v1523 = vpack.c.b16 %v1513, %v1512
        %v1524 = vpack.c.b16 %v1515, %v1514
        %v1525 = vpack.c.b16 %v1517, %v1516
        %1534 = vmatprep.subr.bf16.mxu0 0
        %1535 = vmatpush1.bf16.msra.mxu0 %v1525
        %1536 = vmatprep.subr.bf16.mxu0 0
        %1537 = vmatpush1.bf16.msra.mxu0 %v1524
        %1538 = vmatprep.subr.bf16.mxu0 0
        %1539 = vmatpush1.bf16.msra.mxu0 %v1523
        %1540 = vmatprep.subr.bf16.mxu0 0
        %1541 = vmatpush1.bf16.msra.mxu0 %v1522
        %1542 = vmatprep.subr.bf16.mxu0 0
        %1543 = vmatpush1.bf16.msra.mxu0 %v1521
        %1544 = vmatprep.subr.bf16.mxu0 0
        %1545 = vmatpush1.bf16.msra.mxu0 %v1520
        %1546 = vmatprep.subr.bf16.mxu0 0
        %1547 = vmatpush1.bf16.msra.mxu0 %v1519
        %1548 = vmatprep.subr.bf16.mxu0 0
        %1549 = vmatpush1.bf16.msra.mxu0 %v1518
        %1550 = vmatprep.subr.bf16.mxu0 0
        %1551 = vmatpush2.bf16.msra.mxu0 0
        %1552 = vmatprep.subr.bf16.mxu0 0
        %1553 = vmatpush2.bf16.msra.mxu0 0
        %1554 = vmatprep.subr.bf16.mxu0 0
        %1555 = vmatpush2.bf16.msra.mxu0 0
        %1556 = vmatprep.subr.bf16.mxu0 0
        %1557 = vmatpush2.bf16.msra.mxu0 0
        %1558 = vmatprep.subr.bf16.mxu0 0
        %1559 = vmatpush2.bf16.msra.mxu0 0
        %1560 = vmatprep.subr.bf16.mxu0 0
        %1561 = vmatpush2.bf16.msra.mxu0 0
        %1562 = vmatprep.subr.bf16.mxu0 0
        %1563 = vmatpush2.bf16.msra.mxu0 0
        %1564 = vmatprep.subr.bf16.mxu0 0
        %1565 = vmatpush2.bf16.msra.mxu0 0
        %1566 = vmatprep.mubr.bf16.mxu0 0
        %1567 = vmatmul.mubr.bf16.gmra.mxu0 %v1465
        %v1568 = vpop.f32.mrf.mxu0
        %v1569 = vadd.f32 %v1485, %v1568
        %v1570 = vpop.f32.mrf.mxu0
        %v1571 = vpop.f32.mrf.mxu0
        %v1572 = vpop.f32.mrf.mxu0
        %1573 = vdwg.mxu0
        %v1574 = vadd.f32 %v1399, %v1569
        %v1575 = vsel %vm466, %v1574, 0.0
        %1576 = vadd.xlane.f32.xlu0 %v1575
        %v1577 = vpop.xlane.xlu0 %1576
        %v1578 = vmul.f32 %v1577, %v1379
        %v1579 = vsub.f32 %v1574, %v1578
        %v1580 = vmul.f32 %v1579, %v1579
        %v1581 = vsel %vm466, %v1580, 0.0
        %1582 = vadd.xlane.f32.xlu0 %v1581
        %v1583 = vpop.xlane.xlu0 %1582
        %v1584 = vmul.f32 %v1583, %v1379
        %v1585 = vadd.f32 %v1584, 1e-05
        %v1586 = vrsqrt.pop %v1585
        %v1587 = vmul.f32 %v1579, %v1586
        %v1588 = vlaneseq
        %v1589 = vshrl.u32 %v1588, 7
        %v1590 = vsub.s32 6, %v1589
        %v1591 = vrot.slane %v444, %v1590
        %v1592 = vmul.f32 %v1587, %v1591
        %v1593 = vlaneseq
        %v1594 = vshrl.u32 %v1593, 7
        %v1595 = vsub.s32 7, %v1594
        %v1596 = vrot.slane %v444, %v1595
        %v1597 = vadd.f32 %v1592, %v1596
        %s1598 = scalar_lea.vmem %s433, 8
        %v1599 = vld [vmem:[%s1598] sm:$0xff]
        %v1600 = vpack.c.bf16 %v1597, %v1597
        %s1601 = scalar_lea.vmem %s406, 16
        %v1602 = vld [vmem:[%s1601] sm:$0xf]
        %v1603 = vld [vmem:[%s1601 + $0x4] sm:$0xf]
        %v1604 = vld [vmem:[%s1601 + $0x8] sm:$0xf]
        %v1605 = vld [vmem:[%s1601 + $0xc] sm:$0xf]
        %v1606 = vlaneseq
        %v1607 = vshrl.u32 %v1606, 7
        %v1608 = vsub.s32 0, %v1607
        %v1609 = vrot.slane %v1599, %v1608
        %v1614 = vunpack.c.l.b16 %v1602
        %v1615 = vunpack.c.l.b16 %v1603
        %v1616 = vunpack.c.l.b16 %v1604
        %v1617 = vunpack.c.l.b16 %v1605
        %v1618 = vpack.c.b16 %v1615, %v1614
        %v1619 = vpack.c.b16 %v1617, %v1616
        %v1623 = vsel %vm466, %v1600, 0
        %1625 = vmatprep.subr.bf16.mxu0 0
        %1626 = vmatpush1.bf16.msra.mxu0 0
        %1627 = vmatprep.subr.bf16.mxu0 0
        %1628 = vmatpush1.bf16.msra.mxu0 0
        %1629 = vmatprep.subr.bf16.mxu0 0
        %1630 = vmatpush1.bf16.msra.mxu0 0
        %1631 = vmatprep.subr.bf16.mxu0 0
        %1632 = vmatpush1.bf16.msra.mxu0 0
        %1633 = vmatprep.subr.bf16.mxu0 0
        %1634 = vmatpush1.bf16.msra.mxu0 0
        %1635 = vmatprep.subr.bf16.mxu0 0
        %1636 = vmatpush1.bf16.msra.mxu0 0
        %1637 = vmatprep.subr.bf16.mxu0 0
        %1638 = vmatpush1.bf16.msra.mxu0 %v1619
        %1639 = vmatprep.subr.bf16.mxu0 0
        %1640 = vmatpush1.bf16.msra.mxu0 %v1618
        %1641 = vmatprep.subr.bf16.mxu0 0
        %1642 = vmatpush2.bf16.msra.mxu0 0
        %1643 = vmatprep.subr.bf16.mxu0 0
        %1644 = vmatpush2.bf16.msra.mxu0 0
        %1645 = vmatprep.subr.bf16.mxu0 0
        %1646 = vmatpush2.bf16.msra.mxu0 0
        %1647 = vmatprep.subr.bf16.mxu0 0
        %1648 = vmatpush2.bf16.msra.mxu0 0
        %1649 = vmatprep.subr.bf16.mxu0 0
        %1650 = vmatpush2.bf16.msra.mxu0 0
        %1651 = vmatprep.subr.bf16.mxu0 0
        %1652 = vmatpush2.bf16.msra.mxu0 0
        %1653 = vmatprep.subr.bf16.mxu0 0
        %1654 = vmatpush2.bf16.msra.mxu0 0
        %1655 = vmatprep.subr.bf16.mxu0 0
        %1656 = vmatpush2.bf16.msra.mxu0 0
        %1657 = vmatprep.mubr.bf16.mxu0 0
        %1658 = vmatmul.mubr.bf16.gmra.mxu0 %v1623
        %v1659 = vpop.f32.mrf.mxu0
        %v1660 = vadd.f32 %v1609, %v1659
        %v1661 = vpop.f32.mrf.mxu0
        %v1662 = vpop.f32.mrf.mxu0
        %v1663 = vpop.f32.mrf.mxu0
        %1664 = vdwg.mxu0
        %s1665 = scalar_lea.vmem %s413, 16
        %v1666 = vld [vmem:[%s1665] sm:$0xf]
        %v1667 = vld [vmem:[%s1665 + $0x4] sm:$0xf]
        %v1668 = vld [vmem:[%s1665 + $0x8] sm:$0xf]
        %v1669 = vld [vmem:[%s1665 + $0xc] sm:$0xf]
        %1671 = vrot.lane.b32.xlu0 %v1660, 104
        %v1672 = vpop.permute.xlu0 %1671
        %1673 = vrot.lane.b32.xlu0 %v1660, 80
        %v1674 = vpop.permute.xlu0 %1673
        %1675 = vrot.lane.b32.xlu0 %v1660, 56
        %v1676 = vpop.permute.xlu0 %1675
        %1677 = vrot.lane.b32.xlu0 %v1660, 120
        %v1678 = vpop.permute.xlu0 %1677
        %v1679 = vsel %vm523, %v1660, 0
        %v1681 = vsel %vm523, %v1678, 0
        %1683 = vmatprep.subr.mxu0 0.0
        %1684 = vmatpush1.xpose.msra.mxu0 0.0
        %1685 = vmatprep.subr.mxu0 0.0
        %1686 = vmatpush1.xpose.msra.mxu0 0.0
        %1687 = vmatprep.subr.mxu0 0.0
        %1688 = vmatpush1.xpose.msra.mxu0 0.0
        %1689 = vmatprep.subr.mxu0 0.0
        %1690 = vmatpush1.xpose.msra.mxu0 0.0
        %1691 = vmatprep.subr.mxu0 0.0
        %1692 = vmatpush1.xpose.msra.mxu0 0.0
        %1693 = vmatprep.subr.mxu0 0.0
        %1694 = vmatpush1.xpose.msra.mxu0 0.0
        %1695 = vmatprep.subr.mxu0 0.0
        %1696 = vmatpush1.xpose.msra.mxu0 0.0
        %1697 = vmatprep.subr.mxu0 0.0
        %1698 = vmatpush1.xpose.msra.mxu0 0.0
        %1699 = vmatprep.subr.mxu0 0.0
        %1700 = vmatpush1.xpose.msra.mxu0 0.0
        %1701 = vmatprep.subr.mxu0 0.0
        %1702 = vmatpush1.xpose.msra.mxu0 0.0
        %1703 = vmatprep.subr.mxu0 0.0
        %1704 = vmatpush1.xpose.msra.mxu0 0.0
        %1705 = vmatprep.subr.mxu0 0.0
        %1706 = vmatpush1.xpose.msra.mxu0 0.0
        %1707 = vmatprep.subr.mxu0 0.0
        %1708 = vmatpush1.xpose.msra.mxu0 0.0
        %1709 = vmatprep.subr.mxu0 0.0
        %1710 = vmatpush1.xpose.msra.mxu0 0.0
        %1711 = vmatprep.subr.mxu0 0.0
        %1712 = vmatpush1.xpose.msra.mxu0 0.0
        %1713 = vmatprep.subr.mxu0 0.0
        %1714 = vmatpush1.xpose.msra.mxu0 %v1681
        %1715 = vmatprep.subr.mxu0 0.0
        %1716 = vmatpush2.xpose.msra.mxu0 0.0
        %1717 = vmatprep.subr.mxu0 0.0
        %1718 = vmatpush2.xpose.msra.mxu0 0.0
        %1719 = vmatprep.subr.mxu0 0.0
        %1720 = vmatpush2.xpose.msra.mxu0 0.0
        %1721 = vmatprep.subr.mxu0 0.0
        %1722 = vmatpush2.xpose.msra.mxu0 0.0
        %1723 = vmatprep.subr.mxu0 0.0
        %1724 = vmatpush2.xpose.msra.mxu0 0.0
        %1725 = vmatprep.subr.mxu0 0.0
        %1726 = vmatpush2.xpose.msra.mxu0 0.0
        %1727 = vmatprep.subr.mxu0 0.0
        %1728 = vmatpush2.xpose.msra.mxu0 0.0
        %1729 = vmatprep.subr.mxu0 0.0
        %1730 = vmatpush2.xpose.msra.mxu0 0.0
        %1731 = vmatprep.subr.mxu0 0.0
        %1732 = vmatpush2.xpose.msra.mxu0 0.0
        %1733 = vmatprep.subr.mxu0 0.0
        %1734 = vmatpush2.xpose.msra.mxu0 0.0
        %1735 = vmatprep.subr.mxu0 0.0
        %1736 = vmatpush2.xpose.msra.mxu0 0.0
        %1737 = vmatprep.subr.mxu0 0.0
        %1738 = vmatpush2.xpose.msra.mxu0 0.0
        %1739 = vmatprep.subr.mxu0 0.0
        %1740 = vmatpush2.xpose.msra.mxu0 0.0
        %1741 = vmatprep.subr.mxu0 0.0
        %1742 = vmatpush2.xpose.msra.mxu0 0.0
        %1743 = vmatprep.subr.mxu0 0.0
        %1744 = vmatpush2.xpose.msra.mxu0 0.0
        %1745 = vmatprep.subr.mxu0 0.0
        %1746 = vmatpush2.xpose.msra.mxu0 0.0
        %1747 = vmatprep.mubr.f32.mxu0 0.0
        %1748 = vmatmul.mubr.f32.gmra.mxu0 %v1679
        %v1749 = vpop.f32.mrf.mxu0
        %v1750 = vadd.f32 0.0, %v1749
        %v1751 = vpop.f32.mrf.mxu0
        %1752 = vdwg.mxu0
        %1753 = vrot.lane.b32.xlu0 %v1672, 120
        %v1754 = vpop.permute.xlu0 %1753
        %v1755 = vsel %vm523, %v1672, 0
        %v1757 = vsel %vm523, %v1754, 0
        %1759 = vmatprep.subr.mxu0 0.0
        %1760 = vmatpush1.xpose.msra.mxu0 0.0
        %1761 = vmatprep.subr.mxu0 0.0
        %1762 = vmatpush1.xpose.msra.mxu0 0.0
        %1763 = vmatprep.subr.mxu0 0.0
        %1764 = vmatpush1.xpose.msra.mxu0 0.0
        %1765 = vmatprep.subr.mxu0 0.0
        %1766 = vmatpush1.xpose.msra.mxu0 0.0
        %1767 = vmatprep.subr.mxu0 0.0
        %1768 = vmatpush1.xpose.msra.mxu0 0.0
        %1769 = vmatprep.subr.mxu0 0.0
        %1770 = vmatpush1.xpose.msra.mxu0 0.0
        %1771 = vmatprep.subr.mxu0 0.0
        %1772 = vmatpush1.xpose.msra.mxu0 0.0
        %1773 = vmatprep.subr.mxu0 0.0
        %1774 = vmatpush1.xpose.msra.mxu0 0.0
        %1775 = vmatprep.subr.mxu0 0.0
        %1776 = vmatpush1.xpose.msra.mxu0 0.0
        %1777 = vmatprep.subr.mxu0 0.0
        %1778 = vmatpush1.xpose.msra.mxu0 0.0
        %1779 = vmatprep.subr.mxu0 0.0
        %1780 = vmatpush1.xpose.msra.mxu0 0.0
        %1781 = vmatprep.subr.mxu0 0.0
        %1782 = vmatpush1.xpose.msra.mxu0 0.0
        %1783 = vmatprep.subr.mxu0 0.0
        %1784 = vmatpush1.xpose.msra.mxu0 0.0
        %1785 = vmatprep.subr.mxu0 0.0
        %1786 = vmatpush1.xpose.msra.mxu0 0.0
        %1787 = vmatprep.subr.mxu0 0.0
        %1788 = vmatpush1.xpose.msra.mxu0 0.0
        %1789 = vmatprep.subr.mxu0 0.0
        %1790 = vmatpush1.xpose.msra.mxu0 %v1757
        %1791 = vmatprep.subr.mxu0 0.0
        %1792 = vmatpush2.xpose.msra.mxu0 0.0
        %1793 = vmatprep.subr.mxu0 0.0
        %1794 = vmatpush2.xpose.msra.mxu0 0.0
        %1795 = vmatprep.subr.mxu0 0.0
        %1796 = vmatpush2.xpose.msra.mxu0 0.0
        %1797 = vmatprep.subr.mxu0 0.0
        %1798 = vmatpush2.xpose.msra.mxu0 0.0
        %1799 = vmatprep.subr.mxu0 0.0
        %1800 = vmatpush2.xpose.msra.mxu0 0.0
        %1801 = vmatprep.subr.mxu0 0.0
        %1802 = vmatpush2.xpose.msra.mxu0 0.0
        %1803 = vmatprep.subr.mxu0 0.0
        %1804 = vmatpush2.xpose.msra.mxu0 0.0
        %1805 = vmatprep.subr.mxu0 0.0
        %1806 = vmatpush2.xpose.msra.mxu0 0.0
        %1807 = vmatprep.subr.mxu0 0.0
        %1808 = vmatpush2.xpose.msra.mxu0 0.0
        %1809 = vmatprep.subr.mxu0 0.0
        %1810 = vmatpush2.xpose.msra.mxu0 0.0
        %1811 = vmatprep.subr.mxu0 0.0
        %1812 = vmatpush2.xpose.msra.mxu0 0.0
        %1813 = vmatprep.subr.mxu0 0.0
        %1814 = vmatpush2.xpose.msra.mxu0 0.0
        %1815 = vmatprep.subr.mxu0 0.0
        %1816 = vmatpush2.xpose.msra.mxu0 0.0
        %1817 = vmatprep.subr.mxu0 0.0
        %1818 = vmatpush2.xpose.msra.mxu0 0.0
        %1819 = vmatprep.subr.mxu0 0.0
        %1820 = vmatpush2.xpose.msra.mxu0 0.0
        %1821 = vmatprep.subr.mxu0 0.0
        %1822 = vmatpush2.xpose.msra.mxu0 0.0
        %1823 = vmatprep.mubr.f32.mxu0 0.0
        %1824 = vmatmul.mubr.f32.gmra.mxu0 %v1755
        %v1825 = vpop.f32.mrf.mxu0
        %v1826 = vadd.f32 0.0, %v1825
        %v1827 = vpop.f32.mrf.mxu0
        %1828 = vdwg.mxu0
        %1829 = vrot.lane.b32.xlu0 %v1674, 120
        %v1830 = vpop.permute.xlu0 %1829
        %v1831 = vsel %vm523, %v1674, 0
        %v1833 = vsel %vm523, %v1830, 0
        %1835 = vmatprep.subr.mxu0 0.0
        %1836 = vmatpush1.xpose.msra.mxu0 0.0
        %1837 = vmatprep.subr.mxu0 0.0
        %1838 = vmatpush1.xpose.msra.mxu0 0.0
        %1839 = vmatprep.subr.mxu0 0.0
        %1840 = vmatpush1.xpose.msra.mxu0 0.0
        %1841 = vmatprep.subr.mxu0 0.0
        %1842 = vmatpush1.xpose.msra.mxu0 0.0
        %1843 = vmatprep.subr.mxu0 0.0
        %1844 = vmatpush1.xpose.msra.mxu0 0.0
        %1845 = vmatprep.subr.mxu0 0.0
        %1846 = vmatpush1.xpose.msra.mxu0 0.0
        %1847 = vmatprep.subr.mxu0 0.0
        %1848 = vmatpush1.xpose.msra.mxu0 0.0
        %1849 = vmatprep.subr.mxu0 0.0
        %1850 = vmatpush1.xpose.msra.mxu0 0.0
        %1851 = vmatprep.subr.mxu0 0.0
        %1852 = vmatpush1.xpose.msra.mxu0 0.0
        %1853 = vmatprep.subr.mxu0 0.0
        %1854 = vmatpush1.xpose.msra.mxu0 0.0
        %1855 = vmatprep.subr.mxu0 0.0
        %1856 = vmatpush1.xpose.msra.mxu0 0.0
        %1857 = vmatprep.subr.mxu0 0.0
        %1858 = vmatpush1.xpose.msra.mxu0 0.0
        %1859 = vmatprep.subr.mxu0 0.0
        %1860 = vmatpush1.xpose.msra.mxu0 0.0
        %1861 = vmatprep.subr.mxu0 0.0
        %1862 = vmatpush1.xpose.msra.mxu0 0.0
        %1863 = vmatprep.subr.mxu0 0.0
        %1864 = vmatpush1.xpose.msra.mxu0 0.0
        %1865 = vmatprep.subr.mxu0 0.0
        %1866 = vmatpush1.xpose.msra.mxu0 %v1833
        %1867 = vmatprep.subr.mxu0 0.0
        %1868 = vmatpush2.xpose.msra.mxu0 0.0
        %1869 = vmatprep.subr.mxu0 0.0
        %1870 = vmatpush2.xpose.msra.mxu0 0.0
        %1871 = vmatprep.subr.mxu0 0.0
        %1872 = vmatpush2.xpose.msra.mxu0 0.0
        %1873 = vmatprep.subr.mxu0 0.0
        %1874 = vmatpush2.xpose.msra.mxu0 0.0
        %1875 = vmatprep.subr.mxu0 0.0
        %1876 = vmatpush2.xpose.msra.mxu0 0.0
        %1877 = vmatprep.subr.mxu0 0.0
        %1878 = vmatpush2.xpose.msra.mxu0 0.0
        %1879 = vmatprep.subr.mxu0 0.0
        %1880 = vmatpush2.xpose.msra.mxu0 0.0
        %1881 = vmatprep.subr.mxu0 0.0
        %1882 = vmatpush2.xpose.msra.mxu0 0.0
        %1883 = vmatprep.subr.mxu0 0.0
        %1884 = vmatpush2.xpose.msra.mxu0 0.0
        %1885 = vmatprep.subr.mxu0 0.0
        %1886 = vmatpush2.xpose.msra.mxu0 0.0
        %1887 = vmatprep.subr.mxu0 0.0
        %1888 = vmatpush2.xpose.msra.mxu0 0.0
        %1889 = vmatprep.subr.mxu0 0.0
        %1890 = vmatpush2.xpose.msra.mxu0 0.0
        %1891 = vmatprep.subr.mxu0 0.0
        %1892 = vmatpush2.xpose.msra.mxu0 0.0
        %1893 = vmatprep.subr.mxu0 0.0
        %1894 = vmatpush2.xpose.msra.mxu0 0.0
        %1895 = vmatprep.subr.mxu0 0.0
        %1896 = vmatpush2.xpose.msra.mxu0 0.0
        %1897 = vmatprep.subr.mxu0 0.0
        %1898 = vmatpush2.xpose.msra.mxu0 0.0
        %1899 = vmatprep.mubr.f32.mxu0 0.0
        %1900 = vmatmul.mubr.f32.gmra.mxu0 %v1831
        %v1901 = vpop.f32.mrf.mxu0
        %v1902 = vadd.f32 0.0, %v1901
        %v1903 = vpop.f32.mrf.mxu0
        %1904 = vdwg.mxu0
        %1905 = vrot.lane.b32.xlu0 %v1676, 120
        %v1906 = vpop.permute.xlu0 %1905
        %v1907 = vsel %vm523, %v1676, 0
        %v1909 = vsel %vm523, %v1906, 0
        %1911 = vmatprep.subr.mxu0 0.0
        %1912 = vmatpush1.xpose.msra.mxu0 0.0
        %1913 = vmatprep.subr.mxu0 0.0
        %1914 = vmatpush1.xpose.msra.mxu0 0.0
        %1915 = vmatprep.subr.mxu0 0.0
        %1916 = vmatpush1.xpose.msra.mxu0 0.0
        %1917 = vmatprep.subr.mxu0 0.0
        %1918 = vmatpush1.xpose.msra.mxu0 0.0
        %1919 = vmatprep.subr.mxu0 0.0
        %1920 = vmatpush1.xpose.msra.mxu0 0.0
        %1921 = vmatprep.subr.mxu0 0.0
        %1922 = vmatpush1.xpose.msra.mxu0 0.0
        %1923 = vmatprep.subr.mxu0 0.0
        %1924 = vmatpush1.xpose.msra.mxu0 0.0
        %1925 = vmatprep.subr.mxu0 0.0
        %1926 = vmatpush1.xpose.msra.mxu0 0.0
        %1927 = vmatprep.subr.mxu0 0.0
        %1928 = vmatpush1.xpose.msra.mxu0 0.0
        %1929 = vmatprep.subr.mxu0 0.0
        %1930 = vmatpush1.xpose.msra.mxu0 0.0
        %1931 = vmatprep.subr.mxu0 0.0
        %1932 = vmatpush1.xpose.msra.mxu0 0.0
        %1933 = vmatprep.subr.mxu0 0.0
        %1934 = vmatpush1.xpose.msra.mxu0 0.0
        %1935 = vmatprep.subr.mxu0 0.0
        %1936 = vmatpush1.xpose.msra.mxu0 0.0
        %1937 = vmatprep.subr.mxu0 0.0
        %1938 = vmatpush1.xpose.msra.mxu0 0.0
        %1939 = vmatprep.subr.mxu0 0.0
        %1940 = vmatpush1.xpose.msra.mxu0 0.0
        %1941 = vmatprep.subr.mxu0 0.0
        %1942 = vmatpush1.xpose.msra.mxu0 %v1909
        %1943 = vmatprep.subr.mxu0 0.0
        %1944 = vmatpush2.xpose.msra.mxu0 0.0
        %1945 = vmatprep.subr.mxu0 0.0
        %1946 = vmatpush2.xpose.msra.mxu0 0.0
        %1947 = vmatprep.subr.mxu0 0.0
        %1948 = vmatpush2.xpose.msra.mxu0 0.0
        %1949 = vmatprep.subr.mxu0 0.0
        %1950 = vmatpush2.xpose.msra.mxu0 0.0
        %1951 = vmatprep.subr.mxu0 0.0
        %1952 = vmatpush2.xpose.msra.mxu0 0.0
        %1953 = vmatprep.subr.mxu0 0.0
        %1954 = vmatpush2.xpose.msra.mxu0 0.0
        %1955 = vmatprep.subr.mxu0 0.0
        %1956 = vmatpush2.xpose.msra.mxu0 0.0
        %1957 = vmatprep.subr.mxu0 0.0
        %1958 = vmatpush2.xpose.msra.mxu0 0.0
        %1959 = vmatprep.subr.mxu0 0.0
        %1960 = vmatpush2.xpose.msra.mxu0 0.0
        %1961 = vmatprep.subr.mxu0 0.0
        %1962 = vmatpush2.xpose.msra.mxu0 0.0
        %1963 = vmatprep.subr.mxu0 0.0
        %1964 = vmatpush2.xpose.msra.mxu0 0.0
        %1965 = vmatprep.subr.mxu0 0.0
        %1966 = vmatpush2.xpose.msra.mxu0 0.0
        %1967 = vmatprep.subr.mxu0 0.0
        %1968 = vmatpush2.xpose.msra.mxu0 0.0
        %1969 = vmatprep.subr.mxu0 0.0
        %1970 = vmatpush2.xpose.msra.mxu0 0.0
        %1971 = vmatprep.subr.mxu0 0.0
        %1972 = vmatpush2.xpose.msra.mxu0 0.0
        %1973 = vmatprep.subr.mxu0 0.0
        %1974 = vmatpush2.xpose.msra.mxu0 0.0
        %1975 = vmatprep.mubr.f32.mxu0 0.0
        %1976 = vmatmul.mubr.f32.gmra.mxu0 %v1907
        %v1977 = vpop.f32.mrf.mxu0
        %v1978 = vadd.f32 0.0, %v1977
        %v1979 = vpop.f32.mrf.mxu0
        %1980 = vdwg.mxu0
        %v1981 = vsel %vm523, %v1750, -inf
        %1982 = vmax.xlane.f32.xlu0 %v1981
        %v1983 = vpop.xlane.xlu0 %1982
        %v1984 = vsel %vm523, %v1826, -inf
        %1985 = vmax.xlane.f32.xlu0 %v1984
        %v1986 = vpop.xlane.xlu0 %1985
        %v1987 = vsel %vm523, %v1902, -inf
        %1988 = vmax.xlane.f32.xlu0 %v1987
        %v1989 = vpop.xlane.xlu0 %1988
        %v1990 = vsel %vm523, %v1978, -inf
        %1991 = vmax.xlane.f32.xlu0 %v1990
        %v1992 = vpop.xlane.xlu0 %1991
        %v1993 = vsub.f32 %v1750, %v1983
        %v1994 = vsub.f32 %v1826, %v1986
        %v1995 = vsub.f32 %v1902, %v1989
        %v1996 = vsub.f32 %v1978, %v1992
        %v1997 = vmul.f32 %v1993, 1.442695
        %v1998 = vpow.pop %v1997
        %v1999 = vmul.f32 %v1994, 1.442695
        %v2000 = vpow.pop %v1999
        %v2001 = vmul.f32 %v1995, 1.442695
        %v2002 = vpow.pop %v2001
        %v2003 = vmul.f32 %v1996, 1.442695
        %v2004 = vpow.pop %v2003
        %v2005 = vsel %vm523, %v1998, 0.0
        %2006 = vadd.xlane.f32.xlu0 %v2005
        %v2007 = vpop.xlane.xlu0 %2006
        %v2008 = vsel %vm523, %v2000, 0.0
        %2009 = vadd.xlane.f32.xlu0 %v2008
        %v2010 = vpop.xlane.xlu0 %2009
        %v2011 = vsel %vm523, %v2002, 0.0
        %2012 = vadd.xlane.f32.xlu0 %v2011
        %v2013 = vpop.xlane.xlu0 %2012
        %v2014 = vsel %vm523, %v2004, 0.0
        %2015 = vadd.xlane.f32.xlu0 %v2014
        %v2016 = vpop.xlane.xlu0 %2015
        %v2017 = vrcp.pop %v2007
        %v2018 = vrcp.pop %v2010
        %v2019 = vrcp.pop %v2013
        %v2020 = vrcp.pop %v2016
        %v2021 = vmul.f32 %v1998, %v2017
        %v2022 = vmul.f32 %v2000, %v2018
        %v2023 = vmul.f32 %v2002, %v2019
        %v2024 = vmul.f32 %v2004, %v2020
        %2025 = vrot.lane.b32.xlu0 %v1660, 112
        %v2026 = vpop.permute.xlu0 %2025
        %v2029 = vsel %vm523, %v2021, 0
        %2031 = vmatprep.subr.mxu0 0.0
        %2032 = vmatpush1.msra.mxu0 0.0
        %2033 = vmatprep.subr.mxu0 0.0
        %2034 = vmatpush1.msra.mxu0 0.0
        %2035 = vmatprep.subr.mxu0 0.0
        %2036 = vmatpush1.msra.mxu0 0.0
        %2037 = vmatprep.subr.mxu0 0.0
        %2038 = vmatpush1.msra.mxu0 0.0
        %2039 = vmatprep.subr.mxu0 0.0
        %2040 = vmatpush1.msra.mxu0 0.0
        %2041 = vmatprep.subr.mxu0 0.0
        %2042 = vmatpush1.msra.mxu0 0.0
        %2043 = vmatprep.subr.mxu0 0.0
        %2044 = vmatpush1.msra.mxu0 0.0
        %2045 = vmatprep.subr.mxu0 0.0
        %2046 = vmatpush1.msra.mxu0 0.0
        %2047 = vmatprep.subr.mxu0 0.0
        %2048 = vmatpush1.msra.mxu0 0.0
        %2049 = vmatprep.subr.mxu0 0.0
        %2050 = vmatpush1.msra.mxu0 0.0
        %2051 = vmatprep.subr.mxu0 0.0
        %2052 = vmatpush1.msra.mxu0 0.0
        %2053 = vmatprep.subr.mxu0 0.0
        %2054 = vmatpush1.msra.mxu0 0.0
        %2055 = vmatprep.subr.mxu0 0.0
        %2056 = vmatpush1.msra.mxu0 0.0
        %2057 = vmatprep.subr.mxu0 0.0
        %2058 = vmatpush1.msra.mxu0 0.0
        %2059 = vmatprep.subr.mxu0 0.0
        %2060 = vmatpush1.msra.mxu0 0.0
        %2061 = vmatprep.subr.mxu0 0.0
        %2062 = vmatpush1.msra.mxu0 %v2026
        %2063 = vmatprep.subr.mxu0 0.0
        %2064 = vmatpush2.msra.mxu0 0.0
        %2065 = vmatprep.subr.mxu0 0.0
        %2066 = vmatpush2.msra.mxu0 0.0
        %2067 = vmatprep.subr.mxu0 0.0
        %2068 = vmatpush2.msra.mxu0 0.0
        %2069 = vmatprep.subr.mxu0 0.0
        %2070 = vmatpush2.msra.mxu0 0.0
        %2071 = vmatprep.subr.mxu0 0.0
        %2072 = vmatpush2.msra.mxu0 0.0
        %2073 = vmatprep.subr.mxu0 0.0
        %2074 = vmatpush2.msra.mxu0 0.0
        %2075 = vmatprep.subr.mxu0 0.0
        %2076 = vmatpush2.msra.mxu0 0.0
        %2077 = vmatprep.subr.mxu0 0.0
        %2078 = vmatpush2.msra.mxu0 0.0
        %2079 = vmatprep.subr.mxu0 0.0
        %2080 = vmatpush2.msra.mxu0 0.0
        %2081 = vmatprep.subr.mxu0 0.0
        %2082 = vmatpush2.msra.mxu0 0.0
        %2083 = vmatprep.subr.mxu0 0.0
        %2084 = vmatpush2.msra.mxu0 0.0
        %2085 = vmatprep.subr.mxu0 0.0
        %2086 = vmatpush2.msra.mxu0 0.0
        %2087 = vmatprep.subr.mxu0 0.0
        %2088 = vmatpush2.msra.mxu0 0.0
        %2089 = vmatprep.subr.mxu0 0.0
        %2090 = vmatpush2.msra.mxu0 0.0
        %2091 = vmatprep.subr.mxu0 0.0
        %2092 = vmatpush2.msra.mxu0 0.0
        %2093 = vmatprep.subr.mxu0 0.0
        %2094 = vmatpush2.msra.mxu0 0.0
        %2095 = vmatprep.mubr.f32.mxu0 0.0
        %2096 = vmatmul.mubr.f32.gmra.mxu0 %v2029
        %v2097 = vpop.f32.mrf.mxu0
        %v2098 = vadd.f32 0.0, %v2097
        %v2099 = vpop.f32.mrf.mxu0
        %2100 = vdwg.mxu0
        %2101 = vrot.lane.b32.xlu0 %v1672, 112
        %v2102 = vpop.permute.xlu0 %2101
        %v2105 = vsel %vm523, %v2022, 0
        %2107 = vmatprep.subr.mxu0 0.0
        %2108 = vmatpush1.msra.mxu0 0.0
        %2109 = vmatprep.subr.mxu0 0.0
        %2110 = vmatpush1.msra.mxu0 0.0
        %2111 = vmatprep.subr.mxu0 0.0
        %2112 = vmatpush1.msra.mxu0 0.0
        %2113 = vmatprep.subr.mxu0 0.0
        %2114 = vmatpush1.msra.mxu0 0.0
        %2115 = vmatprep.subr.mxu0 0.0
        %2116 = vmatpush1.msra.mxu0 0.0
        %2117 = vmatprep.subr.mxu0 0.0
        %2118 = vmatpush1.msra.mxu0 0.0
        %2119 = vmatprep.subr.mxu0 0.0
        %2120 = vmatpush1.msra.mxu0 0.0
        %2121 = vmatprep.subr.mxu0 0.0
        %2122 = vmatpush1.msra.mxu0 0.0
        %2123 = vmatprep.subr.mxu0 0.0
        %2124 = vmatpush1.msra.mxu0 0.0
        %2125 = vmatprep.subr.mxu0 0.0
        %2126 = vmatpush1.msra.mxu0 0.0
        %2127 = vmatprep.subr.mxu0 0.0
        %2128 = vmatpush1.msra.mxu0 0.0
        %2129 = vmatprep.subr.mxu0 0.0
        %2130 = vmatpush1.msra.mxu0 0.0
        %2131 = vmatprep.subr.mxu0 0.0
        %2132 = vmatpush1.msra.mxu0 0.0
        %2133 = vmatprep.subr.mxu0 0.0
        %2134 = vmatpush1.msra.mxu0 0.0
        %2135 = vmatprep.subr.mxu0 0.0
        %2136 = vmatpush1.msra.mxu0 0.0
        %2137 = vmatprep.subr.mxu0 0.0
        %2138 = vmatpush1.msra.mxu0 %v2102
        %2139 = vmatprep.subr.mxu0 0.0
        %2140 = vmatpush2.msra.mxu0 0.0
        %2141 = vmatprep.subr.mxu0 0.0
        %2142 = vmatpush2.msra.mxu0 0.0
        %2143 = vmatprep.subr.mxu0 0.0
        %2144 = vmatpush2.msra.mxu0 0.0
        %2145 = vmatprep.subr.mxu0 0.0
        %2146 = vmatpush2.msra.mxu0 0.0
        %2147 = vmatprep.subr.mxu0 0.0
        %2148 = vmatpush2.msra.mxu0 0.0
        %2149 = vmatprep.subr.mxu0 0.0
        %2150 = vmatpush2.msra.mxu0 0.0
        %2151 = vmatprep.subr.mxu0 0.0
        %2152 = vmatpush2.msra.mxu0 0.0
        %2153 = vmatprep.subr.mxu0 0.0
        %2154 = vmatpush2.msra.mxu0 0.0
        %2155 = vmatprep.subr.mxu0 0.0
        %2156 = vmatpush2.msra.mxu0 0.0
        %2157 = vmatprep.subr.mxu0 0.0
        %2158 = vmatpush2.msra.mxu0 0.0
        %2159 = vmatprep.subr.mxu0 0.0
        %2160 = vmatpush2.msra.mxu0 0.0
        %2161 = vmatprep.subr.mxu0 0.0
        %2162 = vmatpush2.msra.mxu0 0.0
        %2163 = vmatprep.subr.mxu0 0.0
        %2164 = vmatpush2.msra.mxu0 0.0
        %2165 = vmatprep.subr.mxu0 0.0
        %2166 = vmatpush2.msra.mxu0 0.0
        %2167 = vmatprep.subr.mxu0 0.0
        %2168 = vmatpush2.msra.mxu0 0.0
        %2169 = vmatprep.subr.mxu0 0.0
        %2170 = vmatpush2.msra.mxu0 0.0
        %2171 = vmatprep.mubr.f32.mxu0 0.0
        %2172 = vmatmul.mubr.f32.gmra.mxu0 %v2105
        %v2173 = vpop.f32.mrf.mxu0
        %v2174 = vadd.f32 0.0, %v2173
        %v2175 = vpop.f32.mrf.mxu0
        %2176 = vdwg.mxu0
        %2177 = vrot.lane.b32.xlu0 %v1674, 112
        %v2178 = vpop.permute.xlu0 %2177
        %v2181 = vsel %vm523, %v2023, 0
        %2183 = vmatprep.subr.mxu0 0.0
        %2184 = vmatpush1.msra.mxu0 0.0
        %2185 = vmatprep.subr.mxu0 0.0
        %2186 = vmatpush1.msra.mxu0 0.0
        %2187 = vmatprep.subr.mxu0 0.0
        %2188 = vmatpush1.msra.mxu0 0.0
        %2189 = vmatprep.subr.mxu0 0.0
        %2190 = vmatpush1.msra.mxu0 0.0
        %2191 = vmatprep.subr.mxu0 0.0
        %2192 = vmatpush1.msra.mxu0 0.0
        %2193 = vmatprep.subr.mxu0 0.0
        %2194 = vmatpush1.msra.mxu0 0.0
        %2195 = vmatprep.subr.mxu0 0.0
        %2196 = vmatpush1.msra.mxu0 0.0
        %2197 = vmatprep.subr.mxu0 0.0
        %2198 = vmatpush1.msra.mxu0 0.0
        %2199 = vmatprep.subr.mxu0 0.0
        %2200 = vmatpush1.msra.mxu0 0.0
        %2201 = vmatprep.subr.mxu0 0.0
        %2202 = vmatpush1.msra.mxu0 0.0
        %2203 = vmatprep.subr.mxu0 0.0
        %2204 = vmatpush1.msra.mxu0 0.0
        %2205 = vmatprep.subr.mxu0 0.0
        %2206 = vmatpush1.msra.mxu0 0.0
        %2207 = vmatprep.subr.mxu0 0.0
        %2208 = vmatpush1.msra.mxu0 0.0
        %2209 = vmatprep.subr.mxu0 0.0
        %2210 = vmatpush1.msra.mxu0 0.0
        %2211 = vmatprep.subr.mxu0 0.0
        %2212 = vmatpush1.msra.mxu0 0.0
        %2213 = vmatprep.subr.mxu0 0.0
        %2214 = vmatpush1.msra.mxu0 %v2178
        %2215 = vmatprep.subr.mxu0 0.0
        %2216 = vmatpush2.msra.mxu0 0.0
        %2217 = vmatprep.subr.mxu0 0.0
        %2218 = vmatpush2.msra.mxu0 0.0
        %2219 = vmatprep.subr.mxu0 0.0
        %2220 = vmatpush2.msra.mxu0 0.0
        %2221 = vmatprep.subr.mxu0 0.0
        %2222 = vmatpush2.msra.mxu0 0.0
        %2223 = vmatprep.subr.mxu0 0.0
        %2224 = vmatpush2.msra.mxu0 0.0
        %2225 = vmatprep.subr.mxu0 0.0
        %2226 = vmatpush2.msra.mxu0 0.0
        %2227 = vmatprep.subr.mxu0 0.0
        %2228 = vmatpush2.msra.mxu0 0.0
        %2229 = vmatprep.subr.mxu0 0.0
        %2230 = vmatpush2.msra.mxu0 0.0
        %2231 = vmatprep.subr.mxu0 0.0
        %2232 = vmatpush2.msra.mxu0 0.0
        %2233 = vmatprep.subr.mxu0 0.0
        %2234 = vmatpush2.msra.mxu0 0.0
        %2235 = vmatprep.subr.mxu0 0.0
        %2236 = vmatpush2.msra.mxu0 0.0
        %2237 = vmatprep.subr.mxu0 0.0
        %2238 = vmatpush2.msra.mxu0 0.0
        %2239 = vmatprep.subr.mxu0 0.0
        %2240 = vmatpush2.msra.mxu0 0.0
        %2241 = vmatprep.subr.mxu0 0.0
        %2242 = vmatpush2.msra.mxu0 0.0
        %2243 = vmatprep.subr.mxu0 0.0
        %2244 = vmatpush2.msra.mxu0 0.0
        %2245 = vmatprep.subr.mxu0 0.0
        %2246 = vmatpush2.msra.mxu0 0.0
        %2247 = vmatprep.mubr.f32.mxu0 0.0
        %2248 = vmatmul.mubr.f32.gmra.mxu0 %v2181
        %v2249 = vpop.f32.mrf.mxu0
        %v2250 = vadd.f32 0.0, %v2249
        %v2251 = vpop.f32.mrf.mxu0
        %2252 = vdwg.mxu0
        %2253 = vrot.lane.b32.xlu0 %v1676, 112
        %v2254 = vpop.permute.xlu0 %2253
        %v2257 = vsel %vm523, %v2024, 0
        %2259 = vmatprep.subr.mxu0 0.0
        %2260 = vmatpush1.msra.mxu0 0.0
        %2261 = vmatprep.subr.mxu0 0.0
        %2262 = vmatpush1.msra.mxu0 0.0
        %2263 = vmatprep.subr.mxu0 0.0
        %2264 = vmatpush1.msra.mxu0 0.0
        %2265 = vmatprep.subr.mxu0 0.0
        %2266 = vmatpush1.msra.mxu0 0.0
        %2267 = vmatprep.subr.mxu0 0.0
        %2268 = vmatpush1.msra.mxu0 0.0
        %2269 = vmatprep.subr.mxu0 0.0
        %2270 = vmatpush1.msra.mxu0 0.0
        %2271 = vmatprep.subr.mxu0 0.0
        %2272 = vmatpush1.msra.mxu0 0.0
        %2273 = vmatprep.subr.mxu0 0.0
        %2274 = vmatpush1.msra.mxu0 0.0
        %2275 = vmatprep.subr.mxu0 0.0
        %2276 = vmatpush1.msra.mxu0 0.0
        %2277 = vmatprep.subr.mxu0 0.0
        %2278 = vmatpush1.msra.mxu0 0.0
        %2279 = vmatprep.subr.mxu0 0.0
        %2280 = vmatpush1.msra.mxu0 0.0
        %2281 = vmatprep.subr.mxu0 0.0
        %2282 = vmatpush1.msra.mxu0 0.0
        %2283 = vmatprep.subr.mxu0 0.0
        %2284 = vmatpush1.msra.mxu0 0.0
        %2285 = vmatprep.subr.mxu0 0.0
        %2286 = vmatpush1.msra.mxu0 0.0
        %2287 = vmatprep.subr.mxu0 0.0
        %2288 = vmatpush1.msra.mxu0 0.0
        %2289 = vmatprep.subr.mxu0 0.0
        %2290 = vmatpush1.msra.mxu0 %v2254
        %2291 = vmatprep.subr.mxu0 0.0
        %2292 = vmatpush2.msra.mxu0 0.0
        %2293 = vmatprep.subr.mxu0 0.0
        %2294 = vmatpush2.msra.mxu0 0.0
        %2295 = vmatprep.subr.mxu0 0.0
        %2296 = vmatpush2.msra.mxu0 0.0
        %2297 = vmatprep.subr.mxu0 0.0
        %2298 = vmatpush2.msra.mxu0 0.0
        %2299 = vmatprep.subr.mxu0 0.0
        %2300 = vmatpush2.msra.mxu0 0.0
        %2301 = vmatprep.subr.mxu0 0.0
        %2302 = vmatpush2.msra.mxu0 0.0
        %2303 = vmatprep.subr.mxu0 0.0
        %2304 = vmatpush2.msra.mxu0 0.0
        %2305 = vmatprep.subr.mxu0 0.0
        %2306 = vmatpush2.msra.mxu0 0.0
        %2307 = vmatprep.subr.mxu0 0.0
        %2308 = vmatpush2.msra.mxu0 0.0
        %2309 = vmatprep.subr.mxu0 0.0
        %2310 = vmatpush2.msra.mxu0 0.0
        %2311 = vmatprep.subr.mxu0 0.0
        %2312 = vmatpush2.msra.mxu0 0.0
        %2313 = vmatprep.subr.mxu0 0.0
        %2314 = vmatpush2.msra.mxu0 0.0
        %2315 = vmatprep.subr.mxu0 0.0
        %2316 = vmatpush2.msra.mxu0 0.0
        %2317 = vmatprep.subr.mxu0 0.0
        %2318 = vmatpush2.msra.mxu0 0.0
        %2319 = vmatprep.subr.mxu0 0.0
        %2320 = vmatpush2.msra.mxu0 0.0
        %2321 = vmatprep.subr.mxu0 0.0
        %2322 = vmatpush2.msra.mxu0 0.0
        %2323 = vmatprep.mubr.f32.mxu0 0.0
        %2324 = vmatmul.mubr.f32.gmra.mxu0 %v2257
        %v2325 = vpop.f32.mrf.mxu0
        %v2326 = vadd.f32 0.0, %v2325
        %v2327 = vpop.f32.mrf.mxu0
        %2328 = vdwg.mxu0
        %v2329 = vpack.c.bf16 %v2098, %v2098
        %v2330 = vpack.c.bf16 %v2174, %v2174
        %v2331 = vpack.c.bf16 %v2250, %v2250
        %v2332 = vpack.c.bf16 %v2326, %v2326
        %v2334 = vsel %vm523, %v2329, 0
        %v2337 = vsel %vm1181, %v1666, 0
        %2339 = vmatprep.subr.bf16.mxu0 0
        %2340 = vmatpush1.bf16.msra.mxu0 0
        %2341 = vmatprep.subr.bf16.mxu0 0
        %2342 = vmatpush1.bf16.msra.mxu0 0
        %2343 = vmatprep.subr.bf16.mxu0 0
        %2344 = vmatpush1.bf16.msra.mxu0 0
        %2345 = vmatprep.subr.bf16.mxu0 0
        %2346 = vmatpush1.bf16.msra.mxu0 0
        %2347 = vmatprep.subr.bf16.mxu0 0
        %2348 = vmatpush1.bf16.msra.mxu0 0
        %2349 = vmatprep.subr.bf16.mxu0 0
        %2350 = vmatpush1.bf16.msra.mxu0 0
        %2351 = vmatprep.subr.bf16.mxu0 0
        %2352 = vmatpush1.bf16.msra.mxu0 0
        %2353 = vmatprep.subr.bf16.mxu0 0
        %2354 = vmatpush1.bf16.msra.mxu0 %v2337
        %2355 = vmatprep.subr.bf16.mxu0 0
        %2356 = vmatpush2.bf16.msra.mxu0 0
        %2357 = vmatprep.subr.bf16.mxu0 0
        %2358 = vmatpush2.bf16.msra.mxu0 0
        %2359 = vmatprep.subr.bf16.mxu0 0
        %2360 = vmatpush2.bf16.msra.mxu0 0
        %2361 = vmatprep.subr.bf16.mxu0 0
        %2362 = vmatpush2.bf16.msra.mxu0 0
        %2363 = vmatprep.subr.bf16.mxu0 0
        %2364 = vmatpush2.bf16.msra.mxu0 0
        %2365 = vmatprep.subr.bf16.mxu0 0
        %2366 = vmatpush2.bf16.msra.mxu0 0
        %2367 = vmatprep.subr.bf16.mxu0 0
        %2368 = vmatpush2.bf16.msra.mxu0 0
        %2369 = vmatprep.subr.bf16.mxu0 0
        %2370 = vmatpush2.bf16.msra.mxu0 0
        %2371 = vmatprep.mubr.bf16.mxu0 0
        %2372 = vmatmul.mubr.bf16.gmra.mxu0 %v2334
        %v2373 = vpop.f32.mrf.mxu0
        %v2374 = vadd.f32 0.0, %v2373
        %v2375 = vpop.f32.mrf.mxu0
        %v2376 = vpop.f32.mrf.mxu0
        %v2377 = vpop.f32.mrf.mxu0
        %2378 = vdwg.mxu0
        %v2380 = vsel %vm523, %v2330, 0
        %v2383 = vsel %vm1181, %v1667, 0
        %2385 = vmatprep.subr.bf16.mxu0 0
        %2386 = vmatpush1.bf16.msra.mxu0 0
        %2387 = vmatprep.subr.bf16.mxu0 0
        %2388 = vmatpush1.bf16.msra.mxu0 0
        %2389 = vmatprep.subr.bf16.mxu0 0
        %2390 = vmatpush1.bf16.msra.mxu0 0
        %2391 = vmatprep.subr.bf16.mxu0 0
        %2392 = vmatpush1.bf16.msra.mxu0 0
        %2393 = vmatprep.subr.bf16.mxu0 0
        %2394 = vmatpush1.bf16.msra.mxu0 0
        %2395 = vmatprep.subr.bf16.mxu0 0
        %2396 = vmatpush1.bf16.msra.mxu0 0
        %2397 = vmatprep.subr.bf16.mxu0 0
        %2398 = vmatpush1.bf16.msra.mxu0 0
        %2399 = vmatprep.subr.bf16.mxu0 0
        %2400 = vmatpush1.bf16.msra.mxu0 %v2383
        %2401 = vmatprep.subr.bf16.mxu0 0
        %2402 = vmatpush2.bf16.msra.mxu0 0
        %2403 = vmatprep.subr.bf16.mxu0 0
        %2404 = vmatpush2.bf16.msra.mxu0 0
        %2405 = vmatprep.subr.bf16.mxu0 0
        %2406 = vmatpush2.bf16.msra.mxu0 0
        %2407 = vmatprep.subr.bf16.mxu0 0
        %2408 = vmatpush2.bf16.msra.mxu0 0
        %2409 = vmatprep.subr.bf16.mxu0 0
        %2410 = vmatpush2.bf16.msra.mxu0 0
        %2411 = vmatprep.subr.bf16.mxu0 0
        %2412 = vmatpush2.bf16.msra.mxu0 0
        %2413 = vmatprep.subr.bf16.mxu0 0
        %2414 = vmatpush2.bf16.msra.mxu0 0
        %2415 = vmatprep.subr.bf16.mxu0 0
        %2416 = vmatpush2.bf16.msra.mxu0 0
        %2417 = vmatprep.mubr.bf16.mxu0 0
        %2418 = vmatmul.mubr.bf16.gmra.mxu0 %v2380
        %v2419 = vpop.f32.mrf.mxu0
        %v2420 = vadd.f32 0.0, %v2419
        %v2421 = vpop.f32.mrf.mxu0
        %v2422 = vpop.f32.mrf.mxu0
        %v2423 = vpop.f32.mrf.mxu0
        %2424 = vdwg.mxu0
        %v2426 = vsel %vm523, %v2331, 0
        %v2429 = vsel %vm1181, %v1668, 0
        %2431 = vmatprep.subr.bf16.mxu0 0
        %2432 = vmatpush1.bf16.msra.mxu0 0
        %2433 = vmatprep.subr.bf16.mxu0 0
        %2434 = vmatpush1.bf16.msra.mxu0 0
        %2435 = vmatprep.subr.bf16.mxu0 0
        %2436 = vmatpush1.bf16.msra.mxu0 0
        %2437 = vmatprep.subr.bf16.mxu0 0
        %2438 = vmatpush1.bf16.msra.mxu0 0
        %2439 = vmatprep.subr.bf16.mxu0 0
        %2440 = vmatpush1.bf16.msra.mxu0 0
        %2441 = vmatprep.subr.bf16.mxu0 0
        %2442 = vmatpush1.bf16.msra.mxu0 0
        %2443 = vmatprep.subr.bf16.mxu0 0
        %2444 = vmatpush1.bf16.msra.mxu0 0
        %2445 = vmatprep.subr.bf16.mxu0 0
        %2446 = vmatpush1.bf16.msra.mxu0 %v2429
        %2447 = vmatprep.subr.bf16.mxu0 0
        %2448 = vmatpush2.bf16.msra.mxu0 0
        %2449 = vmatprep.subr.bf16.mxu0 0
        %2450 = vmatpush2.bf16.msra.mxu0 0
        %2451 = vmatprep.subr.bf16.mxu0 0
        %2452 = vmatpush2.bf16.msra.mxu0 0
        %2453 = vmatprep.subr.bf16.mxu0 0
        %2454 = vmatpush2.bf16.msra.mxu0 0
        %2455 = vmatprep.subr.bf16.mxu0 0
        %2456 = vmatpush2.bf16.msra.mxu0 0
        %2457 = vmatprep.subr.bf16.mxu0 0
        %2458 = vmatpush2.bf16.msra.mxu0 0
        %2459 = vmatprep.subr.bf16.mxu0 0
        %2460 = vmatpush2.bf16.msra.mxu0 0
        %2461 = vmatprep.subr.bf16.mxu0 0
        %2462 = vmatpush2.bf16.msra.mxu0 0
        %2463 = vmatprep.mubr.bf16.mxu0 0
        %2464 = vmatmul.mubr.bf16.gmra.mxu0 %v2426
        %v2465 = vpop.f32.mrf.mxu0
        %v2466 = vadd.f32 0.0, %v2465
        %v2467 = vpop.f32.mrf.mxu0
        %v2468 = vpop.f32.mrf.mxu0
        %v2469 = vpop.f32.mrf.mxu0
        %2470 = vdwg.mxu0
        %v2472 = vsel %vm523, %v2332, 0
        %v2475 = vsel %vm1181, %v1669, 0
        %2477 = vmatprep.subr.bf16.mxu0 0
        %2478 = vmatpush1.bf16.msra.mxu0 0
        %2479 = vmatprep.subr.bf16.mxu0 0
        %2480 = vmatpush1.bf16.msra.mxu0 0
        %2481 = vmatprep.subr.bf16.mxu0 0
        %2482 = vmatpush1.bf16.msra.mxu0 0
        %2483 = vmatprep.subr.bf16.mxu0 0
        %2484 = vmatpush1.bf16.msra.mxu0 0
        %2485 = vmatprep.subr.bf16.mxu0 0
        %2486 = vmatpush1.bf16.msra.mxu0 0
        %2487 = vmatprep.subr.bf16.mxu0 0
        %2488 = vmatpush1.bf16.msra.mxu0 0
        %2489 = vmatprep.subr.bf16.mxu0 0
        %2490 = vmatpush1.bf16.msra.mxu0 0
        %2491 = vmatprep.subr.bf16.mxu0 0
        %2492 = vmatpush1.bf16.msra.mxu0 %v2475
        %2493 = vmatprep.subr.bf16.mxu0 0
        %2494 = vmatpush2.bf16.msra.mxu0 0
        %2495 = vmatprep.subr.bf16.mxu0 0
        %2496 = vmatpush2.bf16.msra.mxu0 0
        %2497 = vmatprep.subr.bf16.mxu0 0
        %2498 = vmatpush2.bf16.msra.mxu0 0
        %2499 = vmatprep.subr.bf16.mxu0 0
        %2500 = vmatpush2.bf16.msra.mxu0 0
        %2501 = vmatprep.subr.bf16.mxu0 0
        %2502 = vmatpush2.bf16.msra.mxu0 0
        %2503 = vmatprep.subr.bf16.mxu0 0
        %2504 = vmatpush2.bf16.msra.mxu0 0
        %2505 = vmatprep.subr.bf16.mxu0 0
        %2506 = vmatpush2.bf16.msra.mxu0 0
        %2507 = vmatprep.subr.bf16.mxu0 0
        %2508 = vmatpush2.bf16.msra.mxu0 0
        %2509 = vmatprep.mubr.bf16.mxu0 0
        %2510 = vmatmul.mubr.bf16.gmra.mxu0 %v2472
        %v2511 = vpop.f32.mrf.mxu0
        %v2512 = vadd.f32 0.0, %v2511
        %v2513 = vpop.f32.mrf.mxu0
        %v2514 = vpop.f32.mrf.mxu0
        %v2515 = vpop.f32.mrf.mxu0
        %2516 = vdwg.mxu0
        %v2517 = vsel %vm466, %v2374, 0.0
        %v2518 = vsel %vm466, %v2420, 0.0
        %v2519 = vadd.f32 %v2517, %v2518
        %v2520 = vsel %vm466, %v2466, 0.0
        %v2521 = vadd.f32 %v2519, %v2520
        %v2522 = vsel %vm466, %v2512, 0.0
        %v2523 = vadd.f32 %v2521, %v2522
        %v2524 = vadd.f32 %v1597, %v2523
        %v2525 = vlaneseq
        %v2526 = vshrl.u32 %v2525, 7
        %v2527 = vsub.s32 1, %v2526
        %v2528 = vrot.slane %v1599, %v2527
        %v2529 = vadd.f32 %v2524, %v2528
        %v2530 = vsel %vm466, %v2529, 0.0
        %2531 = vadd.xlane.f32.xlu0 %v2530
        %v2532 = vpop.xlane.xlu0 %2531
        %v2533 = vmul.f32 %v2532, %v1379
        %v2534 = vsub.f32 %v2529, %v2533
        %v2535 = vmul.f32 %v2534, %v2534
        %v2536 = vsel %vm466, %v2535, 0.0
        %2537 = vadd.xlane.f32.xlu0 %v2536
        %v2538 = vpop.xlane.xlu0 %2537
        %v2539 = vmul.f32 %v2538, %v1379
        %v2540 = vadd.f32 %v2539, 1e-05
        %v2541 = vrsqrt.pop %v2540
        %v2542 = vmul.f32 %v2534, %v2541
        %v2543 = vlaneseq
        %v2544 = vshrl.u32 %v2543, 7
        %v2545 = vsub.s32 2, %v2544
        %v2546 = vrot.slane %v1599, %v2545
        %v2547 = vmul.f32 %v2542, %v2546
        %v2548 = vlaneseq
        %v2549 = vshrl.u32 %v2548, 7
        %v2550 = vsub.s32 3, %v2549
        %v2551 = vrot.slane %v1599, %v2550
        %v2552 = vadd.f32 %v2547, %v2551
        %v2553 = vpack.c.bf16 %v2552, %v2552
        %s2554 = scalar_lea.vmem %s420, 16
        %v2555 = vld [vmem:[%s2554] sm:$0xf]
        %v2556 = vld [vmem:[%s2554 + $0x4] sm:$0xf]
        %v2557 = vld [vmem:[%s2554 + $0x8] sm:$0xf]
        %v2558 = vld [vmem:[%s2554 + $0xc] sm:$0xf]
        %v2559 = vlaneseq
        %v2560 = vshrl.u32 %v2559, 7
        %v2561 = vsub.s32 4, %v2560
        %v2562 = vrot.slane %v1599, %v2561
        %v2567 = vunpack.c.l.b16 %v2555
        %v2568 = vunpack.c.l.b16 %v2556
        %v2569 = vunpack.c.l.b16 %v2557
        %v2570 = vunpack.c.l.b16 %v2558
        %v2571 = vpack.c.b16 %v2568, %v2567
        %v2572 = vpack.c.b16 %v2570, %v2569
        %v2576 = vsel %vm466, %v2553, 0
        %2578 = vmatprep.subr.bf16.mxu0 0
        %2579 = vmatpush1.bf16.msra.mxu0 0
        %2580 = vmatprep.subr.bf16.mxu0 0
        %2581 = vmatpush1.bf16.msra.mxu0 0
        %2582 = vmatprep.subr.bf16.mxu0 0
        %2583 = vmatpush1.bf16.msra.mxu0 0
        %2584 = vmatprep.subr.bf16.mxu0 0
        %2585 = vmatpush1.bf16.msra.mxu0 0
        %2586 = vmatprep.subr.bf16.mxu0 0
        %2587 = vmatpush1.bf16.msra.mxu0 0
        %2588 = vmatprep.subr.bf16.mxu0 0
        %2589 = vmatpush1.bf16.msra.mxu0 0
        %2590 = vmatprep.subr.bf16.mxu0 0
        %2591 = vmatpush1.bf16.msra.mxu0 %v2572
        %2592 = vmatprep.subr.bf16.mxu0 0
        %2593 = vmatpush1.bf16.msra.mxu0 %v2571
        %2594 = vmatprep.subr.bf16.mxu0 0
        %2595 = vmatpush2.bf16.msra.mxu0 0
        %2596 = vmatprep.subr.bf16.mxu0 0
        %2597 = vmatpush2.bf16.msra.mxu0 0
        %2598 = vmatprep.subr.bf16.mxu0 0
        %2599 = vmatpush2.bf16.msra.mxu0 0
        %2600 = vmatprep.subr.bf16.mxu0 0
        %2601 = vmatpush2.bf16.msra.mxu0 0
        %2602 = vmatprep.subr.bf16.mxu0 0
        %2603 = vmatpush2.bf16.msra.mxu0 0
        %2604 = vmatprep.subr.bf16.mxu0 0
        %2605 = vmatpush2.bf16.msra.mxu0 0
        %2606 = vmatprep.subr.bf16.mxu0 0
        %2607 = vmatpush2.bf16.msra.mxu0 0
        %2608 = vmatprep.subr.bf16.mxu0 0
        %2609 = vmatpush2.bf16.msra.mxu0 0
        %2610 = vmatprep.mubr.bf16.mxu0 0
        %2611 = vmatmul.mubr.bf16.gmra.mxu0 %v2576
        %v2612 = vpop.f32.mrf.mxu0
        %v2613 = vadd.f32 %v2562, %v2612
        %v2614 = vpop.f32.mrf.mxu0
        %v2615 = vpop.f32.mrf.mxu0
        %v2616 = vpop.f32.mrf.mxu0
        %2617 = vdwg.mxu0
        %v2618 = vmax.f32 %v2613, 0.0
        %v2619 = vpack.c.bf16 %v2618, %v2618
        %s2620 = scalar_lea.vmem %s427, 64
        %v2621 = vld [vmem:[%s2620] sm:$0xf]
        %v2622 = vld [vmem:[%s2620 + $0x4] sm:$0xf]
        %v2623 = vld [vmem:[%s2620 + $0x8] sm:$0xf]
        %v2624 = vld [vmem:[%s2620 + $0xc] sm:$0xf]
        %v2625 = vld [vmem:[%s2620 + $0x10] sm:$0xf]
        %v2626 = vld [vmem:[%s2620 + $0x14] sm:$0xf]
        %v2627 = vld [vmem:[%s2620 + $0x18] sm:$0xf]
        %v2628 = vld [vmem:[%s2620 + $0x1c] sm:$0xf]
        %v2629 = vld [vmem:[%s2620 + $0x20] sm:$0xf]
        %v2630 = vld [vmem:[%s2620 + $0x24] sm:$0xf]
        %v2631 = vld [vmem:[%s2620 + $0x28] sm:$0xf]
        %v2632 = vld [vmem:[%s2620 + $0x2c] sm:$0xf]
        %v2633 = vld [vmem:[%s2620 + $0x30] sm:$0xf]
        %v2634 = vld [vmem:[%s2620 + $0x34] sm:$0xf]
        %v2635 = vld [vmem:[%s2620 + $0x38] sm:$0xf]
        %v2636 = vld [vmem:[%s2620 + $0x3c] sm:$0xf]
        %v2637 = vlaneseq
        %v2638 = vshrl.u32 %v2637, 7
        %v2639 = vsub.s32 5, %v2638
        %v2640 = vrot.slane %v1599, %v2639
        %v2657 = vunpack.c.l.b16 %v2621
        %v2658 = vunpack.c.l.b16 %v2622
        %v2659 = vunpack.c.l.b16 %v2623
        %v2660 = vunpack.c.l.b16 %v2624
        %v2661 = vunpack.c.l.b16 %v2625
        %v2662 = vunpack.c.l.b16 %v2626
        %v2663 = vunpack.c.l.b16 %v2627
        %v2664 = vunpack.c.l.b16 %v2628
        %v2665 = vunpack.c.l.b16 %v2629
        %v2666 = vunpack.c.l.b16 %v2630
        %v2667 = vunpack.c.l.b16 %v2631
        %v2668 = vunpack.c.l.b16 %v2632
        %v2669 = vunpack.c.l.b16 %v2633
        %v2670 = vunpack.c.l.b16 %v2634
        %v2671 = vunpack.c.l.b16 %v2635
        %v2672 = vunpack.c.l.b16 %v2636
        %v2673 = vpack.c.b16 %v2658, %v2657
        %v2674 = vpack.c.b16 %v2660, %v2659
        %v2675 = vpack.c.b16 %v2662, %v2661
        %v2676 = vpack.c.b16 %v2664, %v2663
        %v2677 = vpack.c.b16 %v2666, %v2665
        %v2678 = vpack.c.b16 %v2668, %v2667
        %v2679 = vpack.c.b16 %v2670, %v2669
        %v2680 = vpack.c.b16 %v2672, %v2671
        %2689 = vmatprep.subr.bf16.mxu0 0
        %2690 = vmatpush1.bf16.msra.mxu0 %v2680
        %2691 = vmatprep.subr.bf16.mxu0 0
        %2692 = vmatpush1.bf16.msra.mxu0 %v2679
        %2693 = vmatprep.subr.bf16.mxu0 0
        %2694 = vmatpush1.bf16.msra.mxu0 %v2678
        %2695 = vmatprep.subr.bf16.mxu0 0
        %2696 = vmatpush1.bf16.msra.mxu0 %v2677
        %2697 = vmatprep.subr.bf16.mxu0 0
        %2698 = vmatpush1.bf16.msra.mxu0 %v2676
        %2699 = vmatprep.subr.bf16.mxu0 0
        %2700 = vmatpush1.bf16.msra.mxu0 %v2675
        %2701 = vmatprep.subr.bf16.mxu0 0
        %2702 = vmatpush1.bf16.msra.mxu0 %v2674
        %2703 = vmatprep.subr.bf16.mxu0 0
        %2704 = vmatpush1.bf16.msra.mxu0 %v2673
        %2705 = vmatprep.subr.bf16.mxu0 0
        %2706 = vmatpush2.bf16.msra.mxu0 0
        %2707 = vmatprep.subr.bf16.mxu0 0
        %2708 = vmatpush2.bf16.msra.mxu0 0
        %2709 = vmatprep.subr.bf16.mxu0 0
        %2710 = vmatpush2.bf16.msra.mxu0 0
        %2711 = vmatprep.subr.bf16.mxu0 0
        %2712 = vmatpush2.bf16.msra.mxu0 0
        %2713 = vmatprep.subr.bf16.mxu0 0
        %2714 = vmatpush2.bf16.msra.mxu0 0
        %2715 = vmatprep.subr.bf16.mxu0 0
        %2716 = vmatpush2.bf16.msra.mxu0 0
        %2717 = vmatprep.subr.bf16.mxu0 0
        %2718 = vmatpush2.bf16.msra.mxu0 0
        %2719 = vmatprep.subr.bf16.mxu0 0
        %2720 = vmatpush2.bf16.msra.mxu0 0
        %2721 = vmatprep.mubr.bf16.mxu0 0
        %2722 = vmatmul.mubr.bf16.gmra.mxu0 %v2619
        %v2723 = vpop.f32.mrf.mxu0
        %v2724 = vadd.f32 %v2640, %v2723
        %v2725 = vpop.f32.mrf.mxu0
        %v2726 = vpop.f32.mrf.mxu0
        %v2727 = vpop.f32.mrf.mxu0
        %2728 = vdwg.mxu0
        %v2729 = vadd.f32 %v2552, %v2724
        %v2730 = vsel %vm466, %v2729, 0.0
        %2731 = vadd.xlane.f32.xlu0 %v2730
        %v2732 = vpop.xlane.xlu0 %2731
        %v2733 = vmul.f32 %v2732, %v1379
        %v2734 = vsub.f32 %v2729, %v2733
        %v2735 = vmul.f32 %v2734, %v2734
        %v2736 = vsel %vm466, %v2735, 0.0
        %2737 = vadd.xlane.f32.xlu0 %v2736
        %v2738 = vpop.xlane.xlu0 %2737
        %v2739 = vmul.f32 %v2738, %v1379
        %v2740 = vadd.f32 %v2739, 1e-05
        %v2741 = vrsqrt.pop %v2740
        %v2742 = vmul.f32 %v2734, %v2741
        %v2743 = vlaneseq
        %v2744 = vshrl.u32 %v2743, 7
        %v2745 = vsub.s32 6, %v2744
        %v2746 = vrot.slane %v1599, %v2745
        %v2747 = vmul.f32 %v2742, %v2746
        %v2748 = vlaneseq
        %v2749 = vshrl.u32 %v2748, 7
        %v2750 = vsub.s32 7, %v2749
        %v2751 = vrot.slane %v1599, %v2750
        %v2752 = vadd.f32 %v2747, %v2751
        %2753 = vst.msk [vmem:[#allocation2] sm:$0xff] %vm466, %v2752
        // Predicated region
        $region57: #{tpu_custom_call.1} parent=51 // pred_check
          %p2754 = pneg %p436
        $region58: #{tpu_custom_call.1} parent=51 // pred_check_branch
          %2756 = sbr.rel (%p2754) target = $region60
        $region59: #{tpu_custom_call.1} parent=51 // pred_region
          %v2757 = vpack.c.bf16 %v2752, %v2752
          %v2758 = vld [vmem:[%s6] sm:$0xf]
          %v2759 = vld [vmem:[%s6 + $0x4] sm:$0xf]
          %v2760 = vld [vmem:[%s6 + $0x8] sm:$0xf]
          %v2761 = vld [vmem:[%s6 + $0xc] sm:$0xf]
          %v2762 = vld [vmem:[%s7] sm:$0x1]
          %v2764 = vlaneseq
          %v2765 = vshrl.u32 %v2764, 7
          %v2766 = vsub.s32 0, %v2765
          %v2767 = vrot.slane %v2762, %v2766
          %v2773 = vunpack.c.l.b16 %v2758
          %v2774 = vunpack.c.l.b16 %v2759
          %v2775 = vunpack.c.l.b16 %v2760
          %v2776 = vunpack.c.l.b16 %v2761
          %v2777 = vpack.c.b16 %v2774, %v2773
          %v2778 = vpack.c.b16 %v2776, %v2775
          %v2782 = vsel %vm466, %v2757, 0
          %2784 = vmatprep.subr.bf16.mxu0 0
          %2785 = vmatpush1.bf16.msra.mxu0 0
          %2786 = vmatprep.subr.bf16.mxu0 0
          %2787 = vmatpush1.bf16.msra.mxu0 0
          %2788 = vmatprep.subr.bf16.mxu0 0
          %2789 = vmatpush1.bf16.msra.mxu0 0
          %2790 = vmatprep.subr.bf16.mxu0 0
          %2791 = vmatpush1.bf16.msra.mxu0 0
          %2792 = vmatprep.subr.bf16.mxu0 0
          %2793 = vmatpush1.bf16.msra.mxu0 0
          %2794 = vmatprep.subr.bf16.mxu0 0
          %2795 = vmatpush1.bf16.msra.mxu0 0
          %2796 = vmatprep.subr.bf16.mxu0 0
          %2797 = vmatpush1.bf16.msra.mxu0 %v2778
          %2798 = vmatprep.subr.bf16.mxu0 0
          %2799 = vmatpush1.bf16.msra.mxu0 %v2777
          %2800 = vmatprep.subr.bf16.mxu0 0
          %2801 = vmatpush2.bf16.msra.mxu0 0
          %2802 = vmatprep.subr.bf16.mxu0 0
          %2803 = vmatpush2.bf16.msra.mxu0 0
          %2804 = vmatprep.subr.bf16.mxu0 0
          %2805 = vmatpush2.bf16.msra.mxu0 0
          %2806 = vmatprep.subr.bf16.mxu0 0
          %2807 = vmatpush2.bf16.msra.mxu0 0
          %2808 = vmatprep.subr.bf16.mxu0 0
          %2809 = vmatpush2.bf16.msra.mxu0 0
          %2810 = vmatprep.subr.bf16.mxu0 0
          %2811 = vmatpush2.bf16.msra.mxu0 0
          %2812 = vmatprep.subr.bf16.mxu0 0
          %2813 = vmatpush2.bf16.msra.mxu0 0
          %2814 = vmatprep.subr.bf16.mxu0 0
          %2815 = vmatpush2.bf16.msra.mxu0 0
          %2816 = vmatprep.mubr.bf16.mxu0 0
          %2817 = vmatmul.mubr.bf16.gmra.mxu0 %v2782
          %v2818 = vpop.f32.mrf.mxu0
          %v2819 = vadd.f32 %v2767, %v2818
          %v2820 = vpop.f32.mrf.mxu0
          %v2821 = vpop.f32.mrf.mxu0
          %v2822 = vpop.f32.mrf.mxu0
          %2823 = vdwg.mxu0
          %2824 = vst [vmem:[%s396] sm:$0xff] %v2819
        $region60: #{tpu_custom_call.1} parent=51 // pred_fallthru
          _
        %s2825 = sand.u32 %s240, 1
        %s2826 = scalar_lea.sflag [#allocation4], %s2825
        %s2827 = sand.u32 %s240, 1
        %s2828 = smul.addr %s2827, 8
        %s2829 = scalar_lea.vmem [#allocation3], %s2828
        // Predicated region
        $region61: #{tpu_custom_call.1} parent=51 // pred_check
          %p2830 = pneg %p250
        $region62: #{tpu_custom_call.1} parent=51 // pred_check_branch
          %2832 = sbr.rel (%p2830) target = $region64
        $region63: #{tpu_custom_call.1} parent=51 // pred_region
          %s2834 = ssub.s32 128, 128
          %2835 = vsyncadd %s2826, %s2834
          %s2836 = smul.addr %s26, 128
          %s2837 = scalar_lea.hbm %s8, %s2836
          %s2839 = sshll.u32 %s2829, 4
          %s2840 = int_to_ptr.vmem [resolvable:$true] %s2839
          %2842 = dma.vmem_to_hbm [thread:$0]  %s2840, 128, %s2837, %s2826
        $region64: #{tpu_custom_call.1} parent=51 // pred_fallthru
          _
      $region52: #{tpu_custom_call.1} parent=5 // pred_fallthru
        _
      %p2843 = scmp.le.s32.totalorder 2, %s17
      // Predicated region
      $region65: #{tpu_custom_call.1} parent=5 // pred_check
        %p2844 = pneg %p2843
      $region66: #{tpu_custom_call.1} parent=5 // pred_check_branch
        %2846 = sbr.rel (%p2844) target = $region68
      $region67: #{tpu_custom_call.1} parent=5 // pred_region
        %s2847 = ssub.s32 %s17, 2
        // Predicated region
        $region69: #{tpu_custom_call.1} parent=67 // pred_check
          %p2848 = pneg %p256
        $region70: #{tpu_custom_call.1} parent=67 // pred_check_branch
          %2850 = sbr.rel (%p2848) target = $region72
        $region71: #{tpu_custom_call.1} parent=67 // pred_region
          %s2851 = sand.u32 %s241, 1
          %s2852 = scalar_lea.sflag [#allocation4], %s2851
          %s2853 = sand.u32 %s241, 1
          %s2854 = smul.addr %s2853, 8
          %s2855 = scalar_lea.vmem [#allocation3], %s2854
          %2856 = dma.done %s2852, 128
        $region72: #{tpu_custom_call.1} parent=67 // pred_fallthru
          _
      $region68: #{tpu_custom_call.1} parent=5 // pred_fallthru
        _
    $region6: #{tpu_custom_call.1} parent=1 // loop_footer
      %s21 = sadd.s32 1, %s17
    $region7: #{tpu_custom_call.1} parent=1 // loop_footer_branch
      %16 = sbr.rel target = $region3
    $region8: #{tpu_custom_call.1} parent=1 // loop_exit
      _
    %2857 = vsyncpa [#allocation4], 1
    %s2858 = scalar_lea.sflag [#allocation4], 1
    %2859 = vsyncpa %s2858, 1

</llo_original>
